<compile_context>
chip_gen: v7x
topology: tpu7x:2x2x1
jax: 0.10.0
libtpu: 0.0.40
codegen_flags: <defaults>
</compile_context>

<pallas_src>
import functools
import math

import jax
import jax.numpy as jnp
from jax.experimental import pallas as pl
from jax.experimental.pallas import tpu as pltpu

_BN_EPS = 1e-3  # nn.BatchNorm2d(eps=0.001) in the reference module


def _round_up(v, m):
    return ((v + m - 1) // m) * m


# --------------------------------------------------------------------------- #
# Kernel bodies
# --------------------------------------------------------------------------- #
def _apply_nl(y, nl, alpha_ref):
    """Activation with static `nl` ('relu' | 'prelu' | None). y is f32."""
    if nl == "relu":
        return jnp.maximum(y, 0.0)
    if nl == "prelu":
        a = alpha_ref[0]                      # scalar read from SMEM
        return jnp.where(y > 0.0, y, a * y)
    return y


def _conv_kernel(*args, k, dilation, nl, bn, use_im2col, has_halo, dense,
                 tr, w_out_k, cin, cout, w_valid, h_valid, mask_stats):
    """conv [+ bias + act] or conv [+ BN partial stats] for one (batch, row-tile)."""
    # ---- unpack refs: inputs..., outputs..., scratch ----
    idx = 0
    body_ref = args[idx]; idx += 1
    halo_ref = None
    if has_halo:
        halo_ref = args[idx]; idx += 1
    w_ref = args[idx]; idx += 1
    b_ref = None
    if not bn:
        b_ref = args[idx]; idx += 1
    alpha_ref = args[idx]; idx += 1
    o_ref = args[idx]; idx += 1
    stats_ref = None
    if bn:
        stats_ref = args[idx]; idx += 1
    win_ref = args[idx] if has_halo else None

    ext = dilation * (k - 1)

    # Assemble the (tr + ext)-row input window once in VMEM; taps slice it.
    if has_halo:
        win_ref[0:tr] = body_ref[...]
        win_ref[tr:tr + ext] = halo_ref[...]
        win = win_ref
    else:
        win = body_ref

    pix = tr * w_out_k
    if use_im2col:
        # All k*k taps concatenated on the lane (channel) axis -> ONE MXU matmul
        # with contraction K = k*k*Cin.
        taps = []
        for dy in range(k):
            for dx in range(k):
                oy, ox = dy * dilation, dx * dilation
                taps.append(win[oy:oy + tr, ox:ox + w_out_k, :])
        patch = jnp.concatenate(taps, axis=-1).reshape(pix, k * k * cin)
        acc = jnp.dot(patch, w_ref[...], preferred_element_type=jnp.float32)
    else:
        # Cin >= 128: k*k accumulating matmuls (no k^2x VMEM patch blow-up).
        acc = jnp.zeros((pix, cout), jnp.float32)
        for dy in range(k):
            for dx in range(k):
                oy, ox = dy * dilation, dx * dilation
                tap = win[oy:oy + tr, ox:ox + w_out_k, :].reshape(pix, cin)
                t0 = (dy * k + dx) * cin
                acc = acc + jnp.dot(tap, w_ref[t0:t0 + cin, :],
                                    preferred_element_type=jnp.float32)

    if bn:
        # Per-tile BN partial sums from the f32 accumulator; exclude padded
        # output rows / columns (conv bias is skipped: cancelled by BN mean).
        if mask_stats:
            pidx = jax.lax.broadcasted_iota(jnp.int32, (pix, 1), 0)
            col = pidx % w_out_k
            row = pidx // w_out_k + pl.program_id(1) * tr
            m = ((col < w_valid) & (row < h_valid)).astype(jnp.float32)
            s = jnp.sum(acc * m, axis=0, keepdims=True)
            ss = jnp.sum(acc * acc * m, axis=0, keepdims=True)
        else:
            s = jnp.sum(acc, axis=0, keepdims=True)
            ss = jnp.sum(acc * acc, axis=0, keepdims=True)
        stats_ref[...] = jnp.concatenate([s, ss], axis=0)     # (2, Cout)
        out = acc.astype(jnp.bfloat16)      # bf16 intermediate: less BN-path HBM
    else:
        out = _apply_nl(acc + b_ref[...], nl, alpha_ref)      # f32

    if dense:
        # Lane-dense presentation: last dim w_out_k*Cout is a multiple of 128.
        out = out.reshape(tr, w_out_k * cout)
    o_ref[...] = out


def _bn_act_kernel(y_ref, scale_ref, shift_ref, alpha_ref, o_ref, *, nl):
    """Folded BatchNorm (single per-channel scale/shift) + activation."""
    y = y_ref[...].astype(jnp.float32) * scale_ref[...] + shift_ref[...]
    o_ref[...] = _apply_nl(y, nl, alpha_ref)


# --------------------------------------------------------------------------- #
# Tiling helpers
# --------------------------------------------------------------------------- #
def _vmem_budget():
    """(per-step footprint budget, vmem_limit_bytes) for this TPU generation."""
    try:
        cap = int(pltpu.get_tpu_info().vmem_capacity_bytes)
    except Exception:
        cap = 64 * 1024 * 1024                       # conservative (v7x per-TC)
    budget = int(cap * 0.55)                         # headroom for compiler scratch
    limit = min(int(cap * 0.75), 112 * 1024 * 1024)
    return budget, limit


def _pick_row_tile(h_out, wp_k, w_out_k, cin, cout, k, ext, use_im2col,
                   out_itemsize, budget):
    """Largest row tile whose real per-step VMEM footprint fits the budget."""
    step = 8 if ext == 0 else (8 * ext) // math.gcd(8, ext)   # tr % ext == 0
    max_tr = max(step, _round_up(h_out, step))

    def footprint(tr):
        pix = tr * w_out_k
        in_blk = 2 * (tr + ext) * wp_k * cin * 2              # 2x body + halo (bf16)
        win = (tr + ext) * wp_k * cin * 2                     # assembled window
        patch = (2 * pix * k * k * cin * 2) if use_im2col else (2 * pix * cin * 2)
        acc = 2 * pix * cout * 4                              # f32 acc + relayout tmp
        out_blk = 2 * pix * cout * out_itemsize               # double-buffered output
        wgt = 2 * k * k * cin * cout * 2
        return in_blk + win + patch + acc + out_blk + wgt

    tr, t = step, step
    while t <= max_tr and footprint(t) <= budget:
        tr = t
        t += step
    return min(tr, max_tr)


# --------------------------------------------------------------------------- #
# Wrapper
# --------------------------------------------------------------------------- #
def conv2d_forward(x_nchw, params, *, kernel_size, stride=1, NL="relu",
                   same_padding=False, bn=False, dilation=1, lane_dense_out=True):
    """Forward pass of the reference Conv2d block. Input/output are NCHW f32."""
    if stride != 1:
        # TODO(synk): stride > 1 needs strided tap slices inside the kernel.
        raise NotImplementedError("stride != 1 not implemented in the Pallas kernel")

    k = kernel_size
    pad = ((k - 1) // 2 if same_padding else 0) if dilation == 1 else dilation
    ext = dilation * (k - 1)

    n, cin, h, w = x_nchw.shape
    cout = params["w"].shape[-1]
    h_out = h + 2 * pad - ext
    w_out = w + 2 * pad - ext

    # Output column padding.  Prefer a lane-dense (tr, w_out_k*Cout) presentation
    # when Cout < 128 and the extra padded columns stay cheap.
    w_out_8 = _round_up(w_out, 8)
    w_out_k, dense = w_out_8, False
    if lane_dense_out and 8 <= cout < 128 and 128 % cout == 0:
        w_dense = _round_up(w_out, max(8, 128 // cout))
        if w_dense <= max(w_out_8 + 32, (w_out_8 * 5) // 4):
            w_out_k, dense = w_dense, True

    use_im2col = cin < 128
    wp_k = w_out_k + ext
    budget, vmem_limit = _vmem_budget()
    tr = _pick_row_tile(h_out, wp_k, w_out_k, cin, cout, k, ext, use_im2col,
                        2 if bn else 4, budget)
    n_row_tiles = (h_out + tr - 1) // tr
    h_rows = n_row_tiles * tr
    pix = tr * w_out_k

    extra_h = (h_rows + ext) - (h + 2 * pad)     # ragged last row tile -> zero pad
    extra_w = wp_k - (w + 2 * pad)

    # NCHW -> NHWC; bf16 only for the MXU operands.
    x = jnp.transpose(x_nchw, (0, 2, 3, 1)).astype(jnp.bfloat16)
    xp = jnp.pad(x, ((0, 0), (pad, pad + extra_h), (pad, pad + extra_w), (0, 0)))

    # Weights flattened to (k*k*Cin, Cout): matches tap order (dy, dx, c).
    w2 = params["w"].astype(jnp.bfloat16).reshape(k * k * cin, cout)
    alpha = params["prelu_a"].astype(jnp.float32).reshape((1,))

    grid = (n, n_row_tiles)
    has_halo = ext > 0
    hfac = (tr // ext) if has_halo else 0

    body_spec = pl.BlockSpec((None, tr, wp_k, cin), lambda i, r: (i, r, 0, 0))
    halo_spec = pl.BlockSpec((None, ext, wp_k, cin),
                             lambda i, r: (i, (r + 1) * hfac, 0, 0))
    w_spec = pl.BlockSpec((k * k * cin, cout), lambda i, r: (0, 0))
    bias_spec = pl.BlockSpec((1, cout), lambda i, r: (0, 0))
    alpha_spec = pl.BlockSpec(memory_space=pltpu.MemorySpace.SMEM)

    if dense:
        y_shape = (n, h_rows, w_out_k * cout)
        o_spec = pl.BlockSpec((None, tr, w_out_k * cout), lambda i, r: (i, r, 0))
    else:
        y_shape = (n, h_rows * w_out_k, cout)
        o_spec = pl.BlockSpec((None, pix, cout), lambda i, r: (i, r, 0))

    mask_stats = (w_out_k != w_out) or (h_rows != h_out)
    cparams = pltpu.CompilerParams(
        dimension_semantics=("parallel", "parallel"),   # megacore sharding on v7x
        vmem_limit_bytes=vmem_limit)
    scratch = ([pltpu.VMEM((tr + ext, wp_k, cin), jnp.bfloat16)]
               if has_halo else [])

    kern = functools.partial(
        _conv_kernel, k=k, dilation=dilation, nl=NL, bn=bn,
        use_im2col=use_im2col, has_halo=has_halo, dense=dense, tr=tr,
        w_out_k=w_out_k, cin=cin, cout=cout, w_valid=w_out, h_valid=h_out,
        mask_stats=mask_stats)

    in_arrays = [xp] + ([xp] if has_halo else []) + [w2]
    in_specs = [body_spec] + ([halo_spec] if has_halo else []) + [w_spec]
    if not bn:
        in_arrays.append(params["b"].astype(jnp.float32).reshape(1, cout))
        in_specs.append(bias_spec)
    in_arrays.append(alpha)
    in_specs.append(alpha_spec)

    if not bn:
        y = pl.pallas_call(
            kern,
            out_shape=jax.ShapeDtypeStruct(y_shape, jnp.float32),
            grid=grid, in_specs=in_specs, out_specs=o_spec,
            scratch_shapes=scratch, compiler_params=cparams,
        )(*in_arrays)
    else:
        # Pass 1: conv (bias cancelled by BN mean) + per-tile BN partial sums.
        stats_spec = pl.BlockSpec((None, None, 2, cout), lambda i, r: (i, r, 0, 0))
        y_conv, stats = pl.pallas_call(
            kern,
            out_shape=(jax.ShapeDtypeStruct(y_shape, jnp.bfloat16),
                       jax.ShapeDtypeStruct((n, n_row_tiles, 2, cout), jnp.float32)),
            grid=grid, in_specs=in_specs, out_specs=(o_spec, stats_spec),
            scratch_shapes=scratch, compiler_params=cparams,
        )(*in_arrays)

        # Finalize folded scale/shift (O(Cout) work, plain JAX).
        cnt = float(n * h_out * w_out)
        s = jnp.sum(stats, axis=(0, 1))                   # (2, Cout)
        mean = s[0] / cnt
        var = jnp.maximum(s[1] / cnt - mean * mean, 0.0)  # biased var (train mode)
        scale = params["gamma"] * jax.lax.rsqrt(var + _BN_EPS)
        shift = params["beta"] - mean * scale

        if dense:
            scale_v = jnp.tile(scale, (w_out_k,)).reshape(1, -1)
            shift_v = jnp.tile(shift, (w_out_k,)).reshape(1, -1)
            vec2 = pl.BlockSpec((1, w_out_k * cout), lambda i, r: (0, 0))
        else:
            scale_v = scale.reshape(1, cout)
            shift_v = shift.reshape(1, cout)
            vec2 = pl.BlockSpec((1, cout), lambda i, r: (0, 0))

        # Pass 2: y = act(conv * scale + shift); bf16 in, f32 out, lane-dense.
        # (No input_output_aliases: dtypes differ between bf16 in and f32 out.)
        y = pl.pallas_call(
            functools.partial(_bn_act_kernel, nl=NL),
            out_shape=jax.ShapeDtypeStruct(y_shape, jnp.float32),
            grid=grid,
            in_specs=[o_spec, vec2, vec2, alpha_spec],
            out_specs=o_spec,
            compiler_params=cparams,
        )(y_conv, scale_v, shift_v, alpha)

    # Free view changes; then drop padded rows/cols and go back to NCHW.
    y = y.reshape(n, h_rows, w_out_k, cout)[:, :h_out, :w_out, :]
    return jnp.transpose(y, (0, 3, 1, 2))


conv2d_forward_jit = jax.jit(
    conv2d_forward,
    static_argnames=("kernel_size", "stride", "NL", "same_padding", "bn",
                     "dilation", "lane_dense_out"))


# --------------------------------------------------------------------------- #
# Parameters + pure-JAX reference (for an in-script sanity check)
# --------------------------------------------------------------------------- #
def init_conv2d_params(key, in_channels, out_channels, kernel_size):
    """Shapes match nn.Conv2d / nn.BatchNorm2d / nn.PReLU."""
    k_w, k_b = jax.random.split(key)
    fan_in = in_channels * kernel_size * kernel_size
    bound = 1.0 / (fan_in ** 0.5)
    return {
        # Stored as (kh, kw, Cin, Cout) (PyTorch layout is (Cout, Cin, kh, kw)).
        "w": jax.random.uniform(k_w, (kernel_size, kernel_size, in_channels,
                                      out_channels), jnp.float32, -bound, bound),
        "b": jax.random.uniform(k_b, (out_channels,), jnp.float32, -bound, bound),
        "gamma": jnp.ones((out_channels,), jnp.float32),
        "beta": jnp.zeros((out_channels,), jnp.float32),
        "prelu_a": jnp.full((1,), 0.25, jnp.float32),
    }


def _reference_forward(x_nchw, params, *, kernel_size, stride=1, NL="relu",
                       same_padding=False, bn=False, dilation=1):
    """Pure-JAX reference (same bf16-rounded MXU operands, f32 elsewhere)."""
    k = kernel_size
    pad = ((k - 1) // 2 if same_padding else 0) if dilation == 1 else dilation
    xb = x_nchw.astype(jnp.bfloat16).astype(jnp.float32)
    wb = params["w"].astype(jnp.bfloat16).astype(jnp.float32)
    y = jax.lax.conv_general_dilated(
        xb, wb, window_strides=(stride, stride),
        padding=((pad, pad), (pad, pad)), rhs_dilation=(dilation, dilation),
        dimension_numbers=("NCHW", "HWIO", "NCHW"),
        precision=jax.lax.Precision.HIGHEST)
    y = y + params["b"][None, :, None, None]          # nn.Conv2d has bias
    if bn:
        mean = jnp.mean(y, axis=(0, 2, 3), keepdims=True)
        var = jnp.mean((y - mean) ** 2, axis=(0, 2, 3), keepdims=True)
        y = ((y - mean) * jax.lax.rsqrt(var + _BN_EPS)
             * params["gamma"][None, :, None, None]
             + params["beta"][None, :, None, None])
    if NL == "relu":
        y = jnp.maximum(y, 0.0)
    elif NL == "prelu":
        y = jnp.where(y > 0.0, y, params["prelu_a"] * y)
    return y


# --------------------------------------------------------------------------- #
# Demo / self-check
# --------------------------------------------------------------------------- #
if __name__ == "__main__":
    key = jax.random.PRNGKey(0)
    k_x, k_p = jax.random.split(key)

    N, Cin, H, W = 2, 4, 16, 16
    Cout, K = 8, 3
    x = jax.random.normal(k_x, (N, Cin, H, W), jnp.float32)
    params = init_conv2d_params(k_p, Cin, Cout, K)

    configs = [
        dict(kernel_size=K, same_padding=True, bn=True, NL="relu", dilation=1),
        dict(kernel_size=K, same_padding=False, bn=False, NL="relu", dilation=1),
        dict(kernel_size=K, same_padding=False, bn=False, NL="prelu", dilation=2),
        dict(kernel_size=K, same_padding=False, bn=True, NL="relu", dilation=1),
    ]

    def _run_and_check(cfg, lane_dense):
        out = conv2d_forward_jit(x, params, lane_dense_out=lane_dense, **cfg)
        out = jax.block_until_ready(out)
        ref = _reference_forward(x, params, **cfg)
        assert out.shape == ref.shape, (cfg, out.shape, ref.shape)
        assert bool(jnp.all(jnp.isfinite(out))), cfg
        err = float(jnp.max(jnp.abs(out - ref)))
        tol = 5e-2 * (1.0 + float(jnp.max(jnp.abs(ref))))
        assert err <= tol, (cfg, err, tol)

    lane_dense = True
    for cfg in configs:
        try:
            _run_and_check(cfg, lane_dense)
        except Exception:
            # Fallback: masked-store output layout (no in-kernel relayout).
            lane_dense = False
            _run_and_check(cfg, lane_dense)

    print("KERNEL_OK")
</pallas_src>

<mosaic_0001>
module attributes {stable_mosaic.version = 11 : i64} {
  func.func @_conv_kernel(%arg0: i32, %arg1: i32, %arg2: memref<1x16x18x4xbf16, #tpu.memory_space<vmem>>, %arg3: memref<1x2x18x4xbf16, #tpu.memory_space<vmem>>, %arg4: memref<36x8xbf16, #tpu.memory_space<vmem>>, %arg5: memref<1xf32, #tpu.memory_space<smem>>, %arg6: memref<1x16x128xbf16, #tpu.memory_space<vmem>>, %arg7: memref<1x1x2x8xf32, #tpu.memory_space<vmem>>, %arg8: memref<18x18x4xbf16, #tpu.memory_space<vmem>>) attributes {dimension_semantics = [#tpu.dimension_semantics<parallel>, #tpu.dimension_semantics<parallel>], iteration_bounds = array<i64: 2, 1>, scalar_prefetch = 0 : i64, scratch_operands = 1 : i64, tpu.core_type = #tpu.core_type<tc>, window_params = [{transform_indices = @transform_0, window_bounds = array<i64: 1, 16, 18, 4>}, {transform_indices = @transform_1, window_bounds = array<i64: 1, 2, 18, 4>}, {pipeline_mode = #tpu.pipeline_mode<synchronous>, transform_indices = @transform_2, window_bounds = array<i64: 36, 8>}, {transform_indices = @transform_3, window_bounds = array<i64: 1>}, {transform_indices = @transform_4, window_bounds = array<i64: 1, 16, 128>}, {transform_indices = @transform_5, window_bounds = array<i64: 1, 1, 2, 8>}]} {
    %c0 = arith.constant 0 : index
    %c0_0 = arith.constant 0 : index
    %c0_1 = arith.constant 0 : index
    %c0_2 = arith.constant 0 : index
    %0 = vector.load %arg2[%c0, %c0_0, %c0_1, %c0_2] : memref<1x16x18x4xbf16, #tpu.memory_space<vmem>>, vector<1x16x18x4xbf16>
    %1 = vector.shape_cast %0 : vector<1x16x18x4xbf16> to vector<16x18x4xbf16>
    %c0_3 = arith.constant 0 : index
    %c0_4 = arith.constant 0 : index
    %c0_5 = arith.constant 0 : index
    %2 = vector.load %arg8[%c0_3, %c0_4, %c0_5] : memref<18x18x4xbf16, #tpu.memory_space<vmem>>, vector<16x18x4xbf16>
    tpu.vector_store %arg8[%c0_3, %c0_4, %c0_5], %1 {strides = array<i32>} : memref<18x18x4xbf16, #tpu.memory_space<vmem>>, vector<16x18x4xbf16>,
    %c0_6 = arith.constant 0 : index
    %c0_7 = arith.constant 0 : index
    %c0_8 = arith.constant 0 : index
    %c0_9 = arith.constant 0 : index
    %3 = vector.load %arg3[%c0_6, %c0_7, %c0_8, %c0_9] : memref<1x2x18x4xbf16, #tpu.memory_space<vmem>>, vector<1x2x18x4xbf16>
    %4 = vector.shape_cast %3 : vector<1x2x18x4xbf16> to vector<2x18x4xbf16>
    %c16 = arith.constant 16 : index
    %c0_10 = arith.constant 0 : index
    %c0_11 = arith.constant 0 : index
    %5 = vector.load %arg8[%c16, %c0_10, %c0_11] : memref<18x18x4xbf16, #tpu.memory_space<vmem>>, vector<2x18x4xbf16>
    tpu.vector_store %arg8[%c16, %c0_10, %c0_11], %4 {strides = array<i32>} : memref<18x18x4xbf16, #tpu.memory_space<vmem>>, vector<2x18x4xbf16>,
    %c0_12 = arith.constant 0 : index
    %c0_13 = arith.constant 0 : index
    %c0_14 = arith.constant 0 : index
    %6 = vector.load %arg8[%c0_12, %c0_13, %c0_14] : memref<18x18x4xbf16, #tpu.memory_space<vmem>>, vector<16x16x4xbf16>
    %c0_15 = arith.constant 0 : index
    %c1 = arith.constant 1 : index
    %c0_16 = arith.constant 0 : index
    %7 = vector.load %arg8[%c0_15, %c1, %c0_16] : memref<18x18x4xbf16, #tpu.memory_space<vmem>>, vector<16x16x4xbf16>
    %c0_17 = arith.constant 0 : index
    %c2 = arith.constant 2 : index
    %c0_18 = arith.constant 0 : index
    %8 = vector.load %arg8[%c0_17, %c2, %c0_18] : memref<18x18x4xbf16, #tpu.memory_space<vmem>>, vector<16x16x4xbf16>
    %c1_19 = arith.constant 1 : index
    %c0_20 = arith.constant 0 : index
    %c0_21 = arith.constant 0 : index
    %9 = vector.load %arg8[%c1_19, %c0_20, %c0_21] : memref<18x18x4xbf16, #tpu.memory_space<vmem>>, vector<16x16x4xbf16>
    %c1_22 = arith.constant 1 : index
    %c1_23 = arith.constant 1 : index
    %c0_24 = arith.constant 0 : index
    %10 = vector.load %arg8[%c1_22, %c1_23, %c0_24] : memref<18x18x4xbf16, #tpu.memory_space<vmem>>, vector<16x16x4xbf16>
    %c1_25 = arith.constant 1 : index
    %c2_26 = arith.constant 2 : index
    %c0_27 = arith.constant 0 : index
    %11 = vector.load %arg8[%c1_25, %c2_26, %c0_27] : memref<18x18x4xbf16, #tpu.memory_space<vmem>>, vector<16x16x4xbf16>
    %c2_28 = arith.constant 2 : index
    %c0_29 = arith.constant 0 : index
    %c0_30 = arith.constant 0 : index
    %12 = vector.load %arg8[%c2_28, %c0_29, %c0_30] : memref<18x18x4xbf16, #tpu.memory_space<vmem>>, vector<16x16x4xbf16>
    %c2_31 = arith.constant 2 : index
    %c1_32 = arith.constant 1 : index
    %c0_33 = arith.constant 0 : index
    %13 = vector.load %arg8[%c2_31, %c1_32, %c0_33] : memref<18x18x4xbf16, #tpu.memory_space<vmem>>, vector<16x16x4xbf16>
    %c2_34 = arith.constant 2 : index
    %c2_35 = arith.constant 2 : index
    %c0_36 = arith.constant 0 : index
    %14 = vector.load %arg8[%c2_34, %c2_35, %c0_36] : memref<18x18x4xbf16, #tpu.memory_space<vmem>>, vector<16x16x4xbf16>
    %15 = tpu.concatenate %6, %7, %8, %9, %10, %11, %12, %13, %14 in 2 : vector<16x16x4xbf16>, vector<16x16x4xbf16>, vector<16x16x4xbf16>, vector<16x16x4xbf16>, vector<16x16x4xbf16>, vector<16x16x4xbf16>, vector<16x16x4xbf16>, vector<16x16x4xbf16>, vector<16x16x4xbf16> -> vector<16x16x36xbf16>
    %16 = vector.shape_cast %15 : vector<16x16x36xbf16> to vector<256x36xbf16>
    %c0_37 = arith.constant 0 : index
    %c0_38 = arith.constant 0 : index
    %17 = vector.load %arg4[%c0_37, %c0_38] : memref<36x8xbf16, #tpu.memory_space<vmem>>, vector<36x8xbf16>
    %cst = arith.constant dense<0.000000e+00> : vector<256x8xf32>
    %18 = tpu.matmul %16, %17, %cst {dimension_numbers = #tpu.dot_dimension_numbers<[1], [0], [0], [1], [0, 0, 1, 1], [], []>} : vector<256x36xbf16>, vector<36x8xbf16>, vector<256x8xf32> -> vector<256x8xf32>
    %cst_39 = arith.constant dense<0.000000e+00> : vector<8xf32>
    %19 = vector.multi_reduction <add>, %18, %cst_39 [0] : vector<256x8xf32> to vector<8xf32>
    %20 = vector.shape_cast %19 : vector<8xf32> to vector<1x8xf32>
    %21 = arith.mulf %18, %18 : vector<256x8xf32>
    %cst_40 = arith.constant dense<0.000000e+00> : vector<8xf32>
    %22 = vector.multi_reduction <add>, %21, %cst_40 [0] : vector<256x8xf32> to vector<8xf32>
    %23 = vector.shape_cast %22 : vector<8xf32> to vector<1x8xf32>
    %24 = tpu.concatenate %20, %23 in 0 : vector<1x8xf32>, vector<1x8xf32> -> vector<2x8xf32>
    %c0_41 = arith.constant 0 : index
    %c0_42 = arith.constant 0 : index
    %c0_43 = arith.constant 0 : index
    %c0_44 = arith.constant 0 : index
    %25 = vector.load %arg7[%c0_41, %c0_42, %c0_43, %c0_44] : memref<1x1x2x8xf32, #tpu.memory_space<vmem>>, vector<1x1x2x8xf32>
    %26 = vector.shape_cast %25 : vector<1x1x2x8xf32> to vector<2x8xf32>
    %27 = vector.shape_cast %24 : vector<2x8xf32> to vector<1x1x2x8xf32>
    tpu.vector_store %arg7[%c0_41, %c0_42, %c0_43, %c0_44], %27 {strides = array<i32>} : memref<1x1x2x8xf32, #tpu.memory_space<vmem>>, vector<1x1x2x8xf32>,
    %28 = arith.truncf %18 : vector<256x8xf32> to vector<256x8xbf16>
    %29 = vector.shape_cast %28 : vector<256x8xbf16> to vector<16x128xbf16>
    %c0_45 = arith.constant 0 : index
    %c0_46 = arith.constant 0 : index
    %c0_47 = arith.constant 0 : index
    %30 = vector.load %arg6[%c0_45, %c0_46, %c0_47] : memref<1x16x128xbf16, #tpu.memory_space<vmem>>, vector<1x16x128xbf16>
    %31 = vector.shape_cast %30 : vector<1x16x128xbf16> to vector<16x128xbf16>
    %32 = vector.shape_cast %29 : vector<16x128xbf16> to vector<1x16x128xbf16>
    tpu.vector_store %arg6[%c0_45, %c0_46, %c0_47], %32 {strides = array<i32>} : memref<1x16x128xbf16, #tpu.memory_space<vmem>>, vector<1x16x128xbf16>,
    return
  }
  func.func @transform_0(%arg0: i32, %arg1: i32) -> (i32, i32, i32, i32) {
    %c0_i32 = arith.constant 0 : i32
    %c0_i32_0 = arith.constant 0 : i32
    %c0_i32_1 = arith.constant 0 : i32
    return %arg0, %arg1, %c0_i32, %c0_i32_0 : i32, i32, i32, i32
  }
  func.func @transform_1(%arg0: i32, %arg1: i32) -> (i32, i32, i32, i32) {
    %c1_i32 = arith.constant 1 : i32
    %0 = arith.addi %arg1, %c1_i32 : i32
    %c8_i32 = arith.constant 8 : i32
    %1 = arith.muli %0, %c8_i32 : i32
    %c0_i32 = arith.constant 0 : i32
    %c0_i32_0 = arith.constant 0 : i32
    %c0_i32_1 = arith.constant 0 : i32
    return %arg0, %1, %c0_i32, %c0_i32_0 : i32, i32, i32, i32
  }
  func.func @transform_2(%arg0: i32, %arg1: i32) -> (i32, i32) {
    %c0_i32 = arith.constant 0 : i32
    %c0_i32_0 = arith.constant 0 : i32
    %c0_i32_1 = arith.constant 0 : i32
    return %c0_i32, %c0_i32_0 : i32, i32
  }
  func.func @transform_3(%arg0: i32, %arg1: i32) -> i32 {
    %c0_i32 = arith.constant 0 : i32
    %c0_i32_0 = arith.constant 0 : i32
    return %c0_i32 : i32
  }
  func.func @transform_4(%arg0: i32, %arg1: i32) -> (i32, i32, i32) {
    %c0_i32 = arith.constant 0 : i32
    %c0_i32_0 = arith.constant 0 : i32
    return %arg0, %arg1, %c0_i32 : i32, i32, i32
  }
  func.func @transform_5(%arg0: i32, %arg1: i32) -> (i32, i32, i32, i32) {
    %c0_i32 = arith.constant 0 : i32
    %c0_i32_0 = arith.constant 0 : i32
    %c0_i32_1 = arith.constant 0 : i32
    return %arg0, %arg1, %c0_i32, %c0_i32_0 : i32, i32, i32, i32
  }
}

module attributes {stable_mosaic.version = 11 : i64} {
  func.func @_bn_act_kernel(%arg0: i32, %arg1: i32, %arg2: memref<1x16x128xbf16, #tpu.memory_space<vmem>>, %arg3: memref<1x128xf32, #tpu.memory_space<vmem>>, %arg4: memref<1x128xf32, #tpu.memory_space<vmem>>, %arg5: memref<1xf32, #tpu.memory_space<smem>>, %arg6: memref<1x16x128xf32, #tpu.memory_space<vmem>>) attributes {dimension_semantics = [#tpu.dimension_semantics<parallel>, #tpu.dimension_semantics<parallel>], iteration_bounds = array<i64: 2, 1>, scalar_prefetch = 0 : i64, scratch_operands = 0 : i64, tpu.core_type = #tpu.core_type<tc>, window_params = [{transform_indices = @transform_0, window_bounds = array<i64: 1, 16, 128>}, {pipeline_mode = #tpu.pipeline_mode<synchronous>, transform_indices = @transform_1, window_bounds = array<i64: 1, 128>}, {pipeline_mode = #tpu.pipeline_mode<synchronous>, transform_indices = @transform_2, window_bounds = array<i64: 1, 128>}, {transform_indices = @transform_3, window_bounds = array<i64: 1>}, {transform_indices = @transform_4, window_bounds = array<i64: 1, 16, 128>}]} {
    %c0 = arith.constant 0 : index
    %c0_0 = arith.constant 0 : index
    %c0_1 = arith.constant 0 : index
    %0 = vector.load %arg2[%c0, %c0_0, %c0_1] : memref<1x16x128xbf16, #tpu.memory_space<vmem>>, vector<1x16x128xbf16>
    %1 = vector.shape_cast %0 : vector<1x16x128xbf16> to vector<16x128xbf16>
    %2 = arith.extf %1 : vector<16x128xbf16> to vector<16x128xf32>
    %c0_2 = arith.constant 0 : index
    %c0_3 = arith.constant 0 : index
    %3 = vector.load %arg3[%c0_2, %c0_3] : memref<1x128xf32, #tpu.memory_space<vmem>>, vector<1x128xf32>
    %4 = vector.broadcast %3 : vector<1x128xf32> to vector<16x128xf32>
    %5 = arith.mulf %2, %4 : vector<16x128xf32>
    %c0_4 = arith.constant 0 : index
    %c0_5 = arith.constant 0 : index
    %6 = vector.load %arg4[%c0_4, %c0_5] : memref<1x128xf32, #tpu.memory_space<vmem>>, vector<1x128xf32>
    %7 = vector.broadcast %6 : vector<1x128xf32> to vector<16x128xf32>
    %8 = arith.addf %5, %7 : vector<16x128xf32>
    %cst = arith.constant 0.000000e+00 : f32
    %9 = vector.broadcast %cst : f32 to vector<16x128xf32>
    %10 = arith.maximumf %8, %9 : vector<16x128xf32>
    %c0_6 = arith.constant 0 : index
    %c0_7 = arith.constant 0 : index
    %c0_8 = arith.constant 0 : index
    %11 = vector.load %arg6[%c0_6, %c0_7, %c0_8] : memref<1x16x128xf32, #tpu.memory_space<vmem>>, vector<1x16x128xf32>
    %12 = vector.shape_cast %11 : vector<1x16x128xf32> to vector<16x128xf32>
    %13 = vector.shape_cast %10 : vector<16x128xf32> to vector<1x16x128xf32>
    tpu.vector_store %arg6[%c0_6, %c0_7, %c0_8], %13 {strides = array<i32>} : memref<1x16x128xf32, #tpu.memory_space<vmem>>, vector<1x16x128xf32>,
    return
  }
  func.func @transform_0(%arg0: i32, %arg1: i32) -> (i32, i32, i32) {
    %c0_i32 = arith.constant 0 : i32
    %c0_i32_0 = arith.constant 0 : i32
    return %arg0, %arg1, %c0_i32 : i32, i32, i32
  }
  func.func @transform_1(%arg0: i32, %arg1: i32) -> (i32, i32) {
    %c0_i32 = arith.constant 0 : i32
    %c0_i32_0 = arith.constant 0 : i32
    %c0_i32_1 = arith.constant 0 : i32
    return %c0_i32, %c0_i32_0 : i32, i32
  }
  func.func @transform_2(%arg0: i32, %arg1: i32) -> (i32, i32) {
    %c0_i32 = arith.constant 0 : i32
    %c0_i32_0 = arith.constant 0 : i32
    %c0_i32_1 = arith.constant 0 : i32
    return %c0_i32, %c0_i32_0 : i32, i32
  }
  func.func @transform_3(%arg0: i32, %arg1: i32) -> i32 {
    %c0_i32 = arith.constant 0 : i32
    %c0_i32_0 = arith.constant 0 : i32
    return %c0_i32 : i32
  }
  func.func @transform_4(%arg0: i32, %arg1: i32) -> (i32, i32, i32) {
    %c0_i32 = arith.constant 0 : i32
    %c0_i32_0 = arith.constant 0 : i32
    return %arg0, %arg1, %c0_i32 : i32, i32, i32
  }
}

module attributes {stable_mosaic.version = 11 : i64} {
  func.func @_conv_kernel(%arg0: i32, %arg1: i32, %arg2: memref<1x16x18x4xbf16, #tpu.memory_space<vmem>>, %arg3: memref<1x2x18x4xbf16, #tpu.memory_space<vmem>>, %arg4: memref<36x8xbf16, #tpu.memory_space<vmem>>, %arg5: memref<1xf32, #tpu.memory_space<smem>>, %arg6: memref<1x256x8xbf16, #tpu.memory_space<vmem>>, %arg7: memref<1x1x2x8xf32, #tpu.memory_space<vmem>>, %arg8: memref<18x18x4xbf16, #tpu.memory_space<vmem>>) attributes {dimension_semantics = [#tpu.dimension_semantics<parallel>, #tpu.dimension_semantics<parallel>], iteration_bounds = array<i64: 2, 1>, scalar_prefetch = 0 : i64, scratch_operands = 1 : i64, tpu.core_type = #tpu.core_type<tc>, window_params = [{transform_indices = @transform_0, window_bounds = array<i64: 1, 16, 18, 4>}, {transform_indices = @transform_1, window_bounds = array<i64: 1, 2, 18, 4>}, {pipeline_mode = #tpu.pipeline_mode<synchronous>, transform_indices = @transform_2, window_bounds = array<i64: 36, 8>}, {transform_indices = @transform_3, window_bounds = array<i64: 1>}, {transform_indices = @transform_4, window_bounds = array<i64: 1, 256, 8>}, {transform_indices = @transform_5, window_bounds = array<i64: 1, 1, 2, 8>}]} {
    %c0 = arith.constant 0 : index
    %c0_0 = arith.constant 0 : index
    %c0_1 = arith.constant 0 : index
    %c0_2 = arith.constant 0 : index
    %0 = vector.load %arg2[%c0, %c0_0, %c0_1, %c0_2] : memref<1x16x18x4xbf16, #tpu.memory_space<vmem>>, vector<1x16x18x4xbf16>
    %1 = vector.shape_cast %0 : vector<1x16x18x4xbf16> to vector<16x18x4xbf16>
    %c0_3 = arith.constant 0 : index
    %c0_4 = arith.constant 0 : index
    %c0_5 = arith.constant 0 : index
    %2 = vector.load %arg8[%c0_3, %c0_4, %c0_5] : memref<18x18x4xbf16, #tpu.memory_space<vmem>>, vector<16x18x4xbf16>
    tpu.vector_store %arg8[%c0_3, %c0_4, %c0_5], %1 {strides = array<i32>} : memref<18x18x4xbf16, #tpu.memory_space<vmem>>, vector<16x18x4xbf16>,
    %c0_6 = arith.constant 0 : index
    %c0_7 = arith.constant 0 : index
    %c0_8 = arith.constant 0 : index
    %c0_9 = arith.constant 0 : index
    %3 = vector.load %arg3[%c0_6, %c0_7, %c0_8, %c0_9] : memref<1x2x18x4xbf16, #tpu.memory_space<vmem>>, vector<1x2x18x4xbf16>
    %4 = vector.shape_cast %3 : vector<1x2x18x4xbf16> to vector<2x18x4xbf16>
    %c16 = arith.constant 16 : index
    %c0_10 = arith.constant 0 : index
    %c0_11 = arith.constant 0 : index
    %5 = vector.load %arg8[%c16, %c0_10, %c0_11] : memref<18x18x4xbf16, #tpu.memory_space<vmem>>, vector<2x18x4xbf16>
    tpu.vector_store %arg8[%c16, %c0_10, %c0_11], %4 {strides = array<i32>} : memref<18x18x4xbf16, #tpu.memory_space<vmem>>, vector<2x18x4xbf16>,
    %c0_12 = arith.constant 0 : index
    %c0_13 = arith.constant 0 : index
    %c0_14 = arith.constant 0 : index
    %6 = vector.load %arg8[%c0_12, %c0_13, %c0_14] : memref<18x18x4xbf16, #tpu.memory_space<vmem>>, vector<16x16x4xbf16>
    %c0_15 = arith.constant 0 : index
    %c1 = arith.constant 1 : index
    %c0_16 = arith.constant 0 : index
    %7 = vector.load %arg8[%c0_15, %c1, %c0_16] : memref<18x18x4xbf16, #tpu.memory_space<vmem>>, vector<16x16x4xbf16>
    %c0_17 = arith.constant 0 : index
    %c2 = arith.constant 2 : index
    %c0_18 = arith.constant 0 : index
    %8 = vector.load %arg8[%c0_17, %c2, %c0_18] : memref<18x18x4xbf16, #tpu.memory_space<vmem>>, vector<16x16x4xbf16>
    %c1_19 = arith.constant 1 : index
    %c0_20 = arith.constant 0 : index
    %c0_21 = arith.constant 0 : index
    %9 = vector.load %arg8[%c1_19, %c0_20, %c0_21] : memref<18x18x4xbf16, #tpu.memory_space<vmem>>, vector<16x16x4xbf16>
    %c1_22 = arith.constant 1 : index
    %c1_23 = arith.constant 1 : index
    %c0_24 = arith.constant 0 : index
    %10 = vector.load %arg8[%c1_22, %c1_23, %c0_24] : memref<18x18x4xbf16, #tpu.memory_space<vmem>>, vector<16x16x4xbf16>
    %c1_25 = arith.constant 1 : index
    %c2_26 = arith.constant 2 : index
    %c0_27 = arith.constant 0 : index
    %11 = vector.load %arg8[%c1_25, %c2_26, %c0_27] : memref<18x18x4xbf16, #tpu.memory_space<vmem>>, vector<16x16x4xbf16>
    %c2_28 = arith.constant 2 : index
    %c0_29 = arith.constant 0 : index
    %c0_30 = arith.constant 0 : index
    %12 = vector.load %arg8[%c2_28, %c0_29, %c0_30] : memref<18x18x4xbf16, #tpu.memory_space<vmem>>, vector<16x16x4xbf16>
    %c2_31 = arith.constant 2 : index
    %c1_32 = arith.constant 1 : index
    %c0_33 = arith.constant 0 : index
    %13 = vector.load %arg8[%c2_31, %c1_32, %c0_33] : memref<18x18x4xbf16, #tpu.memory_space<vmem>>, vector<16x16x4xbf16>
    %c2_34 = arith.constant 2 : index
    %c2_35 = arith.constant 2 : index
    %c0_36 = arith.constant 0 : index
    %14 = vector.load %arg8[%c2_34, %c2_35, %c0_36] : memref<18x18x4xbf16, #tpu.memory_space<vmem>>, vector<16x16x4xbf16>
    %15 = tpu.concatenate %6, %7, %8, %9, %10, %11, %12, %13, %14 in 2 : vector<16x16x4xbf16>, vector<16x16x4xbf16>, vector<16x16x4xbf16>, vector<16x16x4xbf16>, vector<16x16x4xbf16>, vector<16x16x4xbf16>, vector<16x16x4xbf16>, vector<16x16x4xbf16>, vector<16x16x4xbf16> -> vector<16x16x36xbf16>
    %16 = vector.shape_cast %15 : vector<16x16x36xbf16> to vector<256x36xbf16>
    %c0_37 = arith.constant 0 : index
    %c0_38 = arith.constant 0 : index
    %17 = vector.load %arg4[%c0_37, %c0_38] : memref<36x8xbf16, #tpu.memory_space<vmem>>, vector<36x8xbf16>
    %cst = arith.constant dense<0.000000e+00> : vector<256x8xf32>
    %18 = tpu.matmul %16, %17, %cst {dimension_numbers = #tpu.dot_dimension_numbers<[1], [0], [0], [1], [0, 0, 1, 1], [], []>} : vector<256x36xbf16>, vector<36x8xbf16>, vector<256x8xf32> -> vector<256x8xf32>
    %cst_39 = arith.constant dense<0.000000e+00> : vector<8xf32>
    %19 = vector.multi_reduction <add>, %18, %cst_39 [0] : vector<256x8xf32> to vector<8xf32>
    %20 = vector.shape_cast %19 : vector<8xf32> to vector<1x8xf32>
    %21 = arith.mulf %18, %18 : vector<256x8xf32>
    %cst_40 = arith.constant dense<0.000000e+00> : vector<8xf32>
    %22 = vector.multi_reduction <add>, %21, %cst_40 [0] : vector<256x8xf32> to vector<8xf32>
    %23 = vector.shape_cast %22 : vector<8xf32> to vector<1x8xf32>
    %24 = tpu.concatenate %20, %23 in 0 : vector<1x8xf32>, vector<1x8xf32> -> vector<2x8xf32>
    %c0_41 = arith.constant 0 : index
    %c0_42 = arith.constant 0 : index
    %c0_43 = arith.constant 0 : index
    %c0_44 = arith.constant 0 : index
    %25 = vector.load %arg7[%c0_41, %c0_42, %c0_43, %c0_44] : memref<1x1x2x8xf32, #tpu.memory_space<vmem>>, vector<1x1x2x8xf32>
    %26 = vector.shape_cast %25 : vector<1x1x2x8xf32> to vector<2x8xf32>
    %27 = vector.shape_cast %24 : vector<2x8xf32> to vector<1x1x2x8xf32>
    tpu.vector_store %arg7[%c0_41, %c0_42, %c0_43, %c0_44], %27 {strides = array<i32>} : memref<1x1x2x8xf32, #tpu.memory_space<vmem>>, vector<1x1x2x8xf32>,
    %28 = arith.truncf %18 : vector<256x8xf32> to vector<256x8xbf16>
    %c0_45 = arith.constant 0 : index
    %c0_46 = arith.constant 0 : index
    %c0_47 = arith.constant 0 : index
    %29 = vector.load %arg6[%c0_45, %c0_46, %c0_47] : memref<1x256x8xbf16, #tpu.memory_space<vmem>>, vector<1x256x8xbf16>
    %30 = vector.shape_cast %29 : vector<1x256x8xbf16> to vector<256x8xbf16>
    %31 = vector.shape_cast %28 : vector<256x8xbf16> to vector<1x256x8xbf16>
    tpu.vector_store %arg6[%c0_45, %c0_46, %c0_47], %31 {strides = array<i32>} : memref<1x256x8xbf16, #tpu.memory_space<vmem>>, vector<1x256x8xbf16>,
    return
  }
  func.func @transform_0(%arg0: i32, %arg1: i32) -> (i32, i32, i32, i32) {
    %c0_i32 = arith.constant 0 : i32
    %c0_i32_0 = arith.constant 0 : i32
    %c0_i32_1 = arith.constant 0 : i32
    return %arg0, %arg1, %c0_i32, %c0_i32_0 : i32, i32, i32, i32
  }
  func.func @transform_1(%arg0: i32, %arg1: i32) -> (i32, i32, i32, i32) {
    %c1_i32 = arith.constant 1 : i32
    %0 = arith.addi %arg1, %c1_i32 : i32
    %c8_i32 = arith.constant 8 : i32
    %1 = arith.muli %0, %c8_i32 : i32
    %c0_i32 = arith.constant 0 : i32
    %c0_i32_0 = arith.constant 0 : i32
    %c0_i32_1 = arith.constant 0 : i32
    return %arg0, %1, %c0_i32, %c0_i32_0 : i32, i32, i32, i32
  }
  func.func @transform_2(%arg0: i32, %arg1: i32) -> (i32, i32) {
    %c0_i32 = arith.constant 0 : i32
    %c0_i32_0 = arith.constant 0 : i32
    %c0_i32_1 = arith.constant 0 : i32
    return %c0_i32, %c0_i32_0 : i32, i32
  }
  func.func @transform_3(%arg0: i32, %arg1: i32) -> i32 {
    %c0_i32 = arith.constant 0 : i32
    %c0_i32_0 = arith.constant 0 : i32
    return %c0_i32 : i32
  }
  func.func @transform_4(%arg0: i32, %arg1: i32) -> (i32, i32, i32) {
    %c0_i32 = arith.constant 0 : i32
    %c0_i32_0 = arith.constant 0 : i32
    return %arg0, %arg1, %c0_i32 : i32, i32, i32
  }
  func.func @transform_5(%arg0: i32, %arg1: i32) -> (i32, i32, i32, i32) {
    %c0_i32 = arith.constant 0 : i32
    %c0_i32_0 = arith.constant 0 : i32
    %c0_i32_1 = arith.constant 0 : i32
    return %arg0, %arg1, %c0_i32, %c0_i32_0 : i32, i32, i32, i32
  }
}

module attributes {stable_mosaic.version = 11 : i64} {
  func.func @_bn_act_kernel(%arg0: i32, %arg1: i32, %arg2: memref<1x256x8xbf16, #tpu.memory_space<vmem>>, %arg3: memref<1x8xf32, #tpu.memory_space<vmem>>, %arg4: memref<1x8xf32, #tpu.memory_space<vmem>>, %arg5: memref<1xf32, #tpu.memory_space<smem>>, %arg6: memref<1x256x8xf32, #tpu.memory_space<vmem>>) attributes {dimension_semantics = [#tpu.dimension_semantics<parallel>, #tpu.dimension_semantics<parallel>], iteration_bounds = array<i64: 2, 1>, scalar_prefetch = 0 : i64, scratch_operands = 0 : i64, tpu.core_type = #tpu.core_type<tc>, window_params = [{transform_indices = @transform_0, window_bounds = array<i64: 1, 256, 8>}, {pipeline_mode = #tpu.pipeline_mode<synchronous>, transform_indices = @transform_1, window_bounds = array<i64: 1, 8>}, {pipeline_mode = #tpu.pipeline_mode<synchronous>, transform_indices = @transform_2, window_bounds = array<i64: 1, 8>}, {transform_indices = @transform_3, window_bounds = array<i64: 1>}, {transform_indices = @transform_4, window_bounds = array<i64: 1, 256, 8>}]} {
    %c0 = arith.constant 0 : index
    %c0_0 = arith.constant 0 : index
    %c0_1 = arith.constant 0 : index
    %0 = vector.load %arg2[%c0, %c0_0, %c0_1] : memref<1x256x8xbf16, #tpu.memory_space<vmem>>, vector<1x256x8xbf16>
    %1 = vector.shape_cast %0 : vector<1x256x8xbf16> to vector<256x8xbf16>
    %2 = arith.extf %1 : vector<256x8xbf16> to vector<256x8xf32>
    %c0_2 = arith.constant 0 : index
    %c0_3 = arith.constant 0 : index
    %3 = vector.load %arg3[%c0_2, %c0_3] : memref<1x8xf32, #tpu.memory_space<vmem>>, vector<1x8xf32>
    %4 = vector.broadcast %3 : vector<1x8xf32> to vector<256x8xf32>
    %5 = arith.mulf %2, %4 : vector<256x8xf32>
    %c0_4 = arith.constant 0 : index
    %c0_5 = arith.constant 0 : index
    %6 = vector.load %arg4[%c0_4, %c0_5] : memref<1x8xf32, #tpu.memory_space<vmem>>, vector<1x8xf32>
    %7 = vector.broadcast %6 : vector<1x8xf32> to vector<256x8xf32>
    %8 = arith.addf %5, %7 : vector<256x8xf32>
    %cst = arith.constant 0.000000e+00 : f32
    %9 = vector.broadcast %cst : f32 to vector<256x8xf32>
    %10 = arith.maximumf %8, %9 : vector<256x8xf32>
    %c0_6 = arith.constant 0 : index
    %c0_7 = arith.constant 0 : index
    %c0_8 = arith.constant 0 : index
    %11 = vector.load %arg6[%c0_6, %c0_7, %c0_8] : memref<1x256x8xf32, #tpu.memory_space<vmem>>, vector<1x256x8xf32>
    %12 = vector.shape_cast %11 : vector<1x256x8xf32> to vector<256x8xf32>
    %13 = vector.shape_cast %10 : vector<256x8xf32> to vector<1x256x8xf32>
    tpu.vector_store %arg6[%c0_6, %c0_7, %c0_8], %13 {strides = array<i32>} : memref<1x256x8xf32, #tpu.memory_space<vmem>>, vector<1x256x8xf32>,
    return
  }
  func.func @transform_0(%arg0: i32, %arg1: i32) -> (i32, i32, i32) {
    %c0_i32 = arith.constant 0 : i32
    %c0_i32_0 = arith.constant 0 : i32
    return %arg0, %arg1, %c0_i32 : i32, i32, i32
  }
  func.func @transform_1(%arg0: i32, %arg1: i32) -> (i32, i32) {
    %c0_i32 = arith.constant 0 : i32
    %c0_i32_0 = arith.constant 0 : i32
    %c0_i32_1 = arith.constant 0 : i32
    return %c0_i32, %c0_i32_0 : i32, i32
  }
  func.func @transform_2(%arg0: i32, %arg1: i32) -> (i32, i32) {
    %c0_i32 = arith.constant 0 : i32
    %c0_i32_0 = arith.constant 0 : i32
    %c0_i32_1 = arith.constant 0 : i32
    return %c0_i32, %c0_i32_0 : i32, i32
  }
  func.func @transform_3(%arg0: i32, %arg1: i32) -> i32 {
    %c0_i32 = arith.constant 0 : i32
    %c0_i32_0 = arith.constant 0 : i32
    return %c0_i32 : i32
  }
  func.func @transform_4(%arg0: i32, %arg1: i32) -> (i32, i32, i32) {
    %c0_i32 = arith.constant 0 : i32
    %c0_i32_0 = arith.constant 0 : i32
    return %arg0, %arg1, %c0_i32 : i32, i32, i32
  }
}

</mosaic_0001>

<llo_original>
// kernel: tile.13
$region0: #{tile.13}
  #allocation0 [shape = 's32[1]{0}', space=sflag, size = 0x4, scoped, tag = 'scoped memory for tile.13']
  %s0 = inlined_call_operand.vmem [shape: f32[8], index: 0, kind: input, shape index: {}]
  %s1 = inlined_call_operand.vmem [shape: f32[16,8], index: 1, kind: output, shape index: {}]
  // Predicated region
  $region2: #{tile.13} parent=0 // pred_check
    _
  $region3: #{tile.13} parent=0 // pred_check_branch
    %3 = sbr.rel (0) target = $region5
  $region4: #{tile.13} parent=0 // pred_region
    _
  $region5: #{tile.13} parent=0 // pred_fallthru
    _
  %v4 = vld [vmem:[%s0] ss:$0 sm:$0xff]
  %5 = vst [vmem:[%s1] sm:$0xff] %v4
  %s6 = scalar_lea.vmem %s1, 8
  %7 = vst [vmem:[%s6] sm:$0xff] %v4

// kernel: tile.14
$region0: #{tile.14}
  %s0 = inlined_call_operand.vmem [shape: f32[16,8], index: 0, kind: input, shape index: {}]
  %s1 = inlined_call_operand.vmem [shape: f32[1,128], index: 1, kind: output, shape index: {}]
  $region1: #{tile.14} parent=0
    #allocation0 [shape = 'u8[4096]{0}', space=vmem, size = 0x1000, scoped, tag = 'scoped mem for output reshape']
    %v2 = vld [vmem:[%s0] sm:$0x1]
    %vm3 = vcmask 64512
    %4 = vst.msk [vmem:[#allocation0] sm:$0x1] %vm3, %v2
    %s5 = scalar_lea.vmem %s0, 15
    %v6 = vld [vmem:[%s5] sm:$0x1]
    %7 = vrot.lane.b32.xlu0 %v6, 120
    %v8 = vpop.permute.xlu0 %7
    %vm9 = vcmask 1048512
    %10 = vst.msk [vmem:[#allocation0] sm:$0x1] %vm9, %v8
    %s11 = scalar_lea.vmem %s0, 14
    %v12 = vld [vmem:[%s11] sm:$0x1]
    %13 = vrot.lane.b32.xlu0 %v12, 112
    %v14 = vpop.permute.xlu0 %13
    %vm15 = vcmask 982912
    %16 = vst.msk [vmem:[#allocation0] sm:$0x1] %vm15, %v14
    %s17 = scalar_lea.vmem %s0, 13
    %v18 = vld [vmem:[%s17] sm:$0x1]
    %19 = vrot.lane.b32.xlu0 %v18, 104
    %v20 = vpop.permute.xlu0 %19
    %vm21 = vcmask 917312
    %22 = vst.msk [vmem:[#allocation0] sm:$0x1] %vm21, %v20
    %s23 = scalar_lea.vmem %s0, 12
    %v24 = vld [vmem:[%s23] sm:$0x1]
    %25 = vrot.lane.b32.xlu0 %v24, 96
    %v26 = vpop.permute.xlu0 %25
    %vm27 = vcmask 851712
    %28 = vst.msk [vmem:[#allocation0] sm:$0x1] %vm27, %v26
    %s29 = scalar_lea.vmem %s0, 11
    %v30 = vld [vmem:[%s29] sm:$0x1]
    %31 = vrot.lane.b32.xlu0 %v30, 88
    %v32 = vpop.permute.xlu0 %31
    %vm33 = vcmask 786112
    %34 = vst.msk [vmem:[#allocation0] sm:$0x1] %vm33, %v32
    %s35 = scalar_lea.vmem %s0, 10
    %v36 = vld [vmem:[%s35] sm:$0x1]
    %37 = vrot.lane.b32.xlu0 %v36, 80
    %v38 = vpop.permute.xlu0 %37
    %vm39 = vcmask 720512
    %40 = vst.msk [vmem:[#allocation0] sm:$0x1] %vm39, %v38
    %s41 = scalar_lea.vmem %s0, 9
    %v42 = vld [vmem:[%s41] sm:$0x1]
    %43 = vrot.lane.b32.xlu0 %v42, 72
    %v44 = vpop.permute.xlu0 %43
    %vm45 = vcmask 654912
    %46 = vst.msk [vmem:[#allocation0] sm:$0x1] %vm45, %v44
    %s47 = scalar_lea.vmem %s0, 8
    %v48 = vld [vmem:[%s47] sm:$0x1]
    %49 = vrot.lane.b32.xlu0 %v48, 64
    %v50 = vpop.permute.xlu0 %49
    %vm51 = vcmask 589312
    %52 = vst.msk [vmem:[#allocation0] sm:$0x1] %vm51, %v50
    %s53 = scalar_lea.vmem %s0, 7
    %v54 = vld [vmem:[%s53] sm:$0x1]
    %55 = vrot.lane.b32.xlu0 %v54, 56
    %v56 = vpop.permute.xlu0 %55
    %vm57 = vcmask 523712
    %58 = vst.msk [vmem:[#allocation0] sm:$0x1] %vm57, %v56
    %s59 = scalar_lea.vmem %s0, 6
    %v60 = vld [vmem:[%s59] sm:$0x1]
    %61 = vrot.lane.b32.xlu0 %v60, 48
    %v62 = vpop.permute.xlu0 %61
    %vm63 = vcmask 458112
    %64 = vst.msk [vmem:[#allocation0] sm:$0x1] %vm63, %v62
    %s65 = scalar_lea.vmem %s0, 5
    %v66 = vld [vmem:[%s65] sm:$0x1]
    %67 = vrot.lane.b32.xlu0 %v66, 40
    %v68 = vpop.permute.xlu0 %67
    %vm69 = vcmask 392512
    %70 = vst.msk [vmem:[#allocation0] sm:$0x1] %vm69, %v68
    %s71 = scalar_lea.vmem %s0, 4
    %v72 = vld [vmem:[%s71] sm:$0x1]
    %73 = vrot.lane.b32.xlu0 %v72, 32
    %v74 = vpop.permute.xlu0 %73
    %vm75 = vcmask 326912
    %76 = vst.msk [vmem:[#allocation0] sm:$0x1] %vm75, %v74
    %s77 = scalar_lea.vmem %s0, 3
    %v78 = vld [vmem:[%s77] sm:$0x1]
    %79 = vrot.lane.b32.xlu0 %v78, 24
    %v80 = vpop.permute.xlu0 %79
    %vm81 = vcmask 261312
    %82 = vst.msk [vmem:[#allocation0] sm:$0x1] %vm81, %v80
    %s83 = scalar_lea.vmem %s0, 2
    %v84 = vld [vmem:[%s83] sm:$0x1]
    %85 = vrot.lane.b32.xlu0 %v84, 16
    %v86 = vpop.permute.xlu0 %85
    %vm87 = vcmask 195712
    %88 = vst.msk [vmem:[#allocation0] sm:$0x1] %vm87, %v86
    %s89 = scalar_lea.vmem %s0, 1
    %v90 = vld [vmem:[%s89] sm:$0x1]
    %91 = vrot.lane.b32.xlu0 %v90, 8
    %v92 = vpop.permute.xlu0 %91
    %vm93 = vcmask 130112
    %94 = vst.msk [vmem:[#allocation0] sm:$0x1] %vm93, %v92
    %s96 = sshllo.u32 0, 1
    %v98 = vld [vmem:[#allocation0] sm:%s96]
    %s99 = sshllo.u32 0, 1
    %100 = vst [vmem:[%s1] sm:%s99] %v98

// kernel: conv2d_forward.3
$region0: #{conv2d_forward.3}
  #allocation0 [shape = 'u32[]', space=smem, size = 0x4, offset = 0x4, fixed_abs, tag = 'smem constant byte address 0x4 - core index']
  #allocation1 [shape = 'u32[144,128]{1,0:T(1,128)}', space=vmem, size = 0x12000, scoped, tag = 'internal scratch']
  #allocation2 [shape = 'f32[1]{0:T(128)S(6)}', space=smem, size = 0x200, scoped, tag = 'scoped memory for conv2d_forward.3']
  %s0 = inlined_call_operand.vmem [shape: bf16[2,16,128], index: 0, kind: input, shape index: {}]
  %s1 = inlined_call_operand.vmem [shape: f32[1,128], index: 1, kind: input, shape index: {}]
  %s2 = inlined_call_operand.vmem [shape: f32[1,128], index: 2, kind: input, shape index: {}]
  %s3 = inlined_call_operand.<no memory space> [shape: f32[1], index: 3, kind: input, shape index: {}]
  %s4 = inlined_call_operand.vmem [shape: f32[2,16,128], index: 4, kind: output, shape index: {}]
  %s5 = sld [smem:[#allocation0]]
  $region49: #{conv2d_forward.3} parent=0
    _
  %s7 = ssub.s32 1, %s5
  %s8 = scalar_select 0, %s7, %s5
  %9 = sst [smem:[#allocation2]] %s3
  loop: start=0, step=1, limit=4
  $region2: #{conv2d_forward.3} parent=0 // loop_pre_header
    _
  $region3: #{conv2d_forward.3} parent=0 // loop_header
    %s11 = sphi 0, %s15
    %p12 = scmp.ge.s32.totalorder %s11, 4
    %s18 = sphi 0, %s30
    %s19 = sphi 0, %s26
    %s20 = sphi 0, %s18
    %s21 = sphi 0, %s19
    %s22 = sphi 0, %s20
    %s23 = sphi 0, %s21
    %s35 = sphi 0, %s37
    %s38 = sphi 0, %s35
    %s39 = sphi 0, %s38
    %s55 = sphi 0, %s39
    %s59 = sphi 0, %s59
    %s61 = sphi 0, %s59
    %s62 = sphi 0, %s61
    %s76 = sphi 0, %s62
    %s80 = sphi 0, %s80
    %s82 = sphi 0, %s80
    %s83 = sphi 0, %s82
    %s97 = sphi 0, %s83
    %s101 = sphi 0, %s101
    %s103 = sphi 0, %s101
    %s104 = sphi 0, %s103
    %s118 = sphi 0, %s104
    %s126 = sphi 0, %s128
    %s129 = sphi 0, %s126
    %s130 = sphi 0, %s129
    %s146 = sphi 0, %s130
  $region4: #{conv2d_forward.3} parent=0 // loop_header_branch
    %14 = sbr.rel (%p12) target = $region8
  $region5: #{conv2d_forward.3} parent=0 // loop_body
    %s16 = ssub.s32 %s11, 1
    %s17 = ssub.s32 %s11, 2
    %s24 = sadd.s32 1, %s19
    %p25 = scmp.ge.s32.totalorder %s24, 1
    %s26 = scalar_select %p25, 0, %s24
    %s27 = sadd.s32 1, %s18
    %s28 = scalar_select %p25, %s27, %s18
    %p29 = scmp.ge.s32.totalorder %s28, 2
    %s30 = scalar_select %p29, 0, %s28
    %s31 = ssub.s32 %s18, %s30
    %s32 = ssub.s32 %s19, %s26
    %s33 = sor.u32 %s31, %s32
    %p34 = scmp.eq.s32.totalorder %s33, 0
    %s36 = sadd.s32 %s35, 1
    %s37 = scalar_select %p34, %s35, %s36
    %p40 = pneg %p34
    %p41 = scmp.eq.s32.totalorder %s11, 1
    %p42 = por %p40, %p41
    %p43 = scmp.ne.s32.totalorder %s35, %s38
    %p44 = scmp.eq.s32.totalorder %s11, 0
    %p45 = por %p43, %p44
    %p46 = scmp.ne.s32.totalorder %s35, %s38
    %p47 = scmp.eq.s32.totalorder %s16, 1
    %p48 = por %p46, %p47
    %p49 = scmp.ne.s32.totalorder %s38, %s39
    %p50 = scmp.eq.s32.totalorder %s16, 0
    %p51 = por %p49, %p50
    %p52 = scmp.ne.s32.totalorder %s38, %s39
    %p53 = scmp.eq.s32.totalorder %s17, 1
    %p54 = por %p52, %p53
    %p56 = scmp.ne.s32.totalorder %s39, %s55
    %p57 = scmp.eq.s32.totalorder %s17, 0
    %p58 = por %p56, %p57
    %s60 = sadd.s32 %s59, 1
    %p63 = scmp.eq.s32.totalorder %s11, 1
    %p64 = scmp.ne.s32.totalorder %s59, %s61
    %p65 = scmp.eq.s32.totalorder %s11, 0
    %p66 = por %p64, %p65
    %p67 = scmp.ne.s32.totalorder %s59, %s61
    %p68 = scmp.eq.s32.totalorder %s16, 1
    %p69 = por %p67, %p68
    %p70 = scmp.ne.s32.totalorder %s61, %s62
    %p71 = scmp.eq.s32.totalorder %s16, 0
    %p72 = por %p70, %p71
    %p73 = scmp.ne.s32.totalorder %s61, %s62
    %p74 = scmp.eq.s32.totalorder %s17, 1
    %p75 = por %p73, %p74
    %p77 = scmp.ne.s32.totalorder %s62, %s76
    %p78 = scmp.eq.s32.totalorder %s17, 0
    %p79 = por %p77, %p78
    %s81 = sadd.s32 %s80, 1
    %p84 = scmp.eq.s32.totalorder %s11, 1
    %p85 = scmp.ne.s32.totalorder %s80, %s82
    %p86 = scmp.eq.s32.totalorder %s11, 0
    %p87 = por %p85, %p86
    %p88 = scmp.ne.s32.totalorder %s80, %s82
    %p89 = scmp.eq.s32.totalorder %s16, 1
    %p90 = por %p88, %p89
    %p91 = scmp.ne.s32.totalorder %s82, %s83
    %p92 = scmp.eq.s32.totalorder %s16, 0
    %p93 = por %p91, %p92
    %p94 = scmp.ne.s32.totalorder %s82, %s83
    %p95 = scmp.eq.s32.totalorder %s17, 1
    %p96 = por %p94, %p95
    %p98 = scmp.ne.s32.totalorder %s83, %s97
    %p99 = scmp.eq.s32.totalorder %s17, 0
    %p100 = por %p98, %p99
    %s102 = sadd.s32 %s101, 1
    %p105 = scmp.eq.s32.totalorder %s11, 1
    %p106 = scmp.ne.s32.totalorder %s101, %s103
    %p107 = scmp.eq.s32.totalorder %s11, 0
    %p108 = por %p106, %p107
    %p109 = scmp.ne.s32.totalorder %s101, %s103
    %p110 = scmp.eq.s32.totalorder %s16, 1
    %p111 = por %p109, %p110
    %p112 = scmp.ne.s32.totalorder %s103, %s104
    %p113 = scmp.eq.s32.totalorder %s16, 0
    %p114 = por %p112, %p113
    %p115 = scmp.ne.s32.totalorder %s103, %s104
    %p116 = scmp.eq.s32.totalorder %s17, 1
    %p117 = por %p115, %p116
    %p119 = scmp.ne.s32.totalorder %s104, %s118
    %p120 = scmp.eq.s32.totalorder %s17, 0
    %p121 = por %p119, %p120
    %s122 = ssub.s32 %s18, %s30
    %s123 = ssub.s32 %s19, %s26
    %s124 = sor.u32 %s122, %s123
    %p125 = scmp.eq.s32.totalorder %s124, 0
    %s127 = sadd.s32 %s126, 1
    %s128 = scalar_select %p125, %s126, %s127
    %p131 = pneg %p125
    %p132 = scmp.eq.s32.totalorder %s11, 1
    %p133 = por %p131, %p132
    %p134 = scmp.ne.s32.totalorder %s126, %s129
    %p135 = scmp.eq.s32.totalorder %s11, 0
    %p136 = por %p134, %p135
    %p137 = scmp.ne.s32.totalorder %s126, %s129
    %p138 = scmp.eq.s32.totalorder %s16, 1
    %p139 = por %p137, %p138
    %p140 = scmp.ne.s32.totalorder %s129, %s130
    %p141 = scmp.eq.s32.totalorder %s16, 0
    %p142 = por %p140, %p141
    %p143 = scmp.ne.s32.totalorder %s129, %s130
    %p144 = scmp.eq.s32.totalorder %s17, 1
    %p145 = por %p143, %p144
    %p147 = scmp.ne.s32.totalorder %s130, %s146
    %p148 = scmp.eq.s32.totalorder %s17, 0
    %p149 = por %p147, %p148
    %p150 = scmp.le.s32.totalorder 1, %s11
    %p151 = scmp.lt.s32.totalorder %s11, 3
    %p152 = pnand %p150, %p151
    %p153 = pneg %p152
    // Predicated region
    $region9: #{conv2d_forward.3} parent=5 // pred_check
      _
    $region10: #{conv2d_forward.3} parent=5 // pred_check_branch
      %155 = sbr.rel (%p152) target = $region12
    $region11: #{conv2d_forward.3} parent=5 // pred_region
      %s156 = ssub.s32 %s11, 1
      // Predicated region
      $region13: #{conv2d_forward.3} parent=11 // pred_check
        %p157 = pneg %p72
      $region14: #{conv2d_forward.3} parent=11 // pred_check_branch
        %159 = sbr.rel (%p157) target = $region16
      $region15: #{conv2d_forward.3} parent=11 // pred_region
        _
      $region16: #{conv2d_forward.3} parent=11 // pred_fallthru
        _
      // Predicated region
      $region17: #{conv2d_forward.3} parent=11 // pred_check
        %p160 = pneg %p93
      $region18: #{conv2d_forward.3} parent=11 // pred_check_branch
        %162 = sbr.rel (%p160) target = $region20
      $region19: #{conv2d_forward.3} parent=11 // pred_region
        _
      $region20: #{conv2d_forward.3} parent=11 // pred_fallthru
        _
      // Predicated region
      $region21: #{conv2d_forward.3} parent=11 // pred_check
        %p163 = pneg %p114
      $region22: #{conv2d_forward.3} parent=11 // pred_check_branch
        %165 = sbr.rel (%p163) target = $region24
      $region23: #{conv2d_forward.3} parent=11 // pred_region
        _
      $region24: #{conv2d_forward.3} parent=11 // pred_fallthru
        _
    $region12: #{conv2d_forward.3} parent=5 // pred_fallthru
      _
    %p166 = scmp.lt.s32.totalorder %s11, 2
    // Predicated region
    $region25: #{conv2d_forward.3} parent=5 // pred_check
      %p167 = pneg %p166
    $region26: #{conv2d_forward.3} parent=5 // pred_check_branch
      %169 = sbr.rel (%p167) target = $region28
    $region27: #{conv2d_forward.3} parent=5 // pred_region
      // Predicated region
      $region29: #{conv2d_forward.3} parent=27 // pred_check
        %p170 = pneg %p45
      $region30: #{conv2d_forward.3} parent=27 // pred_check_branch
        %172 = sbr.rel (%p170) target = $region32
      $region31: #{conv2d_forward.3} parent=27 // pred_region
        %s173 = smul.u32 2, %s19
        %p174 = scmp.lt.s32.totalorder %s18, 1
        %s175 = scalar_select %p174, %s18, 1
        %p176 = scmp.lt.s32.totalorder %s173, 1
        %s177 = scalar_select %p176, %s173, 1
        %s178 = smul.addr %s175, 2
        %s179 = sadd.s32 %s177, %s178
        %s180 = smul.addr %s179, 4
        %s181 = scalar_lea.vmem %s0, %s180
        %s182 = smul.u32 2, %s19
      $region32: #{conv2d_forward.3} parent=27 // pred_fallthru
        _
    $region28: #{conv2d_forward.3} parent=5 // pred_fallthru
      _
    %p183 = scmp.le.s32.totalorder 1, %s11
    %p184 = scmp.lt.s32.totalorder %s11, 3
    %p185 = pnand %p183, %p184
    %p186 = pneg %p185
    // Predicated region
    $region33: #{conv2d_forward.3} parent=5 // pred_check
      _
    $region34: #{conv2d_forward.3} parent=5 // pred_check_branch
      %188 = sbr.rel (%p185) target = $region36
    $region35: #{conv2d_forward.3} parent=5 // pred_region
      %s189 = ssub.s32 %s11, 1
      %s190 = smul.u32 2, %s21
      %p191 = scmp.lt.s32.totalorder %s20, 1
      %s192 = scalar_select %p191, %s20, 1
      %p193 = scmp.lt.s32.totalorder %s190, 1
      %s194 = scalar_select %p193, %s190, 1
      %s195 = smul.addr %s192, 2
      %s196 = sadd.s32 %s194, %s195
      %s197 = smul.addr %s196, 4
      %s198 = scalar_lea.vmem %s0, %s197
      %p199 = pneg %p51
      %p200 = pneg %p48
      %p201 = pneg %p72
      %p202 = pneg %p69
      %p203 = pneg %p93
      %p204 = pneg %p90
      %p205 = pneg %p114
      %p206 = pneg %p111
      %p207 = pneg %p142
      %p208 = pneg %p139
      %s209 = smul.u32 2, %s21
      %p210 = scmp.lt.s32.totalorder %s20, 1
      %s211 = scalar_select %p210, %s20, 1
      %p212 = scmp.lt.s32.totalorder %s209, 1
      %s213 = scalar_select %p212, %s209, 1
      %s214 = smul.addr %s211, 2
      %s215 = sadd.s32 %s213, %s214
      %s216 = smul.addr %s215, 8
      %s217 = scalar_lea.vmem %s4, %s216
      %s218 = smul.u32 2, %s21
      %p219 = scmp.lt.s32.totalorder %s20, 1
      %s220 = scalar_select %p219, %s20, 1
      %p221 = scmp.lt.s32.totalorder %s218, 1
      %s222 = scalar_select %p221, %s218, 1
      %s223 = smul.addr %s220, 2
      %s224 = sadd.s32 %s222, %s223
      %s225 = smul.addr %s224, 4
      %s226 = scalar_lea.vmem %s0, %s225
      %s227 = smul.u32 2, %s21
      %s228 = smul.u32 2, %s21
      %p229 = scmp.lt.s32.totalorder %s20, 1
      %s230 = scalar_select %p229, %s20, 1
      %p231 = scmp.lt.s32.totalorder %s228, 1
      %s232 = scalar_select %p231, %s228, 1
      %s233 = smul.addr %s230, 2
      %s234 = sadd.s32 %s232, %s233
      %s235 = smul.addr %s234, 8
      %s236 = scalar_lea.vmem %s4, %s235
      %s237 = smul.u32 2, %s21
      %v238 = vld [vmem:[%s226] sm:$0xf]
      %v239 = vld [vmem:[%s226 + $0x4] sm:$0xf]
      %v240 = vunpack.c.l.bf16 %v238
      %v241 = vunpack.c.l.bf16 %v239
      %v242 = vld [vmem:[%s1] sm:$0x1]
      %v244 = vlaneseq
      %v245 = vshrl.u32 %v244, 7
      %v246 = vsub.s32 0, %v245
      %v247 = vrot.slane %v242, %v246
      %v249 = vmul.f32 %v240, %v247
      %v250 = vmul.f32 %v241, %v247
      %v251 = vld [vmem:[%s2] sm:$0x1]
      %v253 = vlaneseq
      %v254 = vshrl.u32 %v253, 7
      %v255 = vsub.s32 0, %v254
      %v256 = vrot.slane %v251, %v255
      %v258 = vadd.f32 %v249, %v256
      %v259 = vadd.f32 %v250, %v256
      %v260 = vmax.f32 %v258, 0.0
      %v261 = vmax.f32 %v259, 0.0
      %262 = vst [vmem:[%s236] sm:$0xff] %v260
      %263 = vst [vmem:[%s236 + $0x8] sm:$0xff] %v261
      %s264 = smul.u32 2, %s21
      %p265 = scmp.lt.s32.totalorder %s20, 1
      %s266 = scalar_select %p265, %s20, 1
      %p267 = scmp.lt.s32.totalorder %s264, 1
      %s268 = scalar_select %p267, %s264, 1
      %s269 = smul.addr %s266, 2
      %s270 = sadd.s32 %s268, %s269
      %s271 = smul.addr %s270, 8
      %s272 = scalar_lea.vmem %s4, %s271
      // Predicated region
      $region37: #{conv2d_forward.3} parent=35 // pred_check
        %p273 = pneg %p139
      $region38: #{conv2d_forward.3} parent=35 // pred_check_branch
        %275 = sbr.rel (%p273) target = $region40
      $region39: #{conv2d_forward.3} parent=35 // pred_region
        %s276 = smul.u32 2, %s21
      $region40: #{conv2d_forward.3} parent=35 // pred_fallthru
        _
    $region36: #{conv2d_forward.3} parent=5 // pred_fallthru
      _
    %p277 = scmp.le.s32.totalorder 2, %s11
    // Predicated region
    $region41: #{conv2d_forward.3} parent=5 // pred_check
      %p278 = pneg %p277
    $region42: #{conv2d_forward.3} parent=5 // pred_check_branch
      %280 = sbr.rel (%p278) target = $region44
    $region43: #{conv2d_forward.3} parent=5 // pred_region
      %s281 = ssub.s32 %s11, 2
      // Predicated region
      $region45: #{conv2d_forward.3} parent=43 // pred_check
        %p282 = pneg %p145
      $region46: #{conv2d_forward.3} parent=43 // pred_check_branch
        %284 = sbr.rel (%p282) target = $region48
      $region47: #{conv2d_forward.3} parent=43 // pred_region
        %s285 = smul.u32 2, %s23
        %p286 = scmp.lt.s32.totalorder %s22, 1
        %s287 = scalar_select %p286, %s22, 1
        %p288 = scmp.lt.s32.totalorder %s285, 1
        %s289 = scalar_select %p288, %s285, 1
        %s290 = smul.addr %s287, 2
        %s291 = sadd.s32 %s289, %s290
        %s292 = smul.addr %s291, 8
        %s293 = scalar_lea.vmem %s4, %s292
      $region48: #{conv2d_forward.3} parent=43 // pred_fallthru
        _
    $region44: #{conv2d_forward.3} parent=5 // pred_fallthru
      _
  $region6: #{conv2d_forward.3} parent=0 // loop_footer
    %s15 = sadd.s32 1, %s11
  $region7: #{conv2d_forward.3} parent=0 // loop_footer_branch
    %10 = sbr.rel target = $region3
  $region8: #{conv2d_forward.3} parent=0 // loop_exit
    _

// kernel: conv2d_forward.3
$region0: #{conv2d_forward.3}
  #allocation0 [shape = 'u32[]', space=smem, size = 0x4, offset = 0x4, fixed_abs, tag = 'smem constant byte address 0x4 - core index']
  #allocation1 [shape = 'u32[144,128]{1,0:T(1,128)}', space=vmem, size = 0x12000, scoped, tag = 'internal scratch']
  #allocation2 [shape = 'f32[1]{0:T(128)S(6)}', space=smem, size = 0x200, scoped, tag = 'scoped memory for conv2d_forward.3']
  %s0 = inlined_call_operand.vmem [shape: bf16[2,256,8], index: 0, kind: input, shape index: {}]
  %s1 = inlined_call_operand.vmem [shape: f32[1,8], index: 1, kind: input, shape index: {}]
  %s2 = inlined_call_operand.vmem [shape: f32[1,8], index: 2, kind: input, shape index: {}]
  %s3 = inlined_call_operand.<no memory space> [shape: f32[1], index: 3, kind: input, shape index: {}]
  %s4 = inlined_call_operand.vmem [shape: f32[2,256,8], index: 4, kind: output, shape index: {}]
  %s5 = sld [smem:[#allocation0]]
  $region49: #{conv2d_forward.3} parent=0
    _
  %s7 = ssub.s32 1, %s5
  %s8 = scalar_select 0, %s7, %s5
  %9 = sst [smem:[#allocation2]] %s3
  loop: start=0, step=1, limit=4
  $region2: #{conv2d_forward.3} parent=0 // loop_pre_header
    _
  $region3: #{conv2d_forward.3} parent=0 // loop_header
    %s11 = sphi 0, %s15
    %p12 = scmp.ge.s32.totalorder %s11, 4
    %s18 = sphi 0, %s30
    %s19 = sphi 0, %s26
    %s20 = sphi 0, %s18
    %s21 = sphi 0, %s19
    %s22 = sphi 0, %s20
    %s23 = sphi 0, %s21
    %s35 = sphi 0, %s37
    %s38 = sphi 0, %s35
    %s39 = sphi 0, %s38
    %s55 = sphi 0, %s39
    %s59 = sphi 0, %s59
    %s61 = sphi 0, %s59
    %s62 = sphi 0, %s61
    %s76 = sphi 0, %s62
    %s80 = sphi 0, %s80
    %s82 = sphi 0, %s80
    %s83 = sphi 0, %s82
    %s97 = sphi 0, %s83
    %s101 = sphi 0, %s101
    %s103 = sphi 0, %s101
    %s104 = sphi 0, %s103
    %s118 = sphi 0, %s104
    %s126 = sphi 0, %s128
    %s129 = sphi 0, %s126
    %s130 = sphi 0, %s129
    %s146 = sphi 0, %s130
  $region4: #{conv2d_forward.3} parent=0 // loop_header_branch
    %14 = sbr.rel (%p12) target = $region8
  $region5: #{conv2d_forward.3} parent=0 // loop_body
    %s16 = ssub.s32 %s11, 1
    %s17 = ssub.s32 %s11, 2
    %s24 = sadd.s32 1, %s19
    %p25 = scmp.ge.s32.totalorder %s24, 1
    %s26 = scalar_select %p25, 0, %s24
    %s27 = sadd.s32 1, %s18
    %s28 = scalar_select %p25, %s27, %s18
    %p29 = scmp.ge.s32.totalorder %s28, 2
    %s30 = scalar_select %p29, 0, %s28
    %s31 = ssub.s32 %s18, %s30
    %s32 = ssub.s32 %s19, %s26
    %s33 = sor.u32 %s31, %s32
    %p34 = scmp.eq.s32.totalorder %s33, 0
    %s36 = sadd.s32 %s35, 1
    %s37 = scalar_select %p34, %s35, %s36
    %p40 = pneg %p34
    %p41 = scmp.eq.s32.totalorder %s11, 1
    %p42 = por %p40, %p41
    %p43 = scmp.ne.s32.totalorder %s35, %s38
    %p44 = scmp.eq.s32.totalorder %s11, 0
    %p45 = por %p43, %p44
    %p46 = scmp.ne.s32.totalorder %s35, %s38
    %p47 = scmp.eq.s32.totalorder %s16, 1
    %p48 = por %p46, %p47
    %p49 = scmp.ne.s32.totalorder %s38, %s39
    %p50 = scmp.eq.s32.totalorder %s16, 0
    %p51 = por %p49, %p50
    %p52 = scmp.ne.s32.totalorder %s38, %s39
    %p53 = scmp.eq.s32.totalorder %s17, 1
    %p54 = por %p52, %p53
    %p56 = scmp.ne.s32.totalorder %s39, %s55
    %p57 = scmp.eq.s32.totalorder %s17, 0
    %p58 = por %p56, %p57
    %s60 = sadd.s32 %s59, 1
    %p63 = scmp.eq.s32.totalorder %s11, 1
    %p64 = scmp.ne.s32.totalorder %s59, %s61
    %p65 = scmp.eq.s32.totalorder %s11, 0
    %p66 = por %p64, %p65
    %p67 = scmp.ne.s32.totalorder %s59, %s61
    %p68 = scmp.eq.s32.totalorder %s16, 1
    %p69 = por %p67, %p68
    %p70 = scmp.ne.s32.totalorder %s61, %s62
    %p71 = scmp.eq.s32.totalorder %s16, 0
    %p72 = por %p70, %p71
    %p73 = scmp.ne.s32.totalorder %s61, %s62
    %p74 = scmp.eq.s32.totalorder %s17, 1
    %p75 = por %p73, %p74
    %p77 = scmp.ne.s32.totalorder %s62, %s76
    %p78 = scmp.eq.s32.totalorder %s17, 0
    %p79 = por %p77, %p78
    %s81 = sadd.s32 %s80, 1
    %p84 = scmp.eq.s32.totalorder %s11, 1
    %p85 = scmp.ne.s32.totalorder %s80, %s82
    %p86 = scmp.eq.s32.totalorder %s11, 0
    %p87 = por %p85, %p86
    %p88 = scmp.ne.s32.totalorder %s80, %s82
    %p89 = scmp.eq.s32.totalorder %s16, 1
    %p90 = por %p88, %p89
    %p91 = scmp.ne.s32.totalorder %s82, %s83
    %p92 = scmp.eq.s32.totalorder %s16, 0
    %p93 = por %p91, %p92
    %p94 = scmp.ne.s32.totalorder %s82, %s83
    %p95 = scmp.eq.s32.totalorder %s17, 1
    %p96 = por %p94, %p95
    %p98 = scmp.ne.s32.totalorder %s83, %s97
    %p99 = scmp.eq.s32.totalorder %s17, 0
    %p100 = por %p98, %p99
    %s102 = sadd.s32 %s101, 1
    %p105 = scmp.eq.s32.totalorder %s11, 1
    %p106 = scmp.ne.s32.totalorder %s101, %s103
    %p107 = scmp.eq.s32.totalorder %s11, 0
    %p108 = por %p106, %p107
    %p109 = scmp.ne.s32.totalorder %s101, %s103
    %p110 = scmp.eq.s32.totalorder %s16, 1
    %p111 = por %p109, %p110
    %p112 = scmp.ne.s32.totalorder %s103, %s104
    %p113 = scmp.eq.s32.totalorder %s16, 0
    %p114 = por %p112, %p113
    %p115 = scmp.ne.s32.totalorder %s103, %s104
    %p116 = scmp.eq.s32.totalorder %s17, 1
    %p117 = por %p115, %p116
    %p119 = scmp.ne.s32.totalorder %s104, %s118
    %p120 = scmp.eq.s32.totalorder %s17, 0
    %p121 = por %p119, %p120
    %s122 = ssub.s32 %s18, %s30
    %s123 = ssub.s32 %s19, %s26
    %s124 = sor.u32 %s122, %s123
    %p125 = scmp.eq.s32.totalorder %s124, 0
    %s127 = sadd.s32 %s126, 1
    %s128 = scalar_select %p125, %s126, %s127
    %p131 = pneg %p125
    %p132 = scmp.eq.s32.totalorder %s11, 1
    %p133 = por %p131, %p132
    %p134 = scmp.ne.s32.totalorder %s126, %s129
    %p135 = scmp.eq.s32.totalorder %s11, 0
    %p136 = por %p134, %p135
    %p137 = scmp.ne.s32.totalorder %s126, %s129
    %p138 = scmp.eq.s32.totalorder %s16, 1
    %p139 = por %p137, %p138
    %p140 = scmp.ne.s32.totalorder %s129, %s130
    %p141 = scmp.eq.s32.totalorder %s16, 0
    %p142 = por %p140, %p141
    %p143 = scmp.ne.s32.totalorder %s129, %s130
    %p144 = scmp.eq.s32.totalorder %s17, 1
    %p145 = por %p143, %p144
    %p147 = scmp.ne.s32.totalorder %s130, %s146
    %p148 = scmp.eq.s32.totalorder %s17, 0
    %p149 = por %p147, %p148
    %p150 = scmp.le.s32.totalorder 1, %s11
    %p151 = scmp.lt.s32.totalorder %s11, 3
    %p152 = pnand %p150, %p151
    %p153 = pneg %p152
    // Predicated region
    $region9: #{conv2d_forward.3} parent=5 // pred_check
      _
    $region10: #{conv2d_forward.3} parent=5 // pred_check_branch
      %155 = sbr.rel (%p152) target = $region12
    $region11: #{conv2d_forward.3} parent=5 // pred_region
      %s156 = ssub.s32 %s11, 1
      // Predicated region
      $region13: #{conv2d_forward.3} parent=11 // pred_check
        %p157 = pneg %p72
      $region14: #{conv2d_forward.3} parent=11 // pred_check_branch
        %159 = sbr.rel (%p157) target = $region16
      $region15: #{conv2d_forward.3} parent=11 // pred_region
        _
      $region16: #{conv2d_forward.3} parent=11 // pred_fallthru
        _
      // Predicated region
      $region17: #{conv2d_forward.3} parent=11 // pred_check
        %p160 = pneg %p93
      $region18: #{conv2d_forward.3} parent=11 // pred_check_branch
        %162 = sbr.rel (%p160) target = $region20
      $region19: #{conv2d_forward.3} parent=11 // pred_region
        _
      $region20: #{conv2d_forward.3} parent=11 // pred_fallthru
        _
      // Predicated region
      $region21: #{conv2d_forward.3} parent=11 // pred_check
        %p163 = pneg %p114
      $region22: #{conv2d_forward.3} parent=11 // pred_check_branch
        %165 = sbr.rel (%p163) target = $region24
      $region23: #{conv2d_forward.3} parent=11 // pred_region
        _
      $region24: #{conv2d_forward.3} parent=11 // pred_fallthru
        _
    $region12: #{conv2d_forward.3} parent=5 // pred_fallthru
      _
    %p166 = scmp.lt.s32.totalorder %s11, 2
    // Predicated region
    $region25: #{conv2d_forward.3} parent=5 // pred_check
      %p167 = pneg %p166
    $region26: #{conv2d_forward.3} parent=5 // pred_check_branch
      %169 = sbr.rel (%p167) target = $region28
    $region27: #{conv2d_forward.3} parent=5 // pred_region
      // Predicated region
      $region29: #{conv2d_forward.3} parent=27 // pred_check
        %p170 = pneg %p45
      $region30: #{conv2d_forward.3} parent=27 // pred_check_branch
        %172 = sbr.rel (%p170) target = $region32
      $region31: #{conv2d_forward.3} parent=27 // pred_region
        %s173 = smul.u32 32, %s19
        %p174 = scmp.lt.s32.totalorder %s18, 1
        %s175 = scalar_select %p174, %s18, 1
        %p176 = scmp.lt.s32.totalorder %s173, 31
        %s177 = scalar_select %p176, %s173, 31
        %s178 = smul.addr %s175, 32
        %s179 = sadd.s32 %s177, %s178
        %s180 = smul.addr %s179, 4
        %s181 = scalar_lea.vmem %s0, %s180
        %s182 = smul.u32 32, %s19
      $region32: #{conv2d_forward.3} parent=27 // pred_fallthru
        _
    $region28: #{conv2d_forward.3} parent=5 // pred_fallthru
      _
    %p183 = scmp.le.s32.totalorder 1, %s11
    %p184 = scmp.lt.s32.totalorder %s11, 3
    %p185 = pnand %p183, %p184
    %p186 = pneg %p185
    // Predicated region
    $region33: #{conv2d_forward.3} parent=5 // pred_check
      _
    $region34: #{conv2d_forward.3} parent=5 // pred_check_branch
      %188 = sbr.rel (%p185) target = $region36
    $region35: #{conv2d_forward.3} parent=5 // pred_region
      %s189 = ssub.s32 %s11, 1
      %s190 = smul.u32 32, %s21
      %p191 = scmp.lt.s32.totalorder %s20, 1
      %s192 = scalar_select %p191, %s20, 1
      %p193 = scmp.lt.s32.totalorder %s190, 31
      %s194 = scalar_select %p193, %s190, 31
      %s195 = smul.addr %s192, 32
      %s196 = sadd.s32 %s194, %s195
      %s197 = smul.addr %s196, 4
      %s198 = scalar_lea.vmem %s0, %s197
      %p199 = pneg %p51
      %p200 = pneg %p48
      %p201 = pneg %p72
      %p202 = pneg %p69
      %p203 = pneg %p93
      %p204 = pneg %p90
      %p205 = pneg %p114
      %p206 = pneg %p111
      %p207 = pneg %p142
      %p208 = pneg %p139
      %s209 = smul.u32 32, %s21
      %p210 = scmp.lt.s32.totalorder %s20, 1
      %s211 = scalar_select %p210, %s20, 1
      %p212 = scmp.lt.s32.totalorder %s209, 31
      %s213 = scalar_select %p212, %s209, 31
      %s214 = smul.addr %s211, 32
      %s215 = sadd.s32 %s213, %s214
      %s216 = smul.addr %s215, 8
      %s217 = scalar_lea.vmem %s4, %s216
      %s218 = smul.u32 32, %s21
      %p219 = scmp.lt.s32.totalorder %s20, 1
      %s220 = scalar_select %p219, %s20, 1
      %p221 = scmp.lt.s32.totalorder %s218, 31
      %s222 = scalar_select %p221, %s218, 31
      %s223 = smul.addr %s220, 32
      %s224 = sadd.s32 %s222, %s223
      %s225 = smul.addr %s224, 4
      %s226 = scalar_lea.vmem %s0, %s225
      %s227 = smul.u32 32, %s21
      %s228 = smul.u32 32, %s21
      %p229 = scmp.lt.s32.totalorder %s20, 1
      %s230 = scalar_select %p229, %s20, 1
      %p231 = scmp.lt.s32.totalorder %s228, 31
      %s232 = scalar_select %p231, %s228, 31
      %s233 = smul.addr %s230, 32
      %s234 = sadd.s32 %s232, %s233
      %s235 = smul.addr %s234, 8
      %s236 = scalar_lea.vmem %s4, %s235
      %s237 = smul.u32 32, %s21
      %v238 = vld [vmem:[%s226] sm:$0xf]
      %v239 = vld [vmem:[%s226 + $0x4] sm:$0xf]
      %v240 = vld [vmem:[%s226 + $0x8] sm:$0xf]
      %v241 = vld [vmem:[%s226 + $0xc] sm:$0xf]
      %v242 = vld [vmem:[%s226 + $0x10] sm:$0xf]
      %v243 = vld [vmem:[%s226 + $0x14] sm:$0xf]
      %v244 = vld [vmem:[%s226 + $0x18] sm:$0xf]
      %v245 = vld [vmem:[%s226 + $0x1c] sm:$0xf]
      %v246 = vld [vmem:[%s226 + $0x20] sm:$0xf]
      %v247 = vld [vmem:[%s226 + $0x24] sm:$0xf]
      %v248 = vld [vmem:[%s226 + $0x28] sm:$0xf]
      %v249 = vld [vmem:[%s226 + $0x2c] sm:$0xf]
      %v250 = vld [vmem:[%s226 + $0x30] sm:$0xf]
      %v251 = vld [vmem:[%s226 + $0x34] sm:$0xf]
      %v252 = vld [vmem:[%s226 + $0x38] sm:$0xf]
      %v253 = vld [vmem:[%s226 + $0x3c] sm:$0xf]
      %v254 = vld [vmem:[%s226 + $0x40] sm:$0xf]
      %v255 = vld [vmem:[%s226 + $0x44] sm:$0xf]
      %v256 = vld [vmem:[%s226 + $0x48] sm:$0xf]
      %v257 = vld [vmem:[%s226 + $0x4c] sm:$0xf]
      %v258 = vld [vmem:[%s226 + $0x50] sm:$0xf]
      %v259 = vld [vmem:[%s226 + $0x54] sm:$0xf]
      %v260 = vld [vmem:[%s226 + $0x58] sm:$0xf]
      %v261 = vld [vmem:[%s226 + $0x5c] sm:$0xf]
      %v262 = vld [vmem:[%s226 + $0x60] sm:$0xf]
      %v263 = vld [vmem:[%s226 + $0x64] sm:$0xf]
      %v264 = vld [vmem:[%s226 + $0x68] sm:$0xf]
      %v265 = vld [vmem:[%s226 + $0x6c] sm:$0xf]
      %v266 = vld [vmem:[%s226 + $0x70] sm:$0xf]
      %v267 = vld [vmem:[%s226 + $0x74] sm:$0xf]
      %v268 = vld [vmem:[%s226 + $0x78] sm:$0xf]
      %v269 = vld [vmem:[%s226 + $0x7c] sm:$0xf]
      %v270 = vunpack.c.l.bf16 %v238
      %v271 = vunpack.c.l.bf16 %v239
      %v272 = vunpack.c.l.bf16 %v240
      %v273 = vunpack.c.l.bf16 %v241
      %v274 = vunpack.c.l.bf16 %v242
      %v275 = vunpack.c.l.bf16 %v243
      %v276 = vunpack.c.l.bf16 %v244
      %v277 = vunpack.c.l.bf16 %v245
      %v278 = vunpack.c.l.bf16 %v246
      %v279 = vunpack.c.l.bf16 %v247
      %v280 = vunpack.c.l.bf16 %v248
      %v281 = vunpack.c.l.bf16 %v249
      %v282 = vunpack.c.l.bf16 %v250
      %v283 = vunpack.c.l.bf16 %v251
      %v284 = vunpack.c.l.bf16 %v252
      %v285 = vunpack.c.l.bf16 %v253
      %v286 = vunpack.c.l.bf16 %v254
      %v287 = vunpack.c.l.bf16 %v255
      %v288 = vunpack.c.l.bf16 %v256
      %v289 = vunpack.c.l.bf16 %v257
      %v290 = vunpack.c.l.bf16 %v258
      %v291 = vunpack.c.l.bf16 %v259
      %v292 = vunpack.c.l.bf16 %v260
      %v293 = vunpack.c.l.bf16 %v261
      %v294 = vunpack.c.l.bf16 %v262
      %v295 = vunpack.c.l.bf16 %v263
      %v296 = vunpack.c.l.bf16 %v264
      %v297 = vunpack.c.l.bf16 %v265
      %v298 = vunpack.c.l.bf16 %v266
      %v299 = vunpack.c.l.bf16 %v267
      %v300 = vunpack.c.l.bf16 %v268
      %v301 = vunpack.c.l.bf16 %v269
      %v302 = vld [vmem:[%s1] sm:$0x1]
      %v304 = vlaneseq
      %v305 = vshrl.u32 %v304, 7
      %v306 = vsub.s32 0, %v305
      %v307 = vrot.slane %v302, %v306
      %v309 = vmul.f32 %v270, %v307
      %v310 = vmul.f32 %v271, %v307
      %v311 = vmul.f32 %v272, %v307
      %v312 = vmul.f32 %v273, %v307
      %v313 = vmul.f32 %v274, %v307
      %v314 = vmul.f32 %v275, %v307
      %v315 = vmul.f32 %v276, %v307
      %v316 = vmul.f32 %v277, %v307
      %v317 = vmul.f32 %v278, %v307
      %v318 = vmul.f32 %v279, %v307
      %v319 = vmul.f32 %v280, %v307
      %v320 = vmul.f32 %v281, %v307
      %v321 = vmul.f32 %v282, %v307
      %v322 = vmul.f32 %v283, %v307
      %v323 = vmul.f32 %v284, %v307
      %v324 = vmul.f32 %v285, %v307
      %v325 = vmul.f32 %v286, %v307
      %v326 = vmul.f32 %v287, %v307
      %v327 = vmul.f32 %v288, %v307
      %v328 = vmul.f32 %v289, %v307
      %v329 = vmul.f32 %v290, %v307
      %v330 = vmul.f32 %v291, %v307
      %v331 = vmul.f32 %v292, %v307
      %v332 = vmul.f32 %v293, %v307
      %v333 = vmul.f32 %v294, %v307
      %v334 = vmul.f32 %v295, %v307
      %v335 = vmul.f32 %v296, %v307
      %v336 = vmul.f32 %v297, %v307
      %v337 = vmul.f32 %v298, %v307
      %v338 = vmul.f32 %v299, %v307
      %v339 = vmul.f32 %v300, %v307
      %v340 = vmul.f32 %v301, %v307
      %v341 = vld [vmem:[%s2] sm:$0x1]
      %v343 = vlaneseq
      %v344 = vshrl.u32 %v343, 7
      %v345 = vsub.s32 0, %v344
      %v346 = vrot.slane %v341, %v345
      %v348 = vadd.f32 %v309, %v346
      %v349 = vadd.f32 %v310, %v346
      %v350 = vadd.f32 %v311, %v346
      %v351 = vadd.f32 %v312, %v346
      %v352 = vadd.f32 %v313, %v346
      %v353 = vadd.f32 %v314, %v346
      %v354 = vadd.f32 %v315, %v346
      %v355 = vadd.f32 %v316, %v346
      %v356 = vadd.f32 %v317, %v346
      %v357 = vadd.f32 %v318, %v346
      %v358 = vadd.f32 %v319, %v346
      %v359 = vadd.f32 %v320, %v346
      %v360 = vadd.f32 %v321, %v346
      %v361 = vadd.f32 %v322, %v346
      %v362 = vadd.f32 %v323, %v346
      %v363 = vadd.f32 %v324, %v346
      %v364 = vadd.f32 %v325, %v346
      %v365 = vadd.f32 %v326, %v346
      %v366 = vadd.f32 %v327, %v346
      %v367 = vadd.f32 %v328, %v346
      %v368 = vadd.f32 %v329, %v346
      %v369 = vadd.f32 %v330, %v346
      %v370 = vadd.f32 %v331, %v346
      %v371 = vadd.f32 %v332, %v346
      %v372 = vadd.f32 %v333, %v346
      %v373 = vadd.f32 %v334, %v346
      %v374 = vadd.f32 %v335, %v346
      %v375 = vadd.f32 %v336, %v346
      %v376 = vadd.f32 %v337, %v346
      %v377 = vadd.f32 %v338, %v346
      %v378 = vadd.f32 %v339, %v346
      %v379 = vadd.f32 %v340, %v346
      %v380 = vmax.f32 %v348, 0.0
      %v381 = vmax.f32 %v349, 0.0
      %v382 = vmax.f32 %v350, 0.0
      %v383 = vmax.f32 %v351, 0.0
      %v384 = vmax.f32 %v352, 0.0
      %v385 = vmax.f32 %v353, 0.0
      %v386 = vmax.f32 %v354, 0.0
      %v387 = vmax.f32 %v355, 0.0
      %v388 = vmax.f32 %v356, 0.0
      %v389 = vmax.f32 %v357, 0.0
      %v390 = vmax.f32 %v358, 0.0
      %v391 = vmax.f32 %v359, 0.0
      %v392 = vmax.f32 %v360, 0.0
      %v393 = vmax.f32 %v361, 0.0
      %v394 = vmax.f32 %v362, 0.0
      %v395 = vmax.f32 %v363, 0.0
      %v396 = vmax.f32 %v364, 0.0
      %v397 = vmax.f32 %v365, 0.0
      %v398 = vmax.f32 %v366, 0.0
      %v399 = vmax.f32 %v367, 0.0
      %v400 = vmax.f32 %v368, 0.0
      %v401 = vmax.f32 %v369, 0.0
      %v402 = vmax.f32 %v370, 0.0
      %v403 = vmax.f32 %v371, 0.0
      %v404 = vmax.f32 %v372, 0.0
      %v405 = vmax.f32 %v373, 0.0
      %v406 = vmax.f32 %v374, 0.0
      %v407 = vmax.f32 %v375, 0.0
      %v408 = vmax.f32 %v376, 0.0
      %v409 = vmax.f32 %v377, 0.0
      %v410 = vmax.f32 %v378, 0.0
      %v411 = vmax.f32 %v379, 0.0
      %vm412 = vcmask 64512
      %413 = vst.msk [vmem:[%s236] sm:$0xff] %vm412, %v380
      %414 = vst.msk [vmem:[%s236 + $0x8] sm:$0xff] %vm412, %v381
      %415 = vst.msk [vmem:[%s236 + $0x10] sm:$0xff] %vm412, %v382
      %416 = vst.msk [vmem:[%s236 + $0x18] sm:$0xff] %vm412, %v383
      %417 = vst.msk [vmem:[%s236 + $0x20] sm:$0xff] %vm412, %v384
      %418 = vst.msk [vmem:[%s236 + $0x28] sm:$0xff] %vm412, %v385
      %419 = vst.msk [vmem:[%s236 + $0x30] sm:$0xff] %vm412, %v386
      %420 = vst.msk [vmem:[%s236 + $0x38] sm:$0xff] %vm412, %v387
      %421 = vst.msk [vmem:[%s236 + $0x40] sm:$0xff] %vm412, %v388
      %422 = vst.msk [vmem:[%s236 + $0x48] sm:$0xff] %vm412, %v389
      %423 = vst.msk [vmem:[%s236 + $0x50] sm:$0xff] %vm412, %v390
      %424 = vst.msk [vmem:[%s236 + $0x58] sm:$0xff] %vm412, %v391
      %425 = vst.msk [vmem:[%s236 + $0x60] sm:$0xff] %vm412, %v392
      %426 = vst.msk [vmem:[%s236 + $0x68] sm:$0xff] %vm412, %v393
      %427 = vst.msk [vmem:[%s236 + $0x70] sm:$0xff] %vm412, %v394
      %428 = vst.msk [vmem:[%s236 + $0x78] sm:$0xff] %vm412, %v395
      %429 = vst.msk [vmem:[%s236 + $0x80] sm:$0xff] %vm412, %v396
      %430 = vst.msk [vmem:[%s236 + $0x88] sm:$0xff] %vm412, %v397
      %431 = vst.msk [vmem:[%s236 + $0x90] sm:$0xff] %vm412, %v398
      %432 = vst.msk [vmem:[%s236 + $0x98] sm:$0xff] %vm412, %v399
      %433 = vst.msk [vmem:[%s236 + $0xa0] sm:$0xff] %vm412, %v400
      %434 = vst.msk [vmem:[%s236 + $0xa8] sm:$0xff] %vm412, %v401
      %435 = vst.msk [vmem:[%s236 + $0xb0] sm:$0xff] %vm412, %v402
      %436 = vst.msk [vmem:[%s236 + $0xb8] sm:$0xff] %vm412, %v403
      %437 = vst.msk [vmem:[%s236 + $0xc0] sm:$0xff] %vm412, %v404
      %438 = vst.msk [vmem:[%s236 + $0xc8] sm:$0xff] %vm412, %v405
      %439 = vst.msk [vmem:[%s236 + $0xd0] sm:$0xff] %vm412, %v406
      %440 = vst.msk [vmem:[%s236 + $0xd8] sm:$0xff] %vm412, %v407
      %441 = vst.msk [vmem:[%s236 + $0xe0] sm:$0xff] %vm412, %v408
      %442 = vst.msk [vmem:[%s236 + $0xe8] sm:$0xff] %vm412, %v409
      %443 = vst.msk [vmem:[%s236 + $0xf0] sm:$0xff] %vm412, %v410
      %444 = vst.msk [vmem:[%s236 + $0xf8] sm:$0xff] %vm412, %v411
      %s445 = smul.u32 32, %s21
      %p446 = scmp.lt.s32.totalorder %s20, 1
      %s447 = scalar_select %p446, %s20, 1
      %p448 = scmp.lt.s32.totalorder %s445, 31
      %s449 = scalar_select %p448, %s445, 31
      %s450 = smul.addr %s447, 32
      %s451 = sadd.s32 %s449, %s450
      %s452 = smul.addr %s451, 8
      %s453 = scalar_lea.vmem %s4, %s452
      // Predicated region
      $region37: #{conv2d_forward.3} parent=35 // pred_check
        %p454 = pneg %p139
      $region38: #{conv2d_forward.3} parent=35 // pred_check_branch
        %456 = sbr.rel (%p454) target = $region40
      $region39: #{conv2d_forward.3} parent=35 // pred_region
        %s457 = smul.u32 32, %s21
      $region40: #{conv2d_forward.3} parent=35 // pred_fallthru
        _
    $region36: #{conv2d_forward.3} parent=5 // pred_fallthru
      _
    %p458 = scmp.le.s32.totalorder 2, %s11
    // Predicated region
    $region41: #{conv2d_forward.3} parent=5 // pred_check
      %p459 = pneg %p458
    $region42: #{conv2d_forward.3} parent=5 // pred_check_branch
      %461 = sbr.rel (%p459) target = $region44
    $region43: #{conv2d_forward.3} parent=5 // pred_region
      %s462 = ssub.s32 %s11, 2
      // Predicated region
      $region45: #{conv2d_forward.3} parent=43 // pred_check
        %p463 = pneg %p145
      $region46: #{conv2d_forward.3} parent=43 // pred_check_branch
        %465 = sbr.rel (%p463) target = $region48
      $region47: #{conv2d_forward.3} parent=43 // pred_region
        %s466 = smul.u32 32, %s23
        %p467 = scmp.lt.s32.totalorder %s22, 1
        %s468 = scalar_select %p467, %s22, 1
        %p469 = scmp.lt.s32.totalorder %s466, 31
        %s470 = scalar_select %p469, %s466, 31
        %s471 = smul.addr %s468, 32
        %s472 = sadd.s32 %s470, %s471
        %s473 = smul.addr %s472, 8
        %s474 = scalar_lea.vmem %s4, %s473
      $region48: #{conv2d_forward.3} parent=43 // pred_fallthru
        _
    $region44: #{conv2d_forward.3} parent=5 // pred_fallthru
      _
  $region6: #{conv2d_forward.3} parent=0 // loop_footer
    %s15 = sadd.s32 1, %s11
  $region7: #{conv2d_forward.3} parent=0 // loop_footer_branch
    %10 = sbr.rel target = $region3
  $region8: #{conv2d_forward.3} parent=0 // loop_exit
    _

// kernel: conv2d_forward.2
$region0: #{conv2d_forward.2}
  #allocation0 [shape = 'u32[]', space=smem, size = 0x4, offset = 0x4, fixed_abs, tag = 'smem constant byte address 0x4 - core index']
  #allocation1 [shape = 'u32[144,128]{1,0:T(1,128)}', space=vmem, size = 0x12000, scoped, tag = 'internal scratch']
  #allocation2 [shape = 'bf16[18,18,4]{2,1,0:T(8,128)(2,1)}', space=vmem, size = 0x1b000, scoped, tag = 'scratch operand']
  #allocation3 [shape = 'f32[1]{0:T(128)S(6)}', space=smem, size = 0x200, scoped, tag = 'scoped memory for conv2d_forward.2']
  %s0 = inlined_call_operand.vmem [shape: bf16[2,18,18,4], index: 0, kind: input, shape index: {}, may-alias: {0,1}]
  %s1 = inlined_call_operand.vmem [shape: bf16[2,18,18,4], index: 1, kind: input, shape index: {}, may-alias: {0,1}]
  %s2 = inlined_call_operand.vmem [shape: bf16[36,8], index: 2, kind: input, shape index: {}]
  %s3 = inlined_call_operand.<no memory space> [shape: f32[1], index: 3, kind: input, shape index: {}]
  %s4 = inlined_call_operand.vmem [shape: bf16[2,256,8], index: 4, kind: output, shape index: {0}]
  %s5 = inlined_call_operand.vmem [shape: f32[2,1,2,8], index: 5, kind: output, shape index: {1}]
  %6 = xla_tuple %s4, %s5
  %s7 = sld [smem:[#allocation0]]
  $region57: #{conv2d_forward.2} parent=0
    _
  %s9 = ssub.s32 1, %s7
  %s10 = scalar_select 0, %s9, %s7
  %11 = sst [smem:[#allocation3]] %s3
  loop: start=0, step=1, limit=4
  $region2: #{conv2d_forward.2} parent=0 // loop_pre_header
    _
  $region3: #{conv2d_forward.2} parent=0 // loop_header
    %s13 = sphi 0, %s17
    %p14 = scmp.ge.s32.totalorder %s13, 4
    %s20 = sphi 0, %s32
    %s21 = sphi 0, %s28
    %s22 = sphi 0, %s20
    %s23 = sphi 0, %s21
    %s24 = sphi 0, %s22
    %s25 = sphi 0, %s23
    %s37 = sphi 0, %s39
    %s40 = sphi 0, %s37
    %s41 = sphi 0, %s40
    %s57 = sphi 0, %s41
    %s69 = sphi 0, %s71
    %s72 = sphi 0, %s69
    %s73 = sphi 0, %s72
    %s89 = sphi 0, %s73
    %s93 = sphi 0, %s93
    %s95 = sphi 0, %s93
    %s96 = sphi 0, %s95
    %s110 = sphi 0, %s96
    %s114 = sphi 0, %s114
    %s116 = sphi 0, %s114
    %s117 = sphi 0, %s116
    %s131 = sphi 0, %s117
    %s139 = sphi 0, %s141
    %s142 = sphi 0, %s139
    %s143 = sphi 0, %s142
    %s159 = sphi 0, %s143
    %s167 = sphi 0, %s169
    %s170 = sphi 0, %s167
    %s171 = sphi 0, %s170
    %s187 = sphi 0, %s171
  $region4: #{conv2d_forward.2} parent=0 // loop_header_branch
    %16 = sbr.rel (%p14) target = $region8
  $region5: #{conv2d_forward.2} parent=0 // loop_body
    %s18 = ssub.s32 %s13, 1
    %s19 = ssub.s32 %s13, 2
    %s26 = sadd.s32 1, %s21
    %p27 = scmp.ge.s32.totalorder %s26, 1
    %s28 = scalar_select %p27, 0, %s26
    %s29 = sadd.s32 1, %s20
    %s30 = scalar_select %p27, %s29, %s20
    %p31 = scmp.ge.s32.totalorder %s30, 2
    %s32 = scalar_select %p31, 0, %s30
    %s33 = ssub.s32 %s20, %s32
    %s34 = ssub.s32 %s21, %s28
    %s35 = sor.u32 %s33, %s34
    %p36 = scmp.eq.s32.totalorder %s35, 0
    %s38 = sadd.s32 %s37, 1
    %s39 = scalar_select %p36, %s37, %s38
    %p42 = pneg %p36
    %p43 = scmp.eq.s32.totalorder %s13, 1
    %p44 = por %p42, %p43
    %p45 = scmp.ne.s32.totalorder %s37, %s40
    %p46 = scmp.eq.s32.totalorder %s13, 0
    %p47 = por %p45, %p46
    %p48 = scmp.ne.s32.totalorder %s37, %s40
    %p49 = scmp.eq.s32.totalorder %s18, 1
    %p50 = por %p48, %p49
    %p51 = scmp.ne.s32.totalorder %s40, %s41
    %p52 = scmp.eq.s32.totalorder %s18, 0
    %p53 = por %p51, %p52
    %p54 = scmp.ne.s32.totalorder %s40, %s41
    %p55 = scmp.eq.s32.totalorder %s19, 1
    %p56 = por %p54, %p55
    %p58 = scmp.ne.s32.totalorder %s41, %s57
    %p59 = scmp.eq.s32.totalorder %s19, 0
    %p60 = por %p58, %p59
    %s61 = sadd.s32 %s21, 1
    %s62 = smul.u32 %s61, 8
    %s63 = sadd.s32 %s28, 1
    %s64 = smul.u32 %s63, 8
    %s65 = ssub.s32 %s20, %s32
    %s66 = ssub.s32 %s62, %s64
    %s67 = sor.u32 %s65, %s66
    %p68 = scmp.eq.s32.totalorder %s67, 0
    %s70 = sadd.s32 %s69, 1
    %s71 = scalar_select %p68, %s69, %s70
    %p74 = pneg %p68
    %p75 = scmp.eq.s32.totalorder %s13, 1
    %p76 = por %p74, %p75
    %p77 = scmp.ne.s32.totalorder %s69, %s72
    %p78 = scmp.eq.s32.totalorder %s13, 0
    %p79 = por %p77, %p78
    %p80 = scmp.ne.s32.totalorder %s69, %s72
    %p81 = scmp.eq.s32.totalorder %s18, 1
    %p82 = por %p80, %p81
    %p83 = scmp.ne.s32.totalorder %s72, %s73
    %p84 = scmp.eq.s32.totalorder %s18, 0
    %p85 = por %p83, %p84
    %p86 = scmp.ne.s32.totalorder %s72, %s73
    %p87 = scmp.eq.s32.totalorder %s19, 1
    %p88 = por %p86, %p87
    %p90 = scmp.ne.s32.totalorder %s73, %s89
    %p91 = scmp.eq.s32.totalorder %s19, 0
    %p92 = por %p90, %p91
    %s94 = sadd.s32 %s93, 1
    %p97 = scmp.eq.s32.totalorder %s13, 1
    %p98 = scmp.ne.s32.totalorder %s93, %s95
    %p99 = scmp.eq.s32.totalorder %s13, 0
    %p100 = por %p98, %p99
    %p101 = scmp.ne.s32.totalorder %s93, %s95
    %p102 = scmp.eq.s32.totalorder %s18, 1
    %p103 = por %p101, %p102
    %p104 = scmp.ne.s32.totalorder %s95, %s96
    %p105 = scmp.eq.s32.totalorder %s18, 0
    %p106 = por %p104, %p105
    %p107 = scmp.ne.s32.totalorder %s95, %s96
    %p108 = scmp.eq.s32.totalorder %s19, 1
    %p109 = por %p107, %p108
    %p111 = scmp.ne.s32.totalorder %s96, %s110
    %p112 = scmp.eq.s32.totalorder %s19, 0
    %p113 = por %p111, %p112
    %s115 = sadd.s32 %s114, 1
    %p118 = scmp.eq.s32.totalorder %s13, 1
    %p119 = scmp.ne.s32.totalorder %s114, %s116
    %p120 = scmp.eq.s32.totalorder %s13, 0
    %p121 = por %p119, %p120
    %p122 = scmp.ne.s32.totalorder %s114, %s116
    %p123 = scmp.eq.s32.totalorder %s18, 1
    %p124 = por %p122, %p123
    %p125 = scmp.ne.s32.totalorder %s116, %s117
    %p126 = scmp.eq.s32.totalorder %s18, 0
    %p127 = por %p125, %p126
    %p128 = scmp.ne.s32.totalorder %s116, %s117
    %p129 = scmp.eq.s32.totalorder %s19, 1
    %p130 = por %p128, %p129
    %p132 = scmp.ne.s32.totalorder %s117, %s131
    %p133 = scmp.eq.s32.totalorder %s19, 0
    %p134 = por %p132, %p133
    %s135 = ssub.s32 %s20, %s32
    %s136 = ssub.s32 %s21, %s28
    %s137 = sor.u32 %s135, %s136
    %p138 = scmp.eq.s32.totalorder %s137, 0
    %s140 = sadd.s32 %s139, 1
    %s141 = scalar_select %p138, %s139, %s140
    %p144 = pneg %p138
    %p145 = scmp.eq.s32.totalorder %s13, 1
    %p146 = por %p144, %p145
    %p147 = scmp.ne.s32.totalorder %s139, %s142
    %p148 = scmp.eq.s32.totalorder %s13, 0
    %p149 = por %p147, %p148
    %p150 = scmp.ne.s32.totalorder %s139, %s142
    %p151 = scmp.eq.s32.totalorder %s18, 1
    %p152 = por %p150, %p151
    %p153 = scmp.ne.s32.totalorder %s142, %s143
    %p154 = scmp.eq.s32.totalorder %s18, 0
    %p155 = por %p153, %p154
    %p156 = scmp.ne.s32.totalorder %s142, %s143
    %p157 = scmp.eq.s32.totalorder %s19, 1
    %p158 = por %p156, %p157
    %p160 = scmp.ne.s32.totalorder %s143, %s159
    %p161 = scmp.eq.s32.totalorder %s19, 0
    %p162 = por %p160, %p161
    %s163 = ssub.s32 %s20, %s32
    %s164 = ssub.s32 %s21, %s28
    %s165 = sor.u32 %s163, %s164
    %p166 = scmp.eq.s32.totalorder %s165, 0
    %s168 = sadd.s32 %s167, 1
    %s169 = scalar_select %p166, %s167, %s168
    %p172 = pneg %p166
    %p173 = scmp.eq.s32.totalorder %s13, 1
    %p174 = por %p172, %p173
    %p175 = scmp.ne.s32.totalorder %s167, %s170
    %p176 = scmp.eq.s32.totalorder %s13, 0
    %p177 = por %p175, %p176
    %p178 = scmp.ne.s32.totalorder %s167, %s170
    %p179 = scmp.eq.s32.totalorder %s18, 1
    %p180 = por %p178, %p179
    %p181 = scmp.ne.s32.totalorder %s170, %s171
    %p182 = scmp.eq.s32.totalorder %s18, 0
    %p183 = por %p181, %p182
    %p184 = scmp.ne.s32.totalorder %s170, %s171
    %p185 = scmp.eq.s32.totalorder %s19, 1
    %p186 = por %p184, %p185
    %p188 = scmp.ne.s32.totalorder %s171, %s187
    %p189 = scmp.eq.s32.totalorder %s19, 0
    %p190 = por %p188, %p189
    %p191 = scmp.le.s32.totalorder 1, %s13
    %p192 = scmp.lt.s32.totalorder %s13, 3
    %p193 = pnand %p191, %p192
    %p194 = pneg %p193
    // Predicated region
    $region9: #{conv2d_forward.2} parent=5 // pred_check
      _
    $region10: #{conv2d_forward.2} parent=5 // pred_check_branch
      %196 = sbr.rel (%p193) target = $region12
    $region11: #{conv2d_forward.2} parent=5 // pred_region
      %s197 = ssub.s32 %s13, 1
      // Predicated region
      $region13: #{conv2d_forward.2} parent=11 // pred_check
        %p198 = pneg %p106
      $region14: #{conv2d_forward.2} parent=11 // pred_check_branch
        %200 = sbr.rel (%p198) target = $region16
      $region15: #{conv2d_forward.2} parent=11 // pred_region
        _
      $region16: #{conv2d_forward.2} parent=11 // pred_fallthru
        _
      // Predicated region
      $region17: #{conv2d_forward.2} parent=11 // pred_check
        %p201 = pneg %p127
      $region18: #{conv2d_forward.2} parent=11 // pred_check_branch
        %203 = sbr.rel (%p201) target = $region20
      $region19: #{conv2d_forward.2} parent=11 // pred_region
        _
      $region20: #{conv2d_forward.2} parent=11 // pred_fallthru
        _
    $region12: #{conv2d_forward.2} parent=5 // pred_fallthru
      _
    %p204 = scmp.lt.s32.totalorder %s13, 2
    // Predicated region
    $region21: #{conv2d_forward.2} parent=5 // pred_check
      %p205 = pneg %p204
    $region22: #{conv2d_forward.2} parent=5 // pred_check_branch
      %207 = sbr.rel (%p205) target = $region24
    $region23: #{conv2d_forward.2} parent=5 // pred_region
      // Predicated region
      $region25: #{conv2d_forward.2} parent=23 // pred_check
        %p208 = pneg %p47
      $region26: #{conv2d_forward.2} parent=23 // pred_check_branch
        %210 = sbr.rel (%p208) target = $region28
      $region27: #{conv2d_forward.2} parent=23 // pred_region
        %s211 = smul.u32 16, %s21
        %s212 = ssub.s32 18, %s211
        %p213 = scmp.lt.s32.totalorder %s212, 16
        %s214 = scalar_select %p213, %s212, 16
        %s215 = smul.u32 64, %s214
        %s216 = smul.u32 %s215, 3
        %p217 = scmp.lt.s32.totalorder %s20, 1
        %s218 = scalar_select %p217, %s20, 1
        %p219 = scmp.lt.s32.totalorder %s211, 17
        %s220 = scalar_select %p219, %s211, 17
        %s221 = smul.addr %s220, 3
        %s222 = smul.addr %s218, 54
        %s223 = sadd.s32 %s221, %s222
        %s224 = smul.addr %s223, 4
        %s225 = scalar_lea.vmem %s0, %s224
        %s226 = smul.u32 16, %s21
        %s227 = ssub.s32 18, %s226
        %p228 = scmp.lt.s32.totalorder %s227, 16
        %s229 = scalar_select %p228, %s227, 16
        %s230 = smul.u32 64, %s229
        %s231 = smul.u32 %s230, 3
      $region28: #{conv2d_forward.2} parent=23 // pred_fallthru
        _
      // Predicated region
      $region29: #{conv2d_forward.2} parent=23 // pred_check
        %p232 = pneg %p79
      $region30: #{conv2d_forward.2} parent=23 // pred_check_branch
        %234 = sbr.rel (%p232) target = $region32
      $region31: #{conv2d_forward.2} parent=23 // pred_region
        %s235 = sadd.s32 %s21, 1
        %s236 = smul.u32 %s235, 8
        %s237 = smul.u32 2, %s236
        %p238 = scmp.lt.s32.totalorder %s20, 1
        %s239 = scalar_select %p238, %s20, 1
        %p240 = scmp.lt.s32.totalorder %s237, 17
        %s241 = scalar_select %p240, %s237, 17
        %s242 = smul.addr %s241, 3
        %s243 = smul.addr %s239, 54
        %s244 = sadd.s32 %s242, %s243
        %s245 = smul.addr %s244, 4
        %s246 = scalar_lea.vmem %s1, %s245
        %s247 = sadd.s32 %s21, 1
        %s248 = smul.u32 %s247, 8
        %s249 = smul.u32 2, %s248
      $region32: #{conv2d_forward.2} parent=23 // pred_fallthru
        _
    $region24: #{conv2d_forward.2} parent=5 // pred_fallthru
      _
    %p250 = scmp.le.s32.totalorder 1, %s13
    %p251 = scmp.lt.s32.totalorder %s13, 3
    %p252 = pnand %p250, %p251
    %p253 = pneg %p252
    // Predicated region
    $region33: #{conv2d_forward.2} parent=5 // pred_check
      _
    $region34: #{conv2d_forward.2} parent=5 // pred_check_branch
      %255 = sbr.rel (%p252) target = $region36
    $region35: #{conv2d_forward.2} parent=5 // pred_region
      %s256 = ssub.s32 %s13, 1
      %s257 = smul.u32 16, %s23
      %s258 = ssub.s32 18, %s257
      %p259 = scmp.lt.s32.totalorder %s258, 16
      %s260 = scalar_select %p259, %s258, 16
      %s261 = smul.u32 64, %s260
      %s262 = smul.u32 %s261, 3
      %p263 = scmp.lt.s32.totalorder %s22, 1
      %s264 = scalar_select %p263, %s22, 1
      %p265 = scmp.lt.s32.totalorder %s257, 17
      %s266 = scalar_select %p265, %s257, 17
      %s267 = smul.addr %s266, 3
      %s268 = smul.addr %s264, 54
      %s269 = sadd.s32 %s267, %s268
      %s270 = smul.addr %s269, 4
      %s271 = scalar_lea.vmem %s0, %s270
      %p272 = pneg %p53
      %p273 = pneg %p50
      %s274 = sadd.s32 %s23, 1
      %s275 = smul.u32 %s274, 8
      %s276 = smul.u32 2, %s275
      %p277 = scmp.lt.s32.totalorder %s22, 1
      %s278 = scalar_select %p277, %s22, 1
      %p279 = scmp.lt.s32.totalorder %s276, 17
      %s280 = scalar_select %p279, %s276, 17
      %s281 = smul.addr %s280, 3
      %s282 = smul.addr %s278, 54
      %s283 = sadd.s32 %s281, %s282
      %s284 = smul.addr %s283, 4
      %s285 = scalar_lea.vmem %s1, %s284
      %p286 = pneg %p85
      %p287 = pneg %p82
      %p288 = pneg %p106
      %p289 = pneg %p103
      %p290 = pneg %p127
      %p291 = pneg %p124
      %p292 = pneg %p155
      %p293 = pneg %p152
      %s294 = smul.u32 32, %s23
      %p295 = scmp.lt.s32.totalorder %s22, 1
      %s296 = scalar_select %p295, %s22, 1
      %p297 = scmp.lt.s32.totalorder %s294, 31
      %s298 = scalar_select %p297, %s294, 31
      %s299 = smul.addr %s296, 32
      %s300 = sadd.s32 %s298, %s299
      %s301 = smul.addr %s300, 4
      %s302 = scalar_lea.vmem %s4, %s301
      %p303 = pneg %p183
      %p304 = pneg %p180
      %p305 = scmp.lt.s32.totalorder %s22, 1
      %s306 = scalar_select %p305, %s22, 1
      %p307 = scmp.lt.s32.totalorder %s23, 0
      %s308 = scalar_select %p307, %s23, 0
      %s309 = sadd.s32 %s308, %s306
      %s310 = smul.addr %s309, 2
      %s311 = scalar_lea.vmem %s5, %s310
      %s312 = smul.u32 16, %s23
      %s313 = ssub.s32 18, %s312
      %p314 = scmp.lt.s32.totalorder %s313, 16
      %s315 = scalar_select %p314, %s313, 16
      %s316 = smul.u32 64, %s315
      %s317 = smul.u32 %s316, 3
      %p318 = scmp.lt.s32.totalorder %s22, 1
      %s319 = scalar_select %p318, %s22, 1
      %p320 = scmp.lt.s32.totalorder %s312, 17
      %s321 = scalar_select %p320, %s312, 17
      %s322 = smul.addr %s321, 3
      %s323 = smul.addr %s319, 54
      %s324 = sadd.s32 %s322, %s323
      %s325 = smul.addr %s324, 4
      %s326 = scalar_lea.vmem %s0, %s325
      %s327 = smul.u32 16, %s23
      %s328 = ssub.s32 18, %s327
      %p329 = scmp.lt.s32.totalorder %s328, 16
      %s330 = scalar_select %p329, %s328, 16
      %s331 = smul.u32 64, %s330
      %s332 = smul.u32 %s331, 3
      %s333 = sadd.s32 %s23, 1
      %s334 = smul.u32 %s333, 8
      %s335 = smul.u32 2, %s334
      %p336 = scmp.lt.s32.totalorder %s22, 1
      %s337 = scalar_select %p336, %s22, 1
      %p338 = scmp.lt.s32.totalorder %s335, 17
      %s339 = scalar_select %p338, %s335, 17
      %s340 = smul.addr %s339, 3
      %s341 = smul.addr %s337, 54
      %s342 = sadd.s32 %s340, %s341
      %s343 = smul.addr %s342, 4
      %s344 = scalar_lea.vmem %s1, %s343
      %s345 = sadd.s32 %s23, 1
      %s346 = smul.u32 %s345, 8
      %s347 = smul.u32 2, %s346
      %s348 = smul.u32 32, %s23
      %p349 = scmp.lt.s32.totalorder %s22, 1
      %s350 = scalar_select %p349, %s22, 1
      %p351 = scmp.lt.s32.totalorder %s348, 31
      %s352 = scalar_select %p351, %s348, 31
      %s353 = smul.addr %s350, 32
      %s354 = sadd.s32 %s352, %s353
      %s355 = smul.addr %s354, 4
      %s356 = scalar_lea.vmem %s4, %s355
      %s357 = smul.u32 32, %s23
      %p358 = scmp.lt.s32.totalorder %s22, 1
      %s359 = scalar_select %p358, %s22, 1
      %p360 = scmp.lt.s32.totalorder %s23, 0
      %s361 = scalar_select %p360, %s23, 0
      %s362 = sadd.s32 %s361, %s359
      %s363 = smul.addr %s362, 2
      %s364 = scalar_lea.vmem %s5, %s363
      %v366 = vld [vmem:[%s326] sm:$0xf]
      %v367 = vld [vmem:[%s326 + $0x4] sm:$0xf]
      %v368 = vld [vmem:[%s326 + $0x8] sm:$0x1]
      %v369 = vld [vmem:[%s326 + $0xc] sm:$0xf]
      %v370 = vld [vmem:[%s326 + $0x10] sm:$0xf]
      %v371 = vld [vmem:[%s326 + $0x14] sm:$0x1]
      %v372 = vld [vmem:[%s326 + $0x18] sm:$0xf]
      %v373 = vld [vmem:[%s326 + $0x1c] sm:$0xf]
      %v374 = vld [vmem:[%s326 + $0x20] sm:$0x1]
      %v375 = vld [vmem:[%s326 + $0x24] sm:$0xf]
      %v376 = vld [vmem:[%s326 + $0x28] sm:$0xf]
      %v377 = vld [vmem:[%s326 + $0x2c] sm:$0x1]
      %v378 = vld [vmem:[%s326 + $0x30] sm:$0xf]
      %v379 = vld [vmem:[%s326 + $0x34] sm:$0xf]
      %v380 = vld [vmem:[%s326 + $0x38] sm:$0x1]
      %v381 = vld [vmem:[%s326 + $0x3c] sm:$0xf]
      %v382 = vld [vmem:[%s326 + $0x40] sm:$0xf]
      %v383 = vld [vmem:[%s326 + $0x44] sm:$0x1]
      %v384 = vld [vmem:[%s326 + $0x48] sm:$0xf]
      %v385 = vld [vmem:[%s326 + $0x4c] sm:$0xf]
      %v386 = vld [vmem:[%s326 + $0x50] sm:$0x1]
      %v387 = vld [vmem:[%s326 + $0x54] sm:$0xf]
      %v388 = vld [vmem:[%s326 + $0x58] sm:$0xf]
      %v389 = vld [vmem:[%s326 + $0x5c] sm:$0x1]
      %v390 = vld [vmem:[%s326 + $0x60] sm:$0xf]
      %v391 = vld [vmem:[%s326 + $0x64] sm:$0xf]
      %v392 = vld [vmem:[%s326 + $0x68] sm:$0x1]
      %v393 = vld [vmem:[%s326 + $0x6c] sm:$0xf]
      %v394 = vld [vmem:[%s326 + $0x70] sm:$0xf]
      %v395 = vld [vmem:[%s326 + $0x74] sm:$0x1]
      %v396 = vld [vmem:[%s326 + $0x78] sm:$0xf]
      %v397 = vld [vmem:[%s326 + $0x7c] sm:$0xf]
      %v398 = vld [vmem:[%s326 + $0x80] sm:$0x1]
      %v399 = vld [vmem:[%s326 + $0x84] sm:$0xf]
      %v400 = vld [vmem:[%s326 + $0x88] sm:$0xf]
      %v401 = vld [vmem:[%s326 + $0x8c] sm:$0x1]
      %v402 = vld [vmem:[%s326 + $0x90] sm:$0xf]
      %v403 = vld [vmem:[%s326 + $0x94] sm:$0xf]
      %v404 = vld [vmem:[%s326 + $0x98] sm:$0x1]
      %v405 = vld [vmem:[%s326 + $0x9c] sm:$0xf]
      %v406 = vld [vmem:[%s326 + $0xa0] sm:$0xf]
      %v407 = vld [vmem:[%s326 + $0xa4] sm:$0x1]
      %v408 = vld [vmem:[%s326 + $0xa8] sm:$0xf]
      %v409 = vld [vmem:[%s326 + $0xac] sm:$0xf]
      %v410 = vld [vmem:[%s326 + $0xb0] sm:$0x1]
      %v411 = vld [vmem:[%s326 + $0xb4] sm:$0xf]
      %v412 = vld [vmem:[%s326 + $0xb8] sm:$0xf]
      %v413 = vld [vmem:[%s326 + $0xbc] sm:$0x1]
      %vm414 = vcmask 27648
      %415 = vst.msk [vmem:[#allocation2] sm:$0xf] %vm414, %v366
      %416 = vst.msk [vmem:[#allocation2 + $0x4] sm:$0xf] %vm414, %v367
      %vm417 = vcmask 24576
      %418 = vst.msk [vmem:[#allocation2 + $0x8] sm:$0x1] %vm417, %v368
      %419 = vst.msk [vmem:[#allocation2 + $0xc] sm:$0xf] %vm414, %v369
      %420 = vst.msk [vmem:[#allocation2 + $0x10] sm:$0xf] %vm414, %v370
      %421 = vst.msk [vmem:[#allocation2 + $0x14] sm:$0x1] %vm417, %v371
      %422 = vst.msk [vmem:[#allocation2 + $0x18] sm:$0xf] %vm414, %v372
      %423 = vst.msk [vmem:[#allocation2 + $0x1c] sm:$0xf] %vm414, %v373
      %424 = vst.msk [vmem:[#allocation2 + $0x20] sm:$0x1] %vm417, %v374
      %425 = vst.msk [vmem:[#allocation2 + $0x24] sm:$0xf] %vm414, %v375
      %426 = vst.msk [vmem:[#allocation2 + $0x28] sm:$0xf] %vm414, %v376
      %427 = vst.msk [vmem:[#allocation2 + $0x2c] sm:$0x1] %vm417, %v377
      %428 = vst.msk [vmem:[#allocation2 + $0x30] sm:$0xf] %vm414, %v378
      %429 = vst.msk [vmem:[#allocation2 + $0x34] sm:$0xf] %vm414, %v379
      %430 = vst.msk [vmem:[#allocation2 + $0x38] sm:$0x1] %vm417, %v380
      %431 = vst.msk [vmem:[#allocation2 + $0x3c] sm:$0xf] %vm414, %v381
      %432 = vst.msk [vmem:[#allocation2 + $0x40] sm:$0xf] %vm414, %v382
      %433 = vst.msk [vmem:[#allocation2 + $0x44] sm:$0x1] %vm417, %v383
      %434 = vst.msk [vmem:[#allocation2 + $0x48] sm:$0xf] %vm414, %v384
      %435 = vst.msk [vmem:[#allocation2 + $0x4c] sm:$0xf] %vm414, %v385
      %436 = vst.msk [vmem:[#allocation2 + $0x50] sm:$0x1] %vm417, %v386
      %437 = vst.msk [vmem:[#allocation2 + $0x54] sm:$0xf] %vm414, %v387
      %438 = vst.msk [vmem:[#allocation2 + $0x58] sm:$0xf] %vm414, %v388
      %439 = vst.msk [vmem:[#allocation2 + $0x5c] sm:$0x1] %vm417, %v389
      %440 = vst.msk [vmem:[#allocation2 + $0x60] sm:$0xf] %vm414, %v390
      %441 = vst.msk [vmem:[#allocation2 + $0x64] sm:$0xf] %vm414, %v391
      %442 = vst.msk [vmem:[#allocation2 + $0x68] sm:$0x1] %vm417, %v392
      %443 = vst.msk [vmem:[#allocation2 + $0x6c] sm:$0xf] %vm414, %v393
      %444 = vst.msk [vmem:[#allocation2 + $0x70] sm:$0xf] %vm414, %v394
      %445 = vst.msk [vmem:[#allocation2 + $0x74] sm:$0x1] %vm417, %v395
      %446 = vst.msk [vmem:[#allocation2 + $0x78] sm:$0xf] %vm414, %v396
      %447 = vst.msk [vmem:[#allocation2 + $0x7c] sm:$0xf] %vm414, %v397
      %448 = vst.msk [vmem:[#allocation2 + $0x80] sm:$0x1] %vm417, %v398
      %449 = vst.msk [vmem:[#allocation2 + $0x84] sm:$0xf] %vm414, %v399
      %450 = vst.msk [vmem:[#allocation2 + $0x88] sm:$0xf] %vm414, %v400
      %451 = vst.msk [vmem:[#allocation2 + $0x8c] sm:$0x1] %vm417, %v401
      %452 = vst.msk [vmem:[#allocation2 + $0x90] sm:$0xf] %vm414, %v402
      %453 = vst.msk [vmem:[#allocation2 + $0x94] sm:$0xf] %vm414, %v403
      %454 = vst.msk [vmem:[#allocation2 + $0x98] sm:$0x1] %vm417, %v404
      %455 = vst.msk [vmem:[#allocation2 + $0x9c] sm:$0xf] %vm414, %v405
      %456 = vst.msk [vmem:[#allocation2 + $0xa0] sm:$0xf] %vm414, %v406
      %457 = vst.msk [vmem:[#allocation2 + $0xa4] sm:$0x1] %vm417, %v407
      %458 = vst.msk [vmem:[#allocation2 + $0xa8] sm:$0xf] %vm414, %v408
      %459 = vst.msk [vmem:[#allocation2 + $0xac] sm:$0xf] %vm414, %v409
      %460 = vst.msk [vmem:[#allocation2 + $0xb0] sm:$0x1] %vm417, %v410
      %461 = vst.msk [vmem:[#allocation2 + $0xb4] sm:$0xf] %vm414, %v411
      %462 = vst.msk [vmem:[#allocation2 + $0xb8] sm:$0xf] %vm414, %v412
      %463 = vst.msk [vmem:[#allocation2 + $0xbc] sm:$0x1] %vm417, %v413
      %v464 = vld [vmem:[%s344] sm:$0xf]
      %v465 = vld [vmem:[%s344 + $0x4] sm:$0xf]
      %v466 = vld [vmem:[%s344 + $0x8] sm:$0x1]
      %v467 = vld [vmem:[%s344 + $0xc] sm:$0xf]
      %v468 = vld [vmem:[%s344 + $0x10] sm:$0xf]
      %v469 = vld [vmem:[%s344 + $0x14] sm:$0x1]
      %s470 = scalar_lea.vmem [#allocation2], 192
      %471 = vst.msk [vmem:[%s470] sm:$0xf] %vm414, %v464
      %472 = vst.msk [vmem:[%s470 + $0x4] sm:$0xf] %vm414, %v465
      %473 = vst.msk [vmem:[%s470 + $0x8] sm:$0x1] %vm417, %v466
      %474 = vst.msk [vmem:[%s470 + $0xc] sm:$0xf] %vm414, %v467
      %475 = vst.msk [vmem:[%s470 + $0x10] sm:$0xf] %vm414, %v468
      %476 = vst.msk [vmem:[%s470 + $0x14] sm:$0x1] %vm417, %v469
      %v477 = vld [vmem:[#allocation2] sm:$0xf]
      %v478 = vld [vmem:[#allocation2 + $0x4] sm:$0xf]
      %v479 = vld [vmem:[#allocation2 + $0xc] sm:$0xf]
      %v480 = vld [vmem:[#allocation2 + $0x10] sm:$0xf]
      %v481 = vld [vmem:[#allocation2 + $0x18] sm:$0xf]
      %v482 = vld [vmem:[#allocation2 + $0x1c] sm:$0xf]
      %v483 = vld [vmem:[#allocation2 + $0x24] sm:$0xf]
      %v484 = vld [vmem:[#allocation2 + $0x28] sm:$0xf]
      %v485 = vld [vmem:[#allocation2 + $0x30] sm:$0xf]
      %v486 = vld [vmem:[#allocation2 + $0x34] sm:$0xf]
      %v487 = vld [vmem:[#allocation2 + $0x3c] sm:$0xf]
      %v488 = vld [vmem:[#allocation2 + $0x40] sm:$0xf]
      %v489 = vld [vmem:[#allocation2 + $0x48] sm:$0xf]
      %v490 = vld [vmem:[#allocation2 + $0x4c] sm:$0xf]
      %v491 = vld [vmem:[#allocation2 + $0x54] sm:$0xf]
      %v492 = vld [vmem:[#allocation2 + $0x58] sm:$0xf]
      %v493 = vld [vmem:[#allocation2 + $0x60] sm:$0xf]
      %v494 = vld [vmem:[#allocation2 + $0x64] sm:$0xf]
      %v495 = vld [vmem:[#allocation2 + $0x6c] sm:$0xf]
      %v496 = vld [vmem:[#allocation2 + $0x70] sm:$0xf]
      %v497 = vld [vmem:[#allocation2 + $0x78] sm:$0xf]
      %v498 = vld [vmem:[#allocation2 + $0x7c] sm:$0xf]
      %v499 = vld [vmem:[#allocation2 + $0x84] sm:$0xf]
      %v500 = vld [vmem:[#allocation2 + $0x88] sm:$0xf]
      %v501 = vld [vmem:[#allocation2 + $0x90] sm:$0xf]
      %v502 = vld [vmem:[#allocation2 + $0x94] sm:$0xf]
      %v503 = vld [vmem:[#allocation2 + $0x9c] sm:$0xf]
      %v504 = vld [vmem:[#allocation2 + $0xa0] sm:$0xf]
      %v505 = vld [vmem:[#allocation2 + $0xa8] sm:$0xf]
      %v506 = vld [vmem:[#allocation2 + $0xac] sm:$0xf]
      %v507 = vld [vmem:[#allocation2 + $0xb4] sm:$0xf]
      %v508 = vld [vmem:[#allocation2 + $0xb8] sm:$0xf]
      %v509 = vld [vmem:[#allocation2 + $0x8] sm:$0x1]
      %v510 = vld [vmem:[#allocation2 + $0x14] sm:$0x1]
      %v511 = vld [vmem:[#allocation2 + $0x20] sm:$0x1]
      %v512 = vld [vmem:[#allocation2 + $0x2c] sm:$0x1]
      %v513 = vld [vmem:[#allocation2 + $0x38] sm:$0x1]
      %v514 = vld [vmem:[#allocation2 + $0x44] sm:$0x1]
      %v515 = vld [vmem:[#allocation2 + $0x50] sm:$0x1]
      %v516 = vld [vmem:[#allocation2 + $0x5c] sm:$0x1]
      %v517 = vld [vmem:[#allocation2 + $0x68] sm:$0x1]
      %v518 = vld [vmem:[#allocation2 + $0x74] sm:$0x1]
      %v519 = vld [vmem:[#allocation2 + $0x80] sm:$0x1]
      %v520 = vld [vmem:[#allocation2 + $0x8c] sm:$0x1]
      %v521 = vld [vmem:[#allocation2 + $0x98] sm:$0x1]
      %v522 = vld [vmem:[#allocation2 + $0xa4] sm:$0x1]
      %v523 = vld [vmem:[#allocation2 + $0xb0] sm:$0x1]
      %v524 = vld [vmem:[#allocation2 + $0xbc] sm:$0x1]
      %v525 = vld [vmem:[#allocation2] sm:$0xe]
      %v526 = vld [vmem:[#allocation2 + $0xc] sm:$0xe]
      %v527 = vld [vmem:[#allocation2 + $0x18] sm:$0xe]
      %v528 = vld [vmem:[#allocation2 + $0x24] sm:$0xe]
      %v529 = vld [vmem:[#allocation2 + $0x30] sm:$0xe]
      %v530 = vld [vmem:[#allocation2 + $0x3c] sm:$0xe]
      %v531 = vld [vmem:[#allocation2 + $0x48] sm:$0xe]
      %v532 = vld [vmem:[#allocation2 + $0x54] sm:$0xe]
      %v533 = vld [vmem:[#allocation2 + $0x60] sm:$0xe]
      %v534 = vld [vmem:[#allocation2 + $0x6c] sm:$0xe]
      %v535 = vld [vmem:[#allocation2 + $0x78] sm:$0xe]
      %v536 = vld [vmem:[#allocation2 + $0x84] sm:$0xe]
      %v537 = vld [vmem:[#allocation2 + $0x90] sm:$0xe]
      %v538 = vld [vmem:[#allocation2 + $0x9c] sm:$0xe]
      %v539 = vld [vmem:[#allocation2 + $0xa8] sm:$0xe]
      %v540 = vld [vmem:[#allocation2 + $0xb4] sm:$0xe]
      %s541 = scalar_lea.vmem [#allocation2], 12
      %v542 = vld [vmem:[%s541] sm:$0xf]
      %v543 = vld [vmem:[%s541 + $0x4] sm:$0xf]
      %v544 = vld [vmem:[%s541 + $0xc] sm:$0xf]
      %v545 = vld [vmem:[%s541 + $0x10] sm:$0xf]
      %v546 = vld [vmem:[%s541 + $0x18] sm:$0xf]
      %v547 = vld [vmem:[%s541 + $0x1c] sm:$0xf]
      %v548 = vld [vmem:[%s541 + $0x24] sm:$0xf]
      %v549 = vld [vmem:[%s541 + $0x28] sm:$0xf]
      %v550 = vld [vmem:[%s541 + $0x30] sm:$0xf]
      %v551 = vld [vmem:[%s541 + $0x34] sm:$0xf]
      %v552 = vld [vmem:[%s541 + $0x3c] sm:$0xf]
      %v553 = vld [vmem:[%s541 + $0x40] sm:$0xf]
      %v554 = vld [vmem:[%s541 + $0x48] sm:$0xf]
      %v555 = vld [vmem:[%s541 + $0x4c] sm:$0xf]
      %v556 = vld [vmem:[%s541 + $0x54] sm:$0xf]
      %v557 = vld [vmem:[%s541 + $0x58] sm:$0xf]
      %v558 = vld [vmem:[%s541 + $0x60] sm:$0xf]
      %v559 = vld [vmem:[%s541 + $0x64] sm:$0xf]
      %v560 = vld [vmem:[%s541 + $0x6c] sm:$0xf]
      %v561 = vld [vmem:[%s541 + $0x70] sm:$0xf]
      %v562 = vld [vmem:[%s541 + $0x78] sm:$0xf]
      %v563 = vld [vmem:[%s541 + $0x7c] sm:$0xf]
      %v564 = vld [vmem:[%s541 + $0x84] sm:$0xf]
      %v565 = vld [vmem:[%s541 + $0x88] sm:$0xf]
      %v566 = vld [vmem:[%s541 + $0x90] sm:$0xf]
      %v567 = vld [vmem:[%s541 + $0x94] sm:$0xf]
      %v568 = vld [vmem:[%s541 + $0x9c] sm:$0xf]
      %v569 = vld [vmem:[%s541 + $0xa0] sm:$0xf]
      %v570 = vld [vmem:[%s541 + $0xa8] sm:$0xf]
      %v571 = vld [vmem:[%s541 + $0xac] sm:$0xf]
      %v572 = vld [vmem:[%s541 + $0xb4] sm:$0xf]
      %v573 = vld [vmem:[%s541 + $0xb8] sm:$0xf]
      %v574 = vld [vmem:[%s541 + $0x8] sm:$0x1]
      %v575 = vld [vmem:[%s541 + $0x14] sm:$0x1]
      %v576 = vld [vmem:[%s541 + $0x20] sm:$0x1]
      %v577 = vld [vmem:[%s541 + $0x2c] sm:$0x1]
      %v578 = vld [vmem:[%s541 + $0x38] sm:$0x1]
      %v579 = vld [vmem:[%s541 + $0x44] sm:$0x1]
      %v580 = vld [vmem:[%s541 + $0x50] sm:$0x1]
      %v581 = vld [vmem:[%s541 + $0x5c] sm:$0x1]
      %v582 = vld [vmem:[%s541 + $0x68] sm:$0x1]
      %v583 = vld [vmem:[%s541 + $0x74] sm:$0x1]
      %v584 = vld [vmem:[%s541 + $0x80] sm:$0x1]
      %v585 = vld [vmem:[%s541 + $0x8c] sm:$0x1]
      %v586 = vld [vmem:[%s541 + $0x98] sm:$0x1]
      %v587 = vld [vmem:[%s541 + $0xa4] sm:$0x1]
      %v588 = vld [vmem:[%s541 + $0xb0] sm:$0x1]
      %v589 = vld [vmem:[%s541 + $0xbc] sm:$0x1]
      %v590 = vld [vmem:[%s541] sm:$0xe]
      %v591 = vld [vmem:[%s541 + $0xc] sm:$0xe]
      %v592 = vld [vmem:[%s541 + $0x18] sm:$0xe]
      %v593 = vld [vmem:[%s541 + $0x24] sm:$0xe]
      %v594 = vld [vmem:[%s541 + $0x30] sm:$0xe]
      %v595 = vld [vmem:[%s541 + $0x3c] sm:$0xe]
      %v596 = vld [vmem:[%s541 + $0x48] sm:$0xe]
      %v597 = vld [vmem:[%s541 + $0x54] sm:$0xe]
      %v598 = vld [vmem:[%s541 + $0x60] sm:$0xe]
      %v599 = vld [vmem:[%s541 + $0x6c] sm:$0xe]
      %v600 = vld [vmem:[%s541 + $0x78] sm:$0xe]
      %v601 = vld [vmem:[%s541 + $0x84] sm:$0xe]
      %v602 = vld [vmem:[%s541 + $0x90] sm:$0xe]
      %v603 = vld [vmem:[%s541 + $0x9c] sm:$0xe]
      %v604 = vld [vmem:[%s541 + $0xa8] sm:$0xe]
      %v605 = vld [vmem:[%s541 + $0xb4] sm:$0xe]
      %s606 = scalar_lea.vmem [#allocation2], 24
      %v607 = vld [vmem:[%s606] sm:$0xf]
      %v608 = vld [vmem:[%s606 + $0x4] sm:$0xf]
      %v609 = vld [vmem:[%s606 + $0xc] sm:$0xf]
      %v610 = vld [vmem:[%s606 + $0x10] sm:$0xf]
      %v611 = vld [vmem:[%s606 + $0x18] sm:$0xf]
      %v612 = vld [vmem:[%s606 + $0x1c] sm:$0xf]
      %v613 = vld [vmem:[%s606 + $0x24] sm:$0xf]
      %v614 = vld [vmem:[%s606 + $0x28] sm:$0xf]
      %v615 = vld [vmem:[%s606 + $0x30] sm:$0xf]
      %v616 = vld [vmem:[%s606 + $0x34] sm:$0xf]
      %v617 = vld [vmem:[%s606 + $0x3c] sm:$0xf]
      %v618 = vld [vmem:[%s606 + $0x40] sm:$0xf]
      %v619 = vld [vmem:[%s606 + $0x48] sm:$0xf]
      %v620 = vld [vmem:[%s606 + $0x4c] sm:$0xf]
      %v621 = vld [vmem:[%s606 + $0x54] sm:$0xf]
      %v622 = vld [vmem:[%s606 + $0x58] sm:$0xf]
      %v623 = vld [vmem:[%s606 + $0x60] sm:$0xf]
      %v624 = vld [vmem:[%s606 + $0x64] sm:$0xf]
      %v625 = vld [vmem:[%s606 + $0x6c] sm:$0xf]
      %v626 = vld [vmem:[%s606 + $0x70] sm:$0xf]
      %v627 = vld [vmem:[%s606 + $0x78] sm:$0xf]
      %v628 = vld [vmem:[%s606 + $0x7c] sm:$0xf]
      %v629 = vld [vmem:[%s606 + $0x84] sm:$0xf]
      %v630 = vld [vmem:[%s606 + $0x88] sm:$0xf]
      %v631 = vld [vmem:[%s606 + $0x90] sm:$0xf]
      %v632 = vld [vmem:[%s606 + $0x94] sm:$0xf]
      %v633 = vld [vmem:[%s606 + $0x9c] sm:$0xf]
      %v634 = vld [vmem:[%s606 + $0xa0] sm:$0xf]
      %v635 = vld [vmem:[%s606 + $0xa8] sm:$0xf]
      %v636 = vld [vmem:[%s606 + $0xac] sm:$0xf]
      %v637 = vld [vmem:[%s606 + $0xb4] sm:$0xf]
      %v638 = vld [vmem:[%s606 + $0xb8] sm:$0xf]
      %v639 = vld [vmem:[%s606 + $0x8] sm:$0x1]
      %v640 = vld [vmem:[%s606 + $0x14] sm:$0x1]
      %v641 = vld [vmem:[%s606 + $0x20] sm:$0x1]
      %v642 = vld [vmem:[%s606 + $0x2c] sm:$0x1]
      %v643 = vld [vmem:[%s606 + $0x38] sm:$0x1]
      %v644 = vld [vmem:[%s606 + $0x44] sm:$0x1]
      %v645 = vld [vmem:[%s606 + $0x50] sm:$0x1]
      %v646 = vld [vmem:[%s606 + $0x5c] sm:$0x1]
      %v647 = vld [vmem:[%s606 + $0x68] sm:$0x1]
      %v648 = vld [vmem:[%s606 + $0x74] sm:$0x1]
      %v649 = vld [vmem:[%s606 + $0x80] sm:$0x1]
      %v650 = vld [vmem:[%s606 + $0x8c] sm:$0x1]
      %v651 = vld [vmem:[%s606 + $0x98] sm:$0x1]
      %v652 = vld [vmem:[%s606 + $0xa4] sm:$0x1]
      %v653 = vld [vmem:[%s606 + $0xb0] sm:$0x1]
      %v654 = vld [vmem:[%s606 + $0xbc] sm:$0x1]
      %v655 = vld [vmem:[%s606] sm:$0xe]
      %v656 = vld [vmem:[%s606 + $0xc] sm:$0xe]
      %v657 = vld [vmem:[%s606 + $0x18] sm:$0xe]
      %v658 = vld [vmem:[%s606 + $0x24] sm:$0xe]
      %v659 = vld [vmem:[%s606 + $0x30] sm:$0xe]
      %v660 = vld [vmem:[%s606 + $0x3c] sm:$0xe]
      %v661 = vld [vmem:[%s606 + $0x48] sm:$0xe]
      %v662 = vld [vmem:[%s606 + $0x54] sm:$0xe]
      %v663 = vld [vmem:[%s606 + $0x60] sm:$0xe]
      %v664 = vld [vmem:[%s606 + $0x6c] sm:$0xe]
      %v665 = vld [vmem:[%s606 + $0x78] sm:$0xe]
      %v666 = vld [vmem:[%s606 + $0x84] sm:$0xe]
      %v667 = vld [vmem:[%s606 + $0x90] sm:$0xe]
      %v668 = vld [vmem:[%s606 + $0x9c] sm:$0xe]
      %v669 = vld [vmem:[%s606 + $0xa8] sm:$0xe]
      %v670 = vld [vmem:[%s606 + $0xb4] sm:$0xe]
      %v703 = vunpack.c.l.b16 %v477
      %v704 = vunpack.c.l.b16 %v478
      %v705 = vunpack.c.l.b16 %v479
      %v706 = vunpack.c.l.b16 %v480
      %v707 = vunpack.c.l.b16 %v481
      %v708 = vunpack.c.l.b16 %v482
      %v709 = vunpack.c.l.b16 %v483
      %v710 = vunpack.c.l.b16 %v484
      %v711 = vunpack.c.l.b16 %v485
      %v712 = vunpack.c.l.b16 %v486
      %v713 = vunpack.c.l.b16 %v487
      %v714 = vunpack.c.l.b16 %v488
      %v715 = vunpack.c.l.b16 %v489
      %v716 = vunpack.c.l.b16 %v490
      %v717 = vunpack.c.l.b16 %v491
      %v718 = vunpack.c.l.b16 %v492
      %v719 = vunpack.c.l.b16 %v493
      %v720 = vunpack.c.l.b16 %v494
      %v721 = vunpack.c.l.b16 %v495
      %v722 = vunpack.c.l.b16 %v496
      %v723 = vunpack.c.l.b16 %v497
      %v724 = vunpack.c.l.b16 %v498
      %v725 = vunpack.c.l.b16 %v499
      %v726 = vunpack.c.l.b16 %v500
      %v727 = vunpack.c.l.b16 %v501
      %v728 = vunpack.c.l.b16 %v502
      %v729 = vunpack.c.l.b16 %v503
      %v730 = vunpack.c.l.b16 %v504
      %v731 = vunpack.c.l.b16 %v505
      %v732 = vunpack.c.l.b16 %v506
      %v733 = vunpack.c.l.b16 %v507
      %v734 = vunpack.c.l.b16 %v508
      %v735 = vpack.c.b16 %v704, %v703
      %v736 = vpack.c.b16 %v706, %v705
      %v737 = vpack.c.b16 %v708, %v707
      %v738 = vpack.c.b16 %v710, %v709
      %v739 = vpack.c.b16 %v712, %v711
      %v740 = vpack.c.b16 %v714, %v713
      %v741 = vpack.c.b16 %v716, %v715
      %v742 = vpack.c.b16 %v718, %v717
      %v743 = vpack.c.b16 %v720, %v719
      %v744 = vpack.c.b16 %v722, %v721
      %v745 = vpack.c.b16 %v724, %v723
      %v746 = vpack.c.b16 %v726, %v725
      %v747 = vpack.c.b16 %v728, %v727
      %v748 = vpack.c.b16 %v730, %v729
      %v749 = vpack.c.b16 %v732, %v731
      %v750 = vpack.c.b16 %v734, %v733
      %v767 = vunpack.c.l.b16 %v509
      %v768 = vunpack.c.l.b16 %v510
      %v769 = vunpack.c.l.b16 %v511
      %v770 = vunpack.c.l.b16 %v512
      %v771 = vunpack.c.l.b16 %v513
      %v772 = vunpack.c.l.b16 %v514
      %v773 = vunpack.c.l.b16 %v515
      %v774 = vunpack.c.l.b16 %v516
      %v775 = vunpack.c.l.b16 %v517
      %v776 = vunpack.c.l.b16 %v518
      %v777 = vunpack.c.l.b16 %v519
      %v778 = vunpack.c.l.b16 %v520
      %v779 = vunpack.c.l.b16 %v521
      %v780 = vunpack.c.l.b16 %v522
      %v781 = vunpack.c.l.b16 %v523
      %v782 = vunpack.c.l.b16 %v524
      %v783 = vpack.c.b16 %v767, %v767
      %v784 = vpack.c.b16 %v768, %v768
      %v785 = vpack.c.b16 %v769, %v769
      %v786 = vpack.c.b16 %v770, %v770
      %v787 = vpack.c.b16 %v771, %v771
      %v788 = vpack.c.b16 %v772, %v772
      %v789 = vpack.c.b16 %v773, %v773
      %v790 = vpack.c.b16 %v774, %v774
      %v791 = vpack.c.b16 %v775, %v775
      %v792 = vpack.c.b16 %v776, %v776
      %v793 = vpack.c.b16 %v777, %v777
      %v794 = vpack.c.b16 %v778, %v778
      %v795 = vpack.c.b16 %v779, %v779
      %v796 = vpack.c.b16 %v780, %v780
      %v797 = vpack.c.b16 %v781, %v781
      %v798 = vpack.c.b16 %v782, %v782
      %vm799 = vsmask.f32 7424
      %v801 = vshrl.u32 %v735, 16
      %v803 = vshll.u32 %v735, 16
      %v805 = vrot.slane %v803, 1
      %v806 = vor.u32 %v801, %v805
      %v808 = vshll.u32 %v783, 16
      %v810 = vrot.slane %v808, 1
      %v811 = vsel %vm799, %v806, %v810
      %v813 = vshrl.u32 %v736, 16
      %v815 = vshll.u32 %v736, 16
      %v817 = vrot.slane %v815, 1
      %v818 = vor.u32 %v813, %v817
      %v820 = vshll.u32 %v784, 16
      %v822 = vrot.slane %v820, 1
      %v823 = vsel %vm799, %v818, %v822
      %v825 = vshrl.u32 %v737, 16
      %v827 = vshll.u32 %v737, 16
      %v829 = vrot.slane %v827, 1
      %v830 = vor.u32 %v825, %v829
      %v832 = vshll.u32 %v785, 16
      %v834 = vrot.slane %v832, 1
      %v835 = vsel %vm799, %v830, %v834
      %v837 = vshrl.u32 %v738, 16
      %v839 = vshll.u32 %v738, 16
      %v841 = vrot.slane %v839, 1
      %v842 = vor.u32 %v837, %v841
      %v844 = vshll.u32 %v786, 16
      %v846 = vrot.slane %v844, 1
      %v847 = vsel %vm799, %v842, %v846
      %v849 = vshrl.u32 %v739, 16
      %v851 = vshll.u32 %v739, 16
      %v853 = vrot.slane %v851, 1
      %v854 = vor.u32 %v849, %v853
      %v856 = vshll.u32 %v787, 16
      %v858 = vrot.slane %v856, 1
      %v859 = vsel %vm799, %v854, %v858
      %v861 = vshrl.u32 %v740, 16
      %v863 = vshll.u32 %v740, 16
      %v865 = vrot.slane %v863, 1
      %v866 = vor.u32 %v861, %v865
      %v868 = vshll.u32 %v788, 16
      %v870 = vrot.slane %v868, 1
      %v871 = vsel %vm799, %v866, %v870
      %v873 = vshrl.u32 %v741, 16
      %v875 = vshll.u32 %v741, 16
      %v877 = vrot.slane %v875, 1
      %v878 = vor.u32 %v873, %v877
      %v880 = vshll.u32 %v789, 16
      %v882 = vrot.slane %v880, 1
      %v883 = vsel %vm799, %v878, %v882
      %v885 = vshrl.u32 %v742, 16
      %v887 = vshll.u32 %v742, 16
      %v889 = vrot.slane %v887, 1
      %v890 = vor.u32 %v885, %v889
      %v892 = vshll.u32 %v790, 16
      %v894 = vrot.slane %v892, 1
      %v895 = vsel %vm799, %v890, %v894
      %v897 = vshrl.u32 %v743, 16
      %v899 = vshll.u32 %v743, 16
      %v901 = vrot.slane %v899, 1
      %v902 = vor.u32 %v897, %v901
      %v904 = vshll.u32 %v791, 16
      %v906 = vrot.slane %v904, 1
      %v907 = vsel %vm799, %v902, %v906
      %v909 = vshrl.u32 %v744, 16
      %v911 = vshll.u32 %v744, 16
      %v913 = vrot.slane %v911, 1
      %v914 = vor.u32 %v909, %v913
      %v916 = vshll.u32 %v792, 16
      %v918 = vrot.slane %v916, 1
      %v919 = vsel %vm799, %v914, %v918
      %v921 = vshrl.u32 %v745, 16
      %v923 = vshll.u32 %v745, 16
      %v925 = vrot.slane %v923, 1
      %v926 = vor.u32 %v921, %v925
      %v928 = vshll.u32 %v793, 16
      %v930 = vrot.slane %v928, 1
      %v931 = vsel %vm799, %v926, %v930
      %v933 = vshrl.u32 %v746, 16
      %v935 = vshll.u32 %v746, 16
      %v937 = vrot.slane %v935, 1
      %v938 = vor.u32 %v933, %v937
      %v940 = vshll.u32 %v794, 16
      %v942 = vrot.slane %v940, 1
      %v943 = vsel %vm799, %v938, %v942
      %v945 = vshrl.u32 %v747, 16
      %v947 = vshll.u32 %v747, 16
      %v949 = vrot.slane %v947, 1
      %v950 = vor.u32 %v945, %v949
      %v952 = vshll.u32 %v795, 16
      %v954 = vrot.slane %v952, 1
      %v955 = vsel %vm799, %v950, %v954
      %v957 = vshrl.u32 %v748, 16
      %v959 = vshll.u32 %v748, 16
      %v961 = vrot.slane %v959, 1
      %v962 = vor.u32 %v957, %v961
      %v964 = vshll.u32 %v796, 16
      %v966 = vrot.slane %v964, 1
      %v967 = vsel %vm799, %v962, %v966
      %v969 = vshrl.u32 %v749, 16
      %v971 = vshll.u32 %v749, 16
      %v973 = vrot.slane %v971, 1
      %v974 = vor.u32 %v969, %v973
      %v976 = vshll.u32 %v797, 16
      %v978 = vrot.slane %v976, 1
      %v979 = vsel %vm799, %v974, %v978
      %v981 = vshrl.u32 %v750, 16
      %v983 = vshll.u32 %v750, 16
      %v985 = vrot.slane %v983, 1
      %v986 = vor.u32 %v981, %v985
      %v988 = vshll.u32 %v798, 16
      %v990 = vrot.slane %v988, 1
      %v991 = vsel %vm799, %v986, %v990
      %992 = vrot.lane.b32.xlu0 %v811, 4
      %v993 = vpop.permute.xlu0 %992
      %994 = vrot.lane.b32.xlu0 %v823, 4
      %v995 = vpop.permute.xlu0 %994
      %996 = vrot.lane.b32.xlu0 %v835, 4
      %v997 = vpop.permute.xlu0 %996
      %998 = vrot.lane.b32.xlu0 %v847, 4
      %v999 = vpop.permute.xlu0 %998
      %1000 = vrot.lane.b32.xlu0 %v859, 4
      %v1001 = vpop.permute.xlu0 %1000
      %1002 = vrot.lane.b32.xlu0 %v871, 4
      %v1003 = vpop.permute.xlu0 %1002
      %1004 = vrot.lane.b32.xlu0 %v883, 4
      %v1005 = vpop.permute.xlu0 %1004
      %1006 = vrot.lane.b32.xlu0 %v895, 4
      %v1007 = vpop.permute.xlu0 %1006
      %1008 = vrot.lane.b32.xlu0 %v907, 4
      %v1009 = vpop.permute.xlu0 %1008
      %1010 = vrot.lane.b32.xlu0 %v919, 4
      %v1011 = vpop.permute.xlu0 %1010
      %1012 = vrot.lane.b32.xlu0 %v931, 4
      %v1013 = vpop.permute.xlu0 %1012
      %1014 = vrot.lane.b32.xlu0 %v943, 4
      %v1015 = vpop.permute.xlu0 %1014
      %1016 = vrot.lane.b32.xlu0 %v955, 4
      %v1017 = vpop.permute.xlu0 %1016
      %1018 = vrot.lane.b32.xlu0 %v967, 4
      %v1019 = vpop.permute.xlu0 %1018
      %1020 = vrot.lane.b32.xlu0 %v979, 4
      %v1021 = vpop.permute.xlu0 %1020
      %1022 = vrot.lane.b32.xlu0 %v991, 4
      %v1023 = vpop.permute.xlu0 %1022
      %v1040 = vunpack.c.l.b16 %v525
      %v1041 = vunpack.c.l.b16 %v526
      %v1042 = vunpack.c.l.b16 %v527
      %v1043 = vunpack.c.l.b16 %v528
      %v1044 = vunpack.c.l.b16 %v529
      %v1045 = vunpack.c.l.b16 %v530
      %v1046 = vunpack.c.l.b16 %v531
      %v1047 = vunpack.c.l.b16 %v532
      %v1048 = vunpack.c.l.b16 %v533
      %v1049 = vunpack.c.l.b16 %v534
      %v1050 = vunpack.c.l.b16 %v535
      %v1051 = vunpack.c.l.b16 %v536
      %v1052 = vunpack.c.l.b16 %v537
      %v1053 = vunpack.c.l.b16 %v538
      %v1054 = vunpack.c.l.b16 %v539
      %v1055 = vunpack.c.l.b16 %v540
      %v1056 = vpack.c.b16 %v704, %v1040
      %v1057 = vpack.c.b16 %v706, %v1041
      %v1058 = vpack.c.b16 %v708, %v1042
      %v1059 = vpack.c.b16 %v710, %v1043
      %v1060 = vpack.c.b16 %v712, %v1044
      %v1061 = vpack.c.b16 %v714, %v1045
      %v1062 = vpack.c.b16 %v716, %v1046
      %v1063 = vpack.c.b16 %v718, %v1047
      %v1064 = vpack.c.b16 %v720, %v1048
      %v1065 = vpack.c.b16 %v722, %v1049
      %v1066 = vpack.c.b16 %v724, %v1050
      %v1067 = vpack.c.b16 %v726, %v1051
      %v1068 = vpack.c.b16 %v728, %v1052
      %v1069 = vpack.c.b16 %v730, %v1053
      %v1070 = vpack.c.b16 %v732, %v1054
      %v1071 = vpack.c.b16 %v734, %v1055
      %vm1072 = vcmask 1046528
      %v1073 = vrot.slane %v1056, 1
      %v1074 = vrot.slane %v783, 1
      %v1075 = vsel %vm1072, %v1073, %v1074
      %v1076 = vrot.slane %v1057, 1
      %v1077 = vrot.slane %v784, 1
      %v1078 = vsel %vm1072, %v1076, %v1077
      %v1079 = vrot.slane %v1058, 1
      %v1080 = vrot.slane %v785, 1
      %v1081 = vsel %vm1072, %v1079, %v1080
      %v1082 = vrot.slane %v1059, 1
      %v1083 = vrot.slane %v786, 1
      %v1084 = vsel %vm1072, %v1082, %v1083
      %v1085 = vrot.slane %v1060, 1
      %v1086 = vrot.slane %v787, 1
      %v1087 = vsel %vm1072, %v1085, %v1086
      %v1088 = vrot.slane %v1061, 1
      %v1089 = vrot.slane %v788, 1
      %v1090 = vsel %vm1072, %v1088, %v1089
      %v1091 = vrot.slane %v1062, 1
      %v1092 = vrot.slane %v789, 1
      %v1093 = vsel %vm1072, %v1091, %v1092
      %v1094 = vrot.slane %v1063, 1
      %v1095 = vrot.slane %v790, 1
      %v1096 = vsel %vm1072, %v1094, %v1095
      %v1097 = vrot.slane %v1064, 1
      %v1098 = vrot.slane %v791, 1
      %v1099 = vsel %vm1072, %v1097, %v1098
      %v1100 = vrot.slane %v1065, 1
      %v1101 = vrot.slane %v792, 1
      %v1102 = vsel %vm1072, %v1100, %v1101
      %v1103 = vrot.slane %v1066, 1
      %v1104 = vrot.slane %v793, 1
      %v1105 = vsel %vm1072, %v1103, %v1104
      %v1106 = vrot.slane %v1067, 1
      %v1107 = vrot.slane %v794, 1
      %v1108 = vsel %vm1072, %v1106, %v1107
      %v1109 = vrot.slane %v1068, 1
      %v1110 = vrot.slane %v795, 1
      %v1111 = vsel %vm1072, %v1109, %v1110
      %v1112 = vrot.slane %v1069, 1
      %v1113 = vrot.slane %v796, 1
      %v1114 = vsel %vm1072, %v1112, %v1113
      %v1115 = vrot.slane %v1070, 1
      %v1116 = vrot.slane %v797, 1
      %v1117 = vsel %vm1072, %v1115, %v1116
      %v1118 = vrot.slane %v1071, 1
      %v1119 = vrot.slane %v798, 1
      %v1120 = vsel %vm1072, %v1118, %v1119
      %1121 = vrot.lane.b32.xlu0 %v1075, 8
      %v1122 = vpop.permute.xlu0 %1121
      %1123 = vrot.lane.b32.xlu0 %v1078, 8
      %v1124 = vpop.permute.xlu0 %1123
      %1125 = vrot.lane.b32.xlu0 %v1081, 8
      %v1126 = vpop.permute.xlu0 %1125
      %1127 = vrot.lane.b32.xlu0 %v1084, 8
      %v1128 = vpop.permute.xlu0 %1127
      %1129 = vrot.lane.b32.xlu0 %v1087, 8
      %v1130 = vpop.permute.xlu0 %1129
      %1131 = vrot.lane.b32.xlu0 %v1090, 8
      %v1132 = vpop.permute.xlu0 %1131
      %1133 = vrot.lane.b32.xlu0 %v1093, 8
      %v1134 = vpop.permute.xlu0 %1133
      %1135 = vrot.lane.b32.xlu0 %v1096, 8
      %v1136 = vpop.permute.xlu0 %1135
      %1137 = vrot.lane.b32.xlu0 %v1099, 8
      %v1138 = vpop.permute.xlu0 %1137
      %1139 = vrot.lane.b32.xlu0 %v1102, 8
      %v1140 = vpop.permute.xlu0 %1139
      %1141 = vrot.lane.b32.xlu0 %v1105, 8
      %v1142 = vpop.permute.xlu0 %1141
      %1143 = vrot.lane.b32.xlu0 %v1108, 8
      %v1144 = vpop.permute.xlu0 %1143
      %1145 = vrot.lane.b32.xlu0 %v1111, 8
      %v1146 = vpop.permute.xlu0 %1145
      %1147 = vrot.lane.b32.xlu0 %v1114, 8
      %v1148 = vpop.permute.xlu0 %1147
      %1149 = vrot.lane.b32.xlu0 %v1117, 8
      %v1150 = vpop.permute.xlu0 %1149
      %1151 = vrot.lane.b32.xlu0 %v1120, 8
      %v1152 = vpop.permute.xlu0 %1151
      %v1185 = vunpack.c.l.b16 %v542
      %v1186 = vunpack.c.l.b16 %v543
      %v1187 = vunpack.c.l.b16 %v544
      %v1188 = vunpack.c.l.b16 %v545
      %v1189 = vunpack.c.l.b16 %v546
      %v1190 = vunpack.c.l.b16 %v547
      %v1191 = vunpack.c.l.b16 %v548
      %v1192 = vunpack.c.l.b16 %v549
      %v1193 = vunpack.c.l.b16 %v550
      %v1194 = vunpack.c.l.b16 %v551
      %v1195 = vunpack.c.l.b16 %v552
      %v1196 = vunpack.c.l.b16 %v553
      %v1197 = vunpack.c.l.b16 %v554
      %v1198 = vunpack.c.l.b16 %v555
      %v1199 = vunpack.c.l.b16 %v556
      %v1200 = vunpack.c.l.b16 %v557
      %v1201 = vunpack.c.l.b16 %v558
      %v1202 = vunpack.c.l.b16 %v559
      %v1203 = vunpack.c.l.b16 %v560
      %v1204 = vunpack.c.l.b16 %v561
      %v1205 = vunpack.c.l.b16 %v562
      %v1206 = vunpack.c.l.b16 %v563
      %v1207 = vunpack.c.l.b16 %v564
      %v1208 = vunpack.c.l.b16 %v565
      %v1209 = vunpack.c.l.b16 %v566
      %v1210 = vunpack.c.l.b16 %v567
      %v1211 = vunpack.c.l.b16 %v568
      %v1212 = vunpack.c.l.b16 %v569
      %v1213 = vunpack.c.l.b16 %v570
      %v1214 = vunpack.c.l.b16 %v571
      %v1215 = vunpack.c.l.b16 %v572
      %v1216 = vunpack.c.l.b16 %v573
      %v1217 = vpack.c.b16 %v1186, %v1185
      %v1218 = vpack.c.b16 %v1188, %v1187
      %v1219 = vpack.c.b16 %v1190, %v1189
      %v1220 = vpack.c.b16 %v1192, %v1191
      %v1221 = vpack.c.b16 %v1194, %v1193
      %v1222 = vpack.c.b16 %v1196, %v1195
      %v1223 = vpack.c.b16 %v1198, %v1197
      %v1224 = vpack.c.b16 %v1200, %v1199
      %v1225 = vpack.c.b16 %v1202, %v1201
      %v1226 = vpack.c.b16 %v1204, %v1203
      %v1227 = vpack.c.b16 %v1206, %v1205
      %v1228 = vpack.c.b16 %v1208, %v1207
      %v1229 = vpack.c.b16 %v1210, %v1209
      %v1230 = vpack.c.b16 %v1212, %v1211
      %v1231 = vpack.c.b16 %v1214, %v1213
      %v1232 = vpack.c.b16 %v1216, %v1215
      %1233 = vrot.lane.b32.xlu0 %v1217, 12
      %v1234 = vpop.permute.xlu0 %1233
      %1235 = vrot.lane.b32.xlu0 %v1218, 12
      %v1236 = vpop.permute.xlu0 %1235
      %1237 = vrot.lane.b32.xlu0 %v1219, 12
      %v1238 = vpop.permute.xlu0 %1237
      %1239 = vrot.lane.b32.xlu0 %v1220, 12
      %v1240 = vpop.permute.xlu0 %1239
      %1241 = vrot.lane.b32.xlu0 %v1221, 12
      %v1242 = vpop.permute.xlu0 %1241
      %1243 = vrot.lane.b32.xlu0 %v1222, 12
      %v1244 = vpop.permute.xlu0 %1243
      %1245 = vrot.lane.b32.xlu0 %v1223, 12
      %v1246 = vpop.permute.xlu0 %1245
      %1247 = vrot.lane.b32.xlu0 %v1224, 12
      %v1248 = vpop.permute.xlu0 %1247
      %1249 = vrot.lane.b32.xlu0 %v1225, 12
      %v1250 = vpop.permute.xlu0 %1249
      %1251 = vrot.lane.b32.xlu0 %v1226, 12
      %v1252 = vpop.permute.xlu0 %1251
      %1253 = vrot.lane.b32.xlu0 %v1227, 12
      %v1254 = vpop.permute.xlu0 %1253
      %1255 = vrot.lane.b32.xlu0 %v1228, 12
      %v1256 = vpop.permute.xlu0 %1255
      %1257 = vrot.lane.b32.xlu0 %v1229, 12
      %v1258 = vpop.permute.xlu0 %1257
      %1259 = vrot.lane.b32.xlu0 %v1230, 12
      %v1260 = vpop.permute.xlu0 %1259
      %1261 = vrot.lane.b32.xlu0 %v1231, 12
      %v1262 = vpop.permute.xlu0 %1261
      %1263 = vrot.lane.b32.xlu0 %v1232, 12
      %v1264 = vpop.permute.xlu0 %1263
      %v1281 = vunpack.c.l.b16 %v574
      %v1282 = vunpack.c.l.b16 %v575
      %v1283 = vunpack.c.l.b16 %v576
      %v1284 = vunpack.c.l.b16 %v577
      %v1285 = vunpack.c.l.b16 %v578
      %v1286 = vunpack.c.l.b16 %v579
      %v1287 = vunpack.c.l.b16 %v580
      %v1288 = vunpack.c.l.b16 %v581
      %v1289 = vunpack.c.l.b16 %v582
      %v1290 = vunpack.c.l.b16 %v583
      %v1291 = vunpack.c.l.b16 %v584
      %v1292 = vunpack.c.l.b16 %v585
      %v1293 = vunpack.c.l.b16 %v586
      %v1294 = vunpack.c.l.b16 %v587
      %v1295 = vunpack.c.l.b16 %v588
      %v1296 = vunpack.c.l.b16 %v589
      %v1297 = vpack.c.b16 %v1281, %v1281
      %v1298 = vpack.c.b16 %v1282, %v1282
      %v1299 = vpack.c.b16 %v1283, %v1283
      %v1300 = vpack.c.b16 %v1284, %v1284
      %v1301 = vpack.c.b16 %v1285, %v1285
      %v1302 = vpack.c.b16 %v1286, %v1286
      %v1303 = vpack.c.b16 %v1287, %v1287
      %v1304 = vpack.c.b16 %v1288, %v1288
      %v1305 = vpack.c.b16 %v1289, %v1289
      %v1306 = vpack.c.b16 %v1290, %v1290
      %v1307 = vpack.c.b16 %v1291, %v1291
      %v1308 = vpack.c.b16 %v1292, %v1292
      %v1309 = vpack.c.b16 %v1293, %v1293
      %v1310 = vpack.c.b16 %v1294, %v1294
      %v1311 = vpack.c.b16 %v1295, %v1295
      %v1312 = vpack.c.b16 %v1296, %v1296
      %v1314 = vshrl.u32 %v1217, 16
      %v1316 = vshll.u32 %v1217, 16
      %v1318 = vrot.slane %v1316, 1
      %v1319 = vor.u32 %v1314, %v1318
      %v1321 = vshll.u32 %v1297, 16
      %v1323 = vrot.slane %v1321, 1
      %v1324 = vsel %vm799, %v1319, %v1323
      %v1326 = vshrl.u32 %v1218, 16
      %v1328 = vshll.u32 %v1218, 16
      %v1330 = vrot.slane %v1328, 1
      %v1331 = vor.u32 %v1326, %v1330
      %v1333 = vshll.u32 %v1298, 16
      %v1335 = vrot.slane %v1333, 1
      %v1336 = vsel %vm799, %v1331, %v1335
      %v1338 = vshrl.u32 %v1219, 16
      %v1340 = vshll.u32 %v1219, 16
      %v1342 = vrot.slane %v1340, 1
      %v1343 = vor.u32 %v1338, %v1342
      %v1345 = vshll.u32 %v1299, 16
      %v1347 = vrot.slane %v1345, 1
      %v1348 = vsel %vm799, %v1343, %v1347
      %v1350 = vshrl.u32 %v1220, 16
      %v1352 = vshll.u32 %v1220, 16
      %v1354 = vrot.slane %v1352, 1
      %v1355 = vor.u32 %v1350, %v1354
      %v1357 = vshll.u32 %v1300, 16
      %v1359 = vrot.slane %v1357, 1
      %v1360 = vsel %vm799, %v1355, %v1359
      %v1362 = vshrl.u32 %v1221, 16
      %v1364 = vshll.u32 %v1221, 16
      %v1366 = vrot.slane %v1364, 1
      %v1367 = vor.u32 %v1362, %v1366
      %v1369 = vshll.u32 %v1301, 16
      %v1371 = vrot.slane %v1369, 1
      %v1372 = vsel %vm799, %v1367, %v1371
      %v1374 = vshrl.u32 %v1222, 16
      %v1376 = vshll.u32 %v1222, 16
      %v1378 = vrot.slane %v1376, 1
      %v1379 = vor.u32 %v1374, %v1378
      %v1381 = vshll.u32 %v1302, 16
      %v1383 = vrot.slane %v1381, 1
      %v1384 = vsel %vm799, %v1379, %v1383
      %v1386 = vshrl.u32 %v1223, 16
      %v1388 = vshll.u32 %v1223, 16
      %v1390 = vrot.slane %v1388, 1
      %v1391 = vor.u32 %v1386, %v1390
      %v1393 = vshll.u32 %v1303, 16
      %v1395 = vrot.slane %v1393, 1
      %v1396 = vsel %vm799, %v1391, %v1395
      %v1398 = vshrl.u32 %v1224, 16
      %v1400 = vshll.u32 %v1224, 16
      %v1402 = vrot.slane %v1400, 1
      %v1403 = vor.u32 %v1398, %v1402
      %v1405 = vshll.u32 %v1304, 16
      %v1407 = vrot.slane %v1405, 1
      %v1408 = vsel %vm799, %v1403, %v1407
      %v1410 = vshrl.u32 %v1225, 16
      %v1412 = vshll.u32 %v1225, 16
      %v1414 = vrot.slane %v1412, 1
      %v1415 = vor.u32 %v1410, %v1414
      %v1417 = vshll.u32 %v1305, 16
      %v1419 = vrot.slane %v1417, 1
      %v1420 = vsel %vm799, %v1415, %v1419
      %v1422 = vshrl.u32 %v1226, 16
      %v1424 = vshll.u32 %v1226, 16
      %v1426 = vrot.slane %v1424, 1
      %v1427 = vor.u32 %v1422, %v1426
      %v1429 = vshll.u32 %v1306, 16
      %v1431 = vrot.slane %v1429, 1
      %v1432 = vsel %vm799, %v1427, %v1431
      %v1434 = vshrl.u32 %v1227, 16
      %v1436 = vshll.u32 %v1227, 16
      %v1438 = vrot.slane %v1436, 1
      %v1439 = vor.u32 %v1434, %v1438
      %v1441 = vshll.u32 %v1307, 16
      %v1443 = vrot.slane %v1441, 1
      %v1444 = vsel %vm799, %v1439, %v1443
      %v1446 = vshrl.u32 %v1228, 16
      %v1448 = vshll.u32 %v1228, 16
      %v1450 = vrot.slane %v1448, 1
      %v1451 = vor.u32 %v1446, %v1450
      %v1453 = vshll.u32 %v1308, 16
      %v1455 = vrot.slane %v1453, 1
      %v1456 = vsel %vm799, %v1451, %v1455
      %v1458 = vshrl.u32 %v1229, 16
      %v1460 = vshll.u32 %v1229, 16
      %v1462 = vrot.slane %v1460, 1
      %v1463 = vor.u32 %v1458, %v1462
      %v1465 = vshll.u32 %v1309, 16
      %v1467 = vrot.slane %v1465, 1
      %v1468 = vsel %vm799, %v1463, %v1467
      %v1470 = vshrl.u32 %v1230, 16
      %v1472 = vshll.u32 %v1230, 16
      %v1474 = vrot.slane %v1472, 1
      %v1475 = vor.u32 %v1470, %v1474
      %v1477 = vshll.u32 %v1310, 16
      %v1479 = vrot.slane %v1477, 1
      %v1480 = vsel %vm799, %v1475, %v1479
      %v1482 = vshrl.u32 %v1231, 16
      %v1484 = vshll.u32 %v1231, 16
      %v1486 = vrot.slane %v1484, 1
      %v1487 = vor.u32 %v1482, %v1486
      %v1489 = vshll.u32 %v1311, 16
      %v1491 = vrot.slane %v1489, 1
      %v1492 = vsel %vm799, %v1487, %v1491
      %v1494 = vshrl.u32 %v1232, 16
      %v1496 = vshll.u32 %v1232, 16
      %v1498 = vrot.slane %v1496, 1
      %v1499 = vor.u32 %v1494, %v1498
      %v1501 = vshll.u32 %v1312, 16
      %v1503 = vrot.slane %v1501, 1
      %v1504 = vsel %vm799, %v1499, %v1503
      %1505 = vrot.lane.b32.xlu0 %v1324, 16
      %v1506 = vpop.permute.xlu0 %1505
      %1507 = vrot.lane.b32.xlu0 %v1336, 16
      %v1508 = vpop.permute.xlu0 %1507
      %1509 = vrot.lane.b32.xlu0 %v1348, 16
      %v1510 = vpop.permute.xlu0 %1509
      %1511 = vrot.lane.b32.xlu0 %v1360, 16
      %v1512 = vpop.permute.xlu0 %1511
      %1513 = vrot.lane.b32.xlu0 %v1372, 16
      %v1514 = vpop.permute.xlu0 %1513
      %1515 = vrot.lane.b32.xlu0 %v1384, 16
      %v1516 = vpop.permute.xlu0 %1515
      %1517 = vrot.lane.b32.xlu0 %v1396, 16
      %v1518 = vpop.permute.xlu0 %1517
      %1519 = vrot.lane.b32.xlu0 %v1408, 16
      %v1520 = vpop.permute.xlu0 %1519
      %1521 = vrot.lane.b32.xlu0 %v1420, 16
      %v1522 = vpop.permute.xlu0 %1521
      %1523 = vrot.lane.b32.xlu0 %v1432, 16
      %v1524 = vpop.permute.xlu0 %1523
      %1525 = vrot.lane.b32.xlu0 %v1444, 16
      %v1526 = vpop.permute.xlu0 %1525
      %1527 = vrot.lane.b32.xlu0 %v1456, 16
      %v1528 = vpop.permute.xlu0 %1527
      %1529 = vrot.lane.b32.xlu0 %v1468, 16
      %v1530 = vpop.permute.xlu0 %1529
      %1531 = vrot.lane.b32.xlu0 %v1480, 16
      %v1532 = vpop.permute.xlu0 %1531
      %1533 = vrot.lane.b32.xlu0 %v1492, 16
      %v1534 = vpop.permute.xlu0 %1533
      %1535 = vrot.lane.b32.xlu0 %v1504, 16
      %v1536 = vpop.permute.xlu0 %1535
      %v1553 = vunpack.c.l.b16 %v590
      %v1554 = vunpack.c.l.b16 %v591
      %v1555 = vunpack.c.l.b16 %v592
      %v1556 = vunpack.c.l.b16 %v593
      %v1557 = vunpack.c.l.b16 %v594
      %v1558 = vunpack.c.l.b16 %v595
      %v1559 = vunpack.c.l.b16 %v596
      %v1560 = vunpack.c.l.b16 %v597
      %v1561 = vunpack.c.l.b16 %v598
      %v1562 = vunpack.c.l.b16 %v599
      %v1563 = vunpack.c.l.b16 %v600
      %v1564 = vunpack.c.l.b16 %v601
      %v1565 = vunpack.c.l.b16 %v602
      %v1566 = vunpack.c.l.b16 %v603
      %v1567 = vunpack.c.l.b16 %v604
      %v1568 = vunpack.c.l.b16 %v605
      %v1569 = vpack.c.b16 %v1186, %v1553
      %v1570 = vpack.c.b16 %v1188, %v1554
      %v1571 = vpack.c.b16 %v1190, %v1555
      %v1572 = vpack.c.b16 %v1192, %v1556
      %v1573 = vpack.c.b16 %v1194, %v1557
      %v1574 = vpack.c.b16 %v1196, %v1558
      %v1575 = vpack.c.b16 %v1198, %v1559
      %v1576 = vpack.c.b16 %v1200, %v1560
      %v1577 = vpack.c.b16 %v1202, %v1561
      %v1578 = vpack.c.b16 %v1204, %v1562
      %v1579 = vpack.c.b16 %v1206, %v1563
      %v1580 = vpack.c.b16 %v1208, %v1564
      %v1581 = vpack.c.b16 %v1210, %v1565
      %v1582 = vpack.c.b16 %v1212, %v1566
      %v1583 = vpack.c.b16 %v1214, %v1567
      %v1584 = vpack.c.b16 %v1216, %v1568
      %v1585 = vrot.slane %v1569, 1
      %v1586 = vrot.slane %v1297, 1
      %v1587 = vsel %vm1072, %v1585, %v1586
      %v1588 = vrot.slane %v1570, 1
      %v1589 = vrot.slane %v1298, 1
      %v1590 = vsel %vm1072, %v1588, %v1589
      %v1591 = vrot.slane %v1571, 1
      %v1592 = vrot.slane %v1299, 1
      %v1593 = vsel %vm1072, %v1591, %v1592
      %v1594 = vrot.slane %v1572, 1
      %v1595 = vrot.slane %v1300, 1
      %v1596 = vsel %vm1072, %v1594, %v1595
      %v1597 = vrot.slane %v1573, 1
      %v1598 = vrot.slane %v1301, 1
      %v1599 = vsel %vm1072, %v1597, %v1598
      %v1600 = vrot.slane %v1574, 1
      %v1601 = vrot.slane %v1302, 1
      %v1602 = vsel %vm1072, %v1600, %v1601
      %v1603 = vrot.slane %v1575, 1
      %v1604 = vrot.slane %v1303, 1
      %v1605 = vsel %vm1072, %v1603, %v1604
      %v1606 = vrot.slane %v1576, 1
      %v1607 = vrot.slane %v1304, 1
      %v1608 = vsel %vm1072, %v1606, %v1607
      %v1609 = vrot.slane %v1577, 1
      %v1610 = vrot.slane %v1305, 1
      %v1611 = vsel %vm1072, %v1609, %v1610
      %v1612 = vrot.slane %v1578, 1
      %v1613 = vrot.slane %v1306, 1
      %v1614 = vsel %vm1072, %v1612, %v1613
      %v1615 = vrot.slane %v1579, 1
      %v1616 = vrot.slane %v1307, 1
      %v1617 = vsel %vm1072, %v1615, %v1616
      %v1618 = vrot.slane %v1580, 1
      %v1619 = vrot.slane %v1308, 1
      %v1620 = vsel %vm1072, %v1618, %v1619
      %v1621 = vrot.slane %v1581, 1
      %v1622 = vrot.slane %v1309, 1
      %v1623 = vsel %vm1072, %v1621, %v1622
      %v1624 = vrot.slane %v1582, 1
      %v1625 = vrot.slane %v1310, 1
      %v1626 = vsel %vm1072, %v1624, %v1625
      %v1627 = vrot.slane %v1583, 1
      %v1628 = vrot.slane %v1311, 1
      %v1629 = vsel %vm1072, %v1627, %v1628
      %v1630 = vrot.slane %v1584, 1
      %v1631 = vrot.slane %v1312, 1
      %v1632 = vsel %vm1072, %v1630, %v1631
      %1633 = vrot.lane.b32.xlu0 %v1587, 20
      %v1634 = vpop.permute.xlu0 %1633
      %1635 = vrot.lane.b32.xlu0 %v1590, 20
      %v1636 = vpop.permute.xlu0 %1635
      %1637 = vrot.lane.b32.xlu0 %v1593, 20
      %v1638 = vpop.permute.xlu0 %1637
      %1639 = vrot.lane.b32.xlu0 %v1596, 20
      %v1640 = vpop.permute.xlu0 %1639
      %1641 = vrot.lane.b32.xlu0 %v1599, 20
      %v1642 = vpop.permute.xlu0 %1641
      %1643 = vrot.lane.b32.xlu0 %v1602, 20
      %v1644 = vpop.permute.xlu0 %1643
      %1645 = vrot.lane.b32.xlu0 %v1605, 20
      %v1646 = vpop.permute.xlu0 %1645
      %1647 = vrot.lane.b32.xlu0 %v1608, 20
      %v1648 = vpop.permute.xlu0 %1647
      %1649 = vrot.lane.b32.xlu0 %v1611, 20
      %v1650 = vpop.permute.xlu0 %1649
      %1651 = vrot.lane.b32.xlu0 %v1614, 20
      %v1652 = vpop.permute.xlu0 %1651
      %1653 = vrot.lane.b32.xlu0 %v1617, 20
      %v1654 = vpop.permute.xlu0 %1653
      %1655 = vrot.lane.b32.xlu0 %v1620, 20
      %v1656 = vpop.permute.xlu0 %1655
      %1657 = vrot.lane.b32.xlu0 %v1623, 20
      %v1658 = vpop.permute.xlu0 %1657
      %1659 = vrot.lane.b32.xlu0 %v1626, 20
      %v1660 = vpop.permute.xlu0 %1659
      %1661 = vrot.lane.b32.xlu0 %v1629, 20
      %v1662 = vpop.permute.xlu0 %1661
      %1663 = vrot.lane.b32.xlu0 %v1632, 20
      %v1664 = vpop.permute.xlu0 %1663
      %v1697 = vunpack.c.l.b16 %v607
      %v1698 = vunpack.c.l.b16 %v608
      %v1699 = vunpack.c.l.b16 %v609
      %v1700 = vunpack.c.l.b16 %v610
      %v1701 = vunpack.c.l.b16 %v611
      %v1702 = vunpack.c.l.b16 %v612
      %v1703 = vunpack.c.l.b16 %v613
      %v1704 = vunpack.c.l.b16 %v614
      %v1705 = vunpack.c.l.b16 %v615
      %v1706 = vunpack.c.l.b16 %v616
      %v1707 = vunpack.c.l.b16 %v617
      %v1708 = vunpack.c.l.b16 %v618
      %v1709 = vunpack.c.l.b16 %v619
      %v1710 = vunpack.c.l.b16 %v620
      %v1711 = vunpack.c.l.b16 %v621
      %v1712 = vunpack.c.l.b16 %v622
      %v1713 = vunpack.c.l.b16 %v623
      %v1714 = vunpack.c.l.b16 %v624
      %v1715 = vunpack.c.l.b16 %v625
      %v1716 = vunpack.c.l.b16 %v626
      %v1717 = vunpack.c.l.b16 %v627
      %v1718 = vunpack.c.l.b16 %v628
      %v1719 = vunpack.c.l.b16 %v629
      %v1720 = vunpack.c.l.b16 %v630
      %v1721 = vunpack.c.l.b16 %v631
      %v1722 = vunpack.c.l.b16 %v632
      %v1723 = vunpack.c.l.b16 %v633
      %v1724 = vunpack.c.l.b16 %v634
      %v1725 = vunpack.c.l.b16 %v635
      %v1726 = vunpack.c.l.b16 %v636
      %v1727 = vunpack.c.l.b16 %v637
      %v1728 = vunpack.c.l.b16 %v638
      %v1729 = vpack.c.b16 %v1698, %v1697
      %v1730 = vpack.c.b16 %v1700, %v1699
      %v1731 = vpack.c.b16 %v1702, %v1701
      %v1732 = vpack.c.b16 %v1704, %v1703
      %v1733 = vpack.c.b16 %v1706, %v1705
      %v1734 = vpack.c.b16 %v1708, %v1707
      %v1735 = vpack.c.b16 %v1710, %v1709
      %v1736 = vpack.c.b16 %v1712, %v1711
      %v1737 = vpack.c.b16 %v1714, %v1713
      %v1738 = vpack.c.b16 %v1716, %v1715
      %v1739 = vpack.c.b16 %v1718, %v1717
      %v1740 = vpack.c.b16 %v1720, %v1719
      %v1741 = vpack.c.b16 %v1722, %v1721
      %v1742 = vpack.c.b16 %v1724, %v1723
      %v1743 = vpack.c.b16 %v1726, %v1725
      %v1744 = vpack.c.b16 %v1728, %v1727
      %1745 = vrot.lane.b32.xlu0 %v1729, 24
      %v1746 = vpop.permute.xlu0 %1745
      %1747 = vrot.lane.b32.xlu0 %v1730, 24
      %v1748 = vpop.permute.xlu0 %1747
      %1749 = vrot.lane.b32.xlu0 %v1731, 24
      %v1750 = vpop.permute.xlu0 %1749
      %1751 = vrot.lane.b32.xlu0 %v1732, 24
      %v1752 = vpop.permute.xlu0 %1751
      %1753 = vrot.lane.b32.xlu0 %v1733, 24
      %v1754 = vpop.permute.xlu0 %1753
      %1755 = vrot.lane.b32.xlu0 %v1734, 24
      %v1756 = vpop.permute.xlu0 %1755
      %1757 = vrot.lane.b32.xlu0 %v1735, 24
      %v1758 = vpop.permute.xlu0 %1757
      %1759 = vrot.lane.b32.xlu0 %v1736, 24
      %v1760 = vpop.permute.xlu0 %1759
      %1761 = vrot.lane.b32.xlu0 %v1737, 24
      %v1762 = vpop.permute.xlu0 %1761
      %1763 = vrot.lane.b32.xlu0 %v1738, 24
      %v1764 = vpop.permute.xlu0 %1763
      %1765 = vrot.lane.b32.xlu0 %v1739, 24
      %v1766 = vpop.permute.xlu0 %1765
      %1767 = vrot.lane.b32.xlu0 %v1740, 24
      %v1768 = vpop.permute.xlu0 %1767
      %1769 = vrot.lane.b32.xlu0 %v1741, 24
      %v1770 = vpop.permute.xlu0 %1769
      %1771 = vrot.lane.b32.xlu0 %v1742, 24
      %v1772 = vpop.permute.xlu0 %1771
      %1773 = vrot.lane.b32.xlu0 %v1743, 24
      %v1774 = vpop.permute.xlu0 %1773
      %1775 = vrot.lane.b32.xlu0 %v1744, 24
      %v1776 = vpop.permute.xlu0 %1775
      %v1793 = vunpack.c.l.b16 %v639
      %v1794 = vunpack.c.l.b16 %v640
      %v1795 = vunpack.c.l.b16 %v641
      %v1796 = vunpack.c.l.b16 %v642
      %v1797 = vunpack.c.l.b16 %v643
      %v1798 = vunpack.c.l.b16 %v644
      %v1799 = vunpack.c.l.b16 %v645
      %v1800 = vunpack.c.l.b16 %v646
      %v1801 = vunpack.c.l.b16 %v647
      %v1802 = vunpack.c.l.b16 %v648
      %v1803 = vunpack.c.l.b16 %v649
      %v1804 = vunpack.c.l.b16 %v650
      %v1805 = vunpack.c.l.b16 %v651
      %v1806 = vunpack.c.l.b16 %v652
      %v1807 = vunpack.c.l.b16 %v653
      %v1808 = vunpack.c.l.b16 %v654
      %v1809 = vpack.c.b16 %v1793, %v1793
      %v1810 = vpack.c.b16 %v1794, %v1794
      %v1811 = vpack.c.b16 %v1795, %v1795
      %v1812 = vpack.c.b16 %v1796, %v1796
      %v1813 = vpack.c.b16 %v1797, %v1797
      %v1814 = vpack.c.b16 %v1798, %v1798
      %v1815 = vpack.c.b16 %v1799, %v1799
      %v1816 = vpack.c.b16 %v1800, %v1800
      %v1817 = vpack.c.b16 %v1801, %v1801
      %v1818 = vpack.c.b16 %v1802, %v1802
      %v1819 = vpack.c.b16 %v1803, %v1803
      %v1820 = vpack.c.b16 %v1804, %v1804
      %v1821 = vpack.c.b16 %v1805, %v1805
      %v1822 = vpack.c.b16 %v1806, %v1806
      %v1823 = vpack.c.b16 %v1807, %v1807
      %v1824 = vpack.c.b16 %v1808, %v1808
      %v1826 = vshrl.u32 %v1729, 16
      %v1828 = vshll.u32 %v1729, 16
      %v1830 = vrot.slane %v1828, 1
      %v1831 = vor.u32 %v1826, %v1830
      %v1833 = vshll.u32 %v1809, 16
      %v1835 = vrot.slane %v1833, 1
      %v1836 = vsel %vm799, %v1831, %v1835
      %v1838 = vshrl.u32 %v1730, 16
      %v1840 = vshll.u32 %v1730, 16
      %v1842 = vrot.slane %v1840, 1
      %v1843 = vor.u32 %v1838, %v1842
      %v1845 = vshll.u32 %v1810, 16
      %v1847 = vrot.slane %v1845, 1
      %v1848 = vsel %vm799, %v1843, %v1847
      %v1850 = vshrl.u32 %v1731, 16
      %v1852 = vshll.u32 %v1731, 16
      %v1854 = vrot.slane %v1852, 1
      %v1855 = vor.u32 %v1850, %v1854
      %v1857 = vshll.u32 %v1811, 16
      %v1859 = vrot.slane %v1857, 1
      %v1860 = vsel %vm799, %v1855, %v1859
      %v1862 = vshrl.u32 %v1732, 16
      %v1864 = vshll.u32 %v1732, 16
      %v1866 = vrot.slane %v1864, 1
      %v1867 = vor.u32 %v1862, %v1866
      %v1869 = vshll.u32 %v1812, 16
      %v1871 = vrot.slane %v1869, 1
      %v1872 = vsel %vm799, %v1867, %v1871
      %v1874 = vshrl.u32 %v1733, 16
      %v1876 = vshll.u32 %v1733, 16
      %v1878 = vrot.slane %v1876, 1
      %v1879 = vor.u32 %v1874, %v1878
      %v1881 = vshll.u32 %v1813, 16
      %v1883 = vrot.slane %v1881, 1
      %v1884 = vsel %vm799, %v1879, %v1883
      %v1886 = vshrl.u32 %v1734, 16
      %v1888 = vshll.u32 %v1734, 16
      %v1890 = vrot.slane %v1888, 1
      %v1891 = vor.u32 %v1886, %v1890
      %v1893 = vshll.u32 %v1814, 16
      %v1895 = vrot.slane %v1893, 1
      %v1896 = vsel %vm799, %v1891, %v1895
      %v1898 = vshrl.u32 %v1735, 16
      %v1900 = vshll.u32 %v1735, 16
      %v1902 = vrot.slane %v1900, 1
      %v1903 = vor.u32 %v1898, %v1902
      %v1905 = vshll.u32 %v1815, 16
      %v1907 = vrot.slane %v1905, 1
      %v1908 = vsel %vm799, %v1903, %v1907
      %v1910 = vshrl.u32 %v1736, 16
      %v1912 = vshll.u32 %v1736, 16
      %v1914 = vrot.slane %v1912, 1
      %v1915 = vor.u32 %v1910, %v1914
      %v1917 = vshll.u32 %v1816, 16
      %v1919 = vrot.slane %v1917, 1
      %v1920 = vsel %vm799, %v1915, %v1919
      %v1922 = vshrl.u32 %v1737, 16
      %v1924 = vshll.u32 %v1737, 16
      %v1926 = vrot.slane %v1924, 1
      %v1927 = vor.u32 %v1922, %v1926
      %v1929 = vshll.u32 %v1817, 16
      %v1931 = vrot.slane %v1929, 1
      %v1932 = vsel %vm799, %v1927, %v1931
      %v1934 = vshrl.u32 %v1738, 16
      %v1936 = vshll.u32 %v1738, 16
      %v1938 = vrot.slane %v1936, 1
      %v1939 = vor.u32 %v1934, %v1938
      %v1941 = vshll.u32 %v1818, 16
      %v1943 = vrot.slane %v1941, 1
      %v1944 = vsel %vm799, %v1939, %v1943
      %v1946 = vshrl.u32 %v1739, 16
      %v1948 = vshll.u32 %v1739, 16
      %v1950 = vrot.slane %v1948, 1
      %v1951 = vor.u32 %v1946, %v1950
      %v1953 = vshll.u32 %v1819, 16
      %v1955 = vrot.slane %v1953, 1
      %v1956 = vsel %vm799, %v1951, %v1955
      %v1958 = vshrl.u32 %v1740, 16
      %v1960 = vshll.u32 %v1740, 16
      %v1962 = vrot.slane %v1960, 1
      %v1963 = vor.u32 %v1958, %v1962
      %v1965 = vshll.u32 %v1820, 16
      %v1967 = vrot.slane %v1965, 1
      %v1968 = vsel %vm799, %v1963, %v1967
      %v1970 = vshrl.u32 %v1741, 16
      %v1972 = vshll.u32 %v1741, 16
      %v1974 = vrot.slane %v1972, 1
      %v1975 = vor.u32 %v1970, %v1974
      %v1977 = vshll.u32 %v1821, 16
      %v1979 = vrot.slane %v1977, 1
      %v1980 = vsel %vm799, %v1975, %v1979
      %v1982 = vshrl.u32 %v1742, 16
      %v1984 = vshll.u32 %v1742, 16
      %v1986 = vrot.slane %v1984, 1
      %v1987 = vor.u32 %v1982, %v1986
      %v1989 = vshll.u32 %v1822, 16
      %v1991 = vrot.slane %v1989, 1
      %v1992 = vsel %vm799, %v1987, %v1991
      %v1994 = vshrl.u32 %v1743, 16
      %v1996 = vshll.u32 %v1743, 16
      %v1998 = vrot.slane %v1996, 1
      %v1999 = vor.u32 %v1994, %v1998
      %v2001 = vshll.u32 %v1823, 16
      %v2003 = vrot.slane %v2001, 1
      %v2004 = vsel %vm799, %v1999, %v2003
      %v2006 = vshrl.u32 %v1744, 16
      %v2008 = vshll.u32 %v1744, 16
      %v2010 = vrot.slane %v2008, 1
      %v2011 = vor.u32 %v2006, %v2010
      %v2013 = vshll.u32 %v1824, 16
      %v2015 = vrot.slane %v2013, 1
      %v2016 = vsel %vm799, %v2011, %v2015
      %2017 = vrot.lane.b32.xlu0 %v1836, 28
      %v2018 = vpop.permute.xlu0 %2017
      %2019 = vrot.lane.b32.xlu0 %v1848, 28
      %v2020 = vpop.permute.xlu0 %2019
      %2021 = vrot.lane.b32.xlu0 %v1860, 28
      %v2022 = vpop.permute.xlu0 %2021
      %2023 = vrot.lane.b32.xlu0 %v1872, 28
      %v2024 = vpop.permute.xlu0 %2023
      %2025 = vrot.lane.b32.xlu0 %v1884, 28
      %v2026 = vpop.permute.xlu0 %2025
      %2027 = vrot.lane.b32.xlu0 %v1896, 28
      %v2028 = vpop.permute.xlu0 %2027
      %2029 = vrot.lane.b32.xlu0 %v1908, 28
      %v2030 = vpop.permute.xlu0 %2029
      %2031 = vrot.lane.b32.xlu0 %v1920, 28
      %v2032 = vpop.permute.xlu0 %2031
      %2033 = vrot.lane.b32.xlu0 %v1932, 28
      %v2034 = vpop.permute.xlu0 %2033
      %2035 = vrot.lane.b32.xlu0 %v1944, 28
      %v2036 = vpop.permute.xlu0 %2035
      %2037 = vrot.lane.b32.xlu0 %v1956, 28
      %v2038 = vpop.permute.xlu0 %2037
      %2039 = vrot.lane.b32.xlu0 %v1968, 28
      %v2040 = vpop.permute.xlu0 %2039
      %2041 = vrot.lane.b32.xlu0 %v1980, 28
      %v2042 = vpop.permute.xlu0 %2041
      %2043 = vrot.lane.b32.xlu0 %v1992, 28
      %v2044 = vpop.permute.xlu0 %2043
      %2045 = vrot.lane.b32.xlu0 %v2004, 28
      %v2046 = vpop.permute.xlu0 %2045
      %2047 = vrot.lane.b32.xlu0 %v2016, 28
      %v2048 = vpop.permute.xlu0 %2047
      %v2065 = vunpack.c.l.b16 %v655
      %v2066 = vunpack.c.l.b16 %v656
      %v2067 = vunpack.c.l.b16 %v657
      %v2068 = vunpack.c.l.b16 %v658
      %v2069 = vunpack.c.l.b16 %v659
      %v2070 = vunpack.c.l.b16 %v660
      %v2071 = vunpack.c.l.b16 %v661
      %v2072 = vunpack.c.l.b16 %v662
      %v2073 = vunpack.c.l.b16 %v663
      %v2074 = vunpack.c.l.b16 %v664
      %v2075 = vunpack.c.l.b16 %v665
      %v2076 = vunpack.c.l.b16 %v666
      %v2077 = vunpack.c.l.b16 %v667
      %v2078 = vunpack.c.l.b16 %v668
      %v2079 = vunpack.c.l.b16 %v669
      %v2080 = vunpack.c.l.b16 %v670
      %v2081 = vpack.c.b16 %v1698, %v2065
      %v2082 = vpack.c.b16 %v1700, %v2066
      %v2083 = vpack.c.b16 %v1702, %v2067
      %v2084 = vpack.c.b16 %v1704, %v2068
      %v2085 = vpack.c.b16 %v1706, %v2069
      %v2086 = vpack.c.b16 %v1708, %v2070
      %v2087 = vpack.c.b16 %v1710, %v2071
      %v2088 = vpack.c.b16 %v1712, %v2072
      %v2089 = vpack.c.b16 %v1714, %v2073
      %v2090 = vpack.c.b16 %v1716, %v2074
      %v2091 = vpack.c.b16 %v1718, %v2075
      %v2092 = vpack.c.b16 %v1720, %v2076
      %v2093 = vpack.c.b16 %v1722, %v2077
      %v2094 = vpack.c.b16 %v1724, %v2078
      %v2095 = vpack.c.b16 %v1726, %v2079
      %v2096 = vpack.c.b16 %v1728, %v2080
      %v2097 = vrot.slane %v2081, 1
      %v2098 = vrot.slane %v1809, 1
      %v2099 = vsel %vm1072, %v2097, %v2098
      %v2100 = vrot.slane %v2082, 1
      %v2101 = vrot.slane %v1810, 1
      %v2102 = vsel %vm1072, %v2100, %v2101
      %v2103 = vrot.slane %v2083, 1
      %v2104 = vrot.slane %v1811, 1
      %v2105 = vsel %vm1072, %v2103, %v2104
      %v2106 = vrot.slane %v2084, 1
      %v2107 = vrot.slane %v1812, 1
      %v2108 = vsel %vm1072, %v2106, %v2107
      %v2109 = vrot.slane %v2085, 1
      %v2110 = vrot.slane %v1813, 1
      %v2111 = vsel %vm1072, %v2109, %v2110
      %v2112 = vrot.slane %v2086, 1
      %v2113 = vrot.slane %v1814, 1
      %v2114 = vsel %vm1072, %v2112, %v2113
      %v2115 = vrot.slane %v2087, 1
      %v2116 = vrot.slane %v1815, 1
      %v2117 = vsel %vm1072, %v2115, %v2116
      %v2118 = vrot.slane %v2088, 1
      %v2119 = vrot.slane %v1816, 1
      %v2120 = vsel %vm1072, %v2118, %v2119
      %v2121 = vrot.slane %v2089, 1
      %v2122 = vrot.slane %v1817, 1
      %v2123 = vsel %vm1072, %v2121, %v2122
      %v2124 = vrot.slane %v2090, 1
      %v2125 = vrot.slane %v1818, 1
      %v2126 = vsel %vm1072, %v2124, %v2125
      %v2127 = vrot.slane %v2091, 1
      %v2128 = vrot.slane %v1819, 1
      %v2129 = vsel %vm1072, %v2127, %v2128
      %v2130 = vrot.slane %v2092, 1
      %v2131 = vrot.slane %v1820, 1
      %v2132 = vsel %vm1072, %v2130, %v2131
      %v2133 = vrot.slane %v2093, 1
      %v2134 = vrot.slane %v1821, 1
      %v2135 = vsel %vm1072, %v2133, %v2134
      %v2136 = vrot.slane %v2094, 1
      %v2137 = vrot.slane %v1822, 1
      %v2138 = vsel %vm1072, %v2136, %v2137
      %v2139 = vrot.slane %v2095, 1
      %v2140 = vrot.slane %v1823, 1
      %v2141 = vsel %vm1072, %v2139, %v2140
      %v2142 = vrot.slane %v2096, 1
      %v2143 = vrot.slane %v1824, 1
      %v2144 = vsel %vm1072, %v2142, %v2143
      %2145 = vrot.lane.b32.xlu0 %v2099, 32
      %v2146 = vpop.permute.xlu0 %2145
      %2147 = vrot.lane.b32.xlu0 %v2102, 32
      %v2148 = vpop.permute.xlu0 %2147
      %2149 = vrot.lane.b32.xlu0 %v2105, 32
      %v2150 = vpop.permute.xlu0 %2149
      %2151 = vrot.lane.b32.xlu0 %v2108, 32
      %v2152 = vpop.permute.xlu0 %2151
      %2153 = vrot.lane.b32.xlu0 %v2111, 32
      %v2154 = vpop.permute.xlu0 %2153
      %2155 = vrot.lane.b32.xlu0 %v2114, 32
      %v2156 = vpop.permute.xlu0 %2155
      %2157 = vrot.lane.b32.xlu0 %v2117, 32
      %v2158 = vpop.permute.xlu0 %2157
      %2159 = vrot.lane.b32.xlu0 %v2120, 32
      %v2160 = vpop.permute.xlu0 %2159
      %2161 = vrot.lane.b32.xlu0 %v2123, 32
      %v2162 = vpop.permute.xlu0 %2161
      %2163 = vrot.lane.b32.xlu0 %v2126, 32
      %v2164 = vpop.permute.xlu0 %2163
      %2165 = vrot.lane.b32.xlu0 %v2129, 32
      %v2166 = vpop.permute.xlu0 %2165
      %2167 = vrot.lane.b32.xlu0 %v2132, 32
      %v2168 = vpop.permute.xlu0 %2167
      %2169 = vrot.lane.b32.xlu0 %v2135, 32
      %v2170 = vpop.permute.xlu0 %2169
      %2171 = vrot.lane.b32.xlu0 %v2138, 32
      %v2172 = vpop.permute.xlu0 %2171
      %2173 = vrot.lane.b32.xlu0 %v2141, 32
      %v2174 = vpop.permute.xlu0 %2173
      %2175 = vrot.lane.b32.xlu0 %v2144, 32
      %v2176 = vpop.permute.xlu0 %2175
      %vm2177 = vcmask 31744
      %v2179 = vsel %vm2177, %v735, %v993
      %v2181 = vsel %vm2177, %v736, %v995
      %v2183 = vsel %vm2177, %v737, %v997
      %v2185 = vsel %vm2177, %v738, %v999
      %v2187 = vsel %vm2177, %v739, %v1001
      %v2189 = vsel %vm2177, %v740, %v1003
      %v2191 = vsel %vm2177, %v741, %v1005
      %v2193 = vsel %vm2177, %v742, %v1007
      %v2195 = vsel %vm2177, %v743, %v1009
      %v2197 = vsel %vm2177, %v744, %v1011
      %v2199 = vsel %vm2177, %v745, %v1013
      %v2201 = vsel %vm2177, %v746, %v1015
      %v2203 = vsel %vm2177, %v747, %v1017
      %v2205 = vsel %vm2177, %v748, %v1019
      %v2207 = vsel %vm2177, %v749, %v1021
      %v2209 = vsel %vm2177, %v750, %v1023
      %vm2210 = vcmask 64512
      %v2212 = vsel %vm2210, %v2179, %v1122
      %v2214 = vsel %vm2210, %v2181, %v1124
      %v2216 = vsel %vm2210, %v2183, %v1126
      %v2218 = vsel %vm2210, %v2185, %v1128
      %v2220 = vsel %vm2210, %v2187, %v1130
      %v2222 = vsel %vm2210, %v2189, %v1132
      %v2224 = vsel %vm2210, %v2191, %v1134
      %v2226 = vsel %vm2210, %v2193, %v1136
      %v2228 = vsel %vm2210, %v2195, %v1138
      %v2230 = vsel %vm2210, %v2197, %v1140
      %v2232 = vsel %vm2210, %v2199, %v1142
      %v2234 = vsel %vm2210, %v2201, %v1144
      %v2236 = vsel %vm2210, %v2203, %v1146
      %v2238 = vsel %vm2210, %v2205, %v1148
      %v2240 = vsel %vm2210, %v2207, %v1150
      %v2242 = vsel %vm2210, %v2209, %v1152
      %vm2243 = vcmask 97280
      %v2245 = vsel %vm2243, %v2212, %v1234
      %v2247 = vsel %vm2243, %v2214, %v1236
      %v2249 = vsel %vm2243, %v2216, %v1238
      %v2251 = vsel %vm2243, %v2218, %v1240
      %v2253 = vsel %vm2243, %v2220, %v1242
      %v2255 = vsel %vm2243, %v2222, %v1244
      %v2257 = vsel %vm2243, %v2224, %v1246
      %v2259 = vsel %vm2243, %v2226, %v1248
      %v2261 = vsel %vm2243, %v2228, %v1250
      %v2263 = vsel %vm2243, %v2230, %v1252
      %v2265 = vsel %vm2243, %v2232, %v1254
      %v2267 = vsel %vm2243, %v2234, %v1256
      %v2269 = vsel %vm2243, %v2236, %v1258
      %v2271 = vsel %vm2243, %v2238, %v1260
      %v2273 = vsel %vm2243, %v2240, %v1262
      %v2275 = vsel %vm2243, %v2242, %v1264
      %vm2276 = vcmask 130048
      %v2278 = vsel %vm2276, %v2245, %v1506
      %v2280 = vsel %vm2276, %v2247, %v1508
      %v2282 = vsel %vm2276, %v2249, %v1510
      %v2284 = vsel %vm2276, %v2251, %v1512
      %v2286 = vsel %vm2276, %v2253, %v1514
      %v2288 = vsel %vm2276, %v2255, %v1516
      %v2290 = vsel %vm2276, %v2257, %v1518
      %v2292 = vsel %vm2276, %v2259, %v1520
      %v2294 = vsel %vm2276, %v2261, %v1522
      %v2296 = vsel %vm2276, %v2263, %v1524
      %v2298 = vsel %vm2276, %v2265, %v1526
      %v2300 = vsel %vm2276, %v2267, %v1528
      %v2302 = vsel %vm2276, %v2269, %v1530
      %v2304 = vsel %vm2276, %v2271, %v1532
      %v2306 = vsel %vm2276, %v2273, %v1534
      %v2308 = vsel %vm2276, %v2275, %v1536
      %vm2309 = vcmask 162816
      %v2311 = vsel %vm2309, %v2278, %v1634
      %v2313 = vsel %vm2309, %v2280, %v1636
      %v2315 = vsel %vm2309, %v2282, %v1638
      %v2317 = vsel %vm2309, %v2284, %v1640
      %v2319 = vsel %vm2309, %v2286, %v1642
      %v2321 = vsel %vm2309, %v2288, %v1644
      %v2323 = vsel %vm2309, %v2290, %v1646
      %v2325 = vsel %vm2309, %v2292, %v1648
      %v2327 = vsel %vm2309, %v2294, %v1650
      %v2329 = vsel %vm2309, %v2296, %v1652
      %v2331 = vsel %vm2309, %v2298, %v1654
      %v2333 = vsel %vm2309, %v2300, %v1656
      %v2335 = vsel %vm2309, %v2302, %v1658
      %v2337 = vsel %vm2309, %v2304, %v1660
      %v2339 = vsel %vm2309, %v2306, %v1662
      %v2341 = vsel %vm2309, %v2308, %v1664
      %vm2342 = vcmask 195584
      %v2344 = vsel %vm2342, %v2311, %v1746
      %v2346 = vsel %vm2342, %v2313, %v1748
      %v2348 = vsel %vm2342, %v2315, %v1750
      %v2350 = vsel %vm2342, %v2317, %v1752
      %v2352 = vsel %vm2342, %v2319, %v1754
      %v2354 = vsel %vm2342, %v2321, %v1756
      %v2356 = vsel %vm2342, %v2323, %v1758
      %v2358 = vsel %vm2342, %v2325, %v1760
      %v2360 = vsel %vm2342, %v2327, %v1762
      %v2362 = vsel %vm2342, %v2329, %v1764
      %v2364 = vsel %vm2342, %v2331, %v1766
      %v2366 = vsel %vm2342, %v2333, %v1768
      %v2368 = vsel %vm2342, %v2335, %v1770
      %v2370 = vsel %vm2342, %v2337, %v1772
      %v2372 = vsel %vm2342, %v2339, %v1774
      %v2374 = vsel %vm2342, %v2341, %v1776
      %vm2375 = vcmask 228352
      %v2377 = vsel %vm2375, %v2344, %v2018
      %v2379 = vsel %vm2375, %v2346, %v2020
      %v2381 = vsel %vm2375, %v2348, %v2022
      %v2383 = vsel %vm2375, %v2350, %v2024
      %v2385 = vsel %vm2375, %v2352, %v2026
      %v2387 = vsel %vm2375, %v2354, %v2028
      %v2389 = vsel %vm2375, %v2356, %v2030
      %v2391 = vsel %vm2375, %v2358, %v2032
      %v2393 = vsel %vm2375, %v2360, %v2034
      %v2395 = vsel %vm2375, %v2362, %v2036
      %v2397 = vsel %vm2375, %v2364, %v2038
      %v2399 = vsel %vm2375, %v2366, %v2040
      %v2401 = vsel %vm2375, %v2368, %v2042
      %v2403 = vsel %vm2375, %v2370, %v2044
      %v2405 = vsel %vm2375, %v2372, %v2046
      %v2407 = vsel %vm2375, %v2374, %v2048
      %vm2408 = vcmask 261120
      %v2410 = vsel %vm2408, %v2377, %v2146
      %v2412 = vsel %vm2408, %v2379, %v2148
      %v2414 = vsel %vm2408, %v2381, %v2150
      %v2416 = vsel %vm2408, %v2383, %v2152
      %v2418 = vsel %vm2408, %v2385, %v2154
      %v2420 = vsel %vm2408, %v2387, %v2156
      %v2422 = vsel %vm2408, %v2389, %v2158
      %v2424 = vsel %vm2408, %v2391, %v2160
      %v2426 = vsel %vm2408, %v2393, %v2162
      %v2428 = vsel %vm2408, %v2395, %v2164
      %v2430 = vsel %vm2408, %v2397, %v2166
      %v2432 = vsel %vm2408, %v2399, %v2168
      %v2434 = vsel %vm2408, %v2401, %v2170
      %v2436 = vsel %vm2408, %v2403, %v2172
      %v2438 = vsel %vm2408, %v2405, %v2174
      %v2440 = vsel %vm2408, %v2407, %v2176
      %v2441 = vld [vmem:[%s2] sm:$0xf]
      %v2442 = vld [vmem:[%s2 + $0x4] sm:$0xf]
      %v2443 = vld [vmem:[%s2 + $0x8] sm:$0xf]
      %v2444 = vld [vmem:[%s2 + $0xc] sm:$0xf]
      %v2445 = vld [vmem:[%s2 + $0x10] sm:$0x3]
      %v2451 = vunpack.c.l.b16 %v2441
      %v2452 = vunpack.c.l.b16 %v2442
      %v2453 = vunpack.c.l.b16 %v2443
      %v2454 = vunpack.c.l.b16 %v2444
      %v2455 = vunpack.c.l.b16 %v2445
      %v2456 = vpack.c.b16 %v2452, %v2451
      %v2457 = vpack.c.b16 %v2454, %v2453
      %v2458 = vpack.c.b16 %v2455, %v2455
      %vm2461 = vcmask 293888
      %v2462 = vsel %vm2461, %v2410, 0
      %v2464 = vsel %vm2461, %v2412, 0
      %v2466 = vsel %vm2461, %v2414, 0
      %v2468 = vsel %vm2461, %v2416, 0
      %v2470 = vsel %vm2461, %v2418, 0
      %v2472 = vsel %vm2461, %v2420, 0
      %v2474 = vsel %vm2461, %v2422, 0
      %v2476 = vsel %vm2461, %v2424, 0
      %v2478 = vsel %vm2461, %v2426, 0
      %v2480 = vsel %vm2461, %v2428, 0
      %v2482 = vsel %vm2461, %v2430, 0
      %v2484 = vsel %vm2461, %v2432, 0
      %v2486 = vsel %vm2461, %v2434, 0
      %v2488 = vsel %vm2461, %v2436, 0
      %v2490 = vsel %vm2461, %v2438, 0
      %v2492 = vsel %vm2461, %v2440, 0
      %vm2494 = vcmask 1041408
      %v2496 = vsel %vm2494, %v2458, 0
      %2498 = vmatprep.subr.bf16.mxu0 0
      %2499 = vmatpush1.bf16.msra.mxu0 %v2456
      %2500 = vmatprep.subr.bf16.mxu0 0
      %2501 = vmatpush1.bf16.msra.mxu0 %v2457
      %2502 = vmatprep.subr.bf16.mxu0 0
      %2503 = vmatpush1.bf16.msra.mxu0 %v2496
      %2504 = vmatprep.subr.bf16.mxu0 0
      %2505 = vmatpush1.bf16.msra.mxu0 0
      %2506 = vmatprep.subr.bf16.mxu0 0
      %2507 = vmatpush1.bf16.msra.mxu0 0
      %2508 = vmatprep.subr.bf16.mxu0 0
      %2509 = vmatpush1.bf16.msra.mxu0 0
      %2510 = vmatprep.subr.bf16.mxu0 0
      %2511 = vmatpush1.bf16.msra.mxu0 0
      %2512 = vmatprep.subr.bf16.mxu0 0
      %2513 = vmatpush1.bf16.msra.mxu0 0
      %2514 = vmatprep.subr.bf16.mxu0 0
      %2515 = vmatpush1.bf16.msra.mxu0 0
      %2516 = vmatprep.subr.bf16.mxu0 0
      %2517 = vmatpush1.bf16.msra.mxu0 0
      %2518 = vmatprep.subr.bf16.mxu0 0
      %2519 = vmatpush1.bf16.msra.mxu0 0
      %2520 = vmatprep.subr.bf16.mxu0 0
      %2521 = vmatpush1.bf16.msra.mxu0 0
      %2522 = vmatprep.subr.bf16.mxu0 0
      %2523 = vmatpush1.bf16.msra.mxu0 0
      %2524 = vmatprep.subr.bf16.mxu0 0
      %2525 = vmatpush1.bf16.msra.mxu0 0
      %2526 = vmatprep.subr.bf16.mxu0 0
      %2527 = vmatpush1.bf16.msra.mxu0 0
      %2528 = vmatprep.subr.bf16.mxu0 0
      %2529 = vmatpush1.bf16.msra.mxu0 0
      %2530 = vmatprep.mubr.bf16.mxu0 0
      %2531 = vmatmul.mubr.bf16.gmra.mrb[0].mxu0 %v2462
      %v2532 = vpop.f32.mrb[0].mxu0
      %v2533 = vadd.f32 0.0, %v2532
      %v2534 = vpop.f32.mrb[0].mxu0
      %v2535 = vpop.f32.mrb[0].mxu0
      %v2536 = vadd.f32 0.0, %v2535
      %v2537 = vpop.f32.mrb[0].mxu0
      %2538 = vmatprep.mubr.bf16.mxu0 0
      %2539 = vmatmul.mubr.bf16.gmra.mrb[0].mxu0 %v2464
      %v2540 = vpop.f32.mrb[0].mxu0
      %v2541 = vadd.f32 0.0, %v2540
      %v2542 = vpop.f32.mrb[0].mxu0
      %v2543 = vpop.f32.mrb[0].mxu0
      %v2544 = vadd.f32 0.0, %v2543
      %v2545 = vpop.f32.mrb[0].mxu0
      %2546 = vmatprep.mubr.bf16.mxu0 0
      %2547 = vmatmul.mubr.bf16.gmra.mrb[0].mxu0 %v2466
      %v2548 = vpop.f32.mrb[0].mxu0
      %v2549 = vadd.f32 0.0, %v2548
      %v2550 = vpop.f32.mrb[0].mxu0
      %v2551 = vpop.f32.mrb[0].mxu0
      %v2552 = vadd.f32 0.0, %v2551
      %v2553 = vpop.f32.mrb[0].mxu0
      %2554 = vmatprep.mubr.bf16.mxu0 0
      %2555 = vmatmul.mubr.bf16.gmra.mrb[0].mxu0 %v2468
      %v2556 = vpop.f32.mrb[0].mxu0
      %v2557 = vadd.f32 0.0, %v2556
      %v2558 = vpop.f32.mrb[0].mxu0
      %v2559 = vpop.f32.mrb[0].mxu0
      %v2560 = vadd.f32 0.0, %v2559
      %v2561 = vpop.f32.mrb[0].mxu0
      %2562 = vmatprep.mubr.bf16.mxu0 0
      %2563 = vmatmul.mubr.bf16.gmra.mrb[0].mxu0 %v2470
      %v2564 = vpop.f32.mrb[0].mxu0
      %v2565 = vadd.f32 0.0, %v2564
      %v2566 = vpop.f32.mrb[0].mxu0
      %v2567 = vpop.f32.mrb[0].mxu0
      %v2568 = vadd.f32 0.0, %v2567
      %v2569 = vpop.f32.mrb[0].mxu0
      %2570 = vmatprep.mubr.bf16.mxu0 0
      %2571 = vmatmul.mubr.bf16.gmra.mrb[0].mxu0 %v2472
      %v2572 = vpop.f32.mrb[0].mxu0
      %v2573 = vadd.f32 0.0, %v2572
      %v2574 = vpop.f32.mrb[0].mxu0
      %v2575 = vpop.f32.mrb[0].mxu0
      %v2576 = vadd.f32 0.0, %v2575
      %v2577 = vpop.f32.mrb[0].mxu0
      %2578 = vmatprep.mubr.bf16.mxu0 0
      %2579 = vmatmul.mubr.bf16.gmra.mrb[0].mxu0 %v2474
      %v2580 = vpop.f32.mrb[0].mxu0
      %v2581 = vadd.f32 0.0, %v2580
      %v2582 = vpop.f32.mrb[0].mxu0
      %v2583 = vpop.f32.mrb[0].mxu0
      %v2584 = vadd.f32 0.0, %v2583
      %v2585 = vpop.f32.mrb[0].mxu0
      %2586 = vmatprep.mubr.bf16.mxu0 0
      %2587 = vmatmul.mubr.bf16.gmra.mrb[0].mxu0 %v2476
      %v2588 = vpop.f32.mrb[0].mxu0
      %v2589 = vadd.f32 0.0, %v2588
      %v2590 = vpop.f32.mrb[0].mxu0
      %v2591 = vpop.f32.mrb[0].mxu0
      %v2592 = vadd.f32 0.0, %v2591
      %v2593 = vpop.f32.mrb[0].mxu0
      %2594 = vmatprep.mubr.bf16.mxu0 0
      %2595 = vmatmul.mubr.bf16.gmra.mrb[0].mxu0 %v2478
      %v2596 = vpop.f32.mrb[0].mxu0
      %v2597 = vadd.f32 0.0, %v2596
      %v2598 = vpop.f32.mrb[0].mxu0
      %v2599 = vpop.f32.mrb[0].mxu0
      %v2600 = vadd.f32 0.0, %v2599
      %v2601 = vpop.f32.mrb[0].mxu0
      %2602 = vmatprep.mubr.bf16.mxu0 0
      %2603 = vmatmul.mubr.bf16.gmra.mrb[0].mxu0 %v2480
      %v2604 = vpop.f32.mrb[0].mxu0
      %v2605 = vadd.f32 0.0, %v2604
      %v2606 = vpop.f32.mrb[0].mxu0
      %v2607 = vpop.f32.mrb[0].mxu0
      %v2608 = vadd.f32 0.0, %v2607
      %v2609 = vpop.f32.mrb[0].mxu0
      %2610 = vmatprep.mubr.bf16.mxu0 0
      %2611 = vmatmul.mubr.bf16.gmra.mrb[0].mxu0 %v2482
      %v2612 = vpop.f32.mrb[0].mxu0
      %v2613 = vadd.f32 0.0, %v2612
      %v2614 = vpop.f32.mrb[0].mxu0
      %v2615 = vpop.f32.mrb[0].mxu0
      %v2616 = vadd.f32 0.0, %v2615
      %v2617 = vpop.f32.mrb[0].mxu0
      %2618 = vmatprep.mubr.bf16.mxu0 0
      %2619 = vmatmul.mubr.bf16.gmra.mrb[0].mxu0 %v2484
      %v2620 = vpop.f32.mrb[0].mxu0
      %v2621 = vadd.f32 0.0, %v2620
      %v2622 = vpop.f32.mrb[0].mxu0
      %v2623 = vpop.f32.mrb[0].mxu0
      %v2624 = vadd.f32 0.0, %v2623
      %v2625 = vpop.f32.mrb[0].mxu0
      %2626 = vmatprep.mubr.bf16.mxu0 0
      %2627 = vmatmul.mubr.bf16.gmra.mrb[0].mxu0 %v2486
      %v2628 = vpop.f32.mrb[0].mxu0
      %v2629 = vadd.f32 0.0, %v2628
      %v2630 = vpop.f32.mrb[0].mxu0
      %v2631 = vpop.f32.mrb[0].mxu0
      %v2632 = vadd.f32 0.0, %v2631
      %v2633 = vpop.f32.mrb[0].mxu0
      %2634 = vmatprep.mubr.bf16.mxu0 0
      %2635 = vmatmul.mubr.bf16.gmra.mrb[0].mxu0 %v2488
      %v2636 = vpop.f32.mrb[0].mxu0
      %v2637 = vadd.f32 0.0, %v2636
      %v2638 = vpop.f32.mrb[0].mxu0
      %v2639 = vpop.f32.mrb[0].mxu0
      %v2640 = vadd.f32 0.0, %v2639
      %v2641 = vpop.f32.mrb[0].mxu0
      %2642 = vmatprep.mubr.bf16.mxu0 0
      %2643 = vmatmul.mubr.bf16.gmra.mrb[0].mxu0 %v2490
      %v2644 = vpop.f32.mrb[0].mxu0
      %v2645 = vadd.f32 0.0, %v2644
      %v2646 = vpop.f32.mrb[0].mxu0
      %v2647 = vpop.f32.mrb[0].mxu0
      %v2648 = vadd.f32 0.0, %v2647
      %v2649 = vpop.f32.mrb[0].mxu0
      %2650 = vmatprep.mubr.bf16.mxu0 0
      %2651 = vmatmul.mubr.bf16.gmra.mrb[0].mxu0 %v2492
      %v2652 = vpop.f32.mrb[0].mxu0
      %v2653 = vadd.f32 0.0, %v2652
      %v2654 = vpop.f32.mrb[0].mxu0
      %v2655 = vpop.f32.mrb[0].mxu0
      %v2656 = vadd.f32 0.0, %v2655
      %v2657 = vpop.f32.mrb[0].mxu0
      %2658 = vdwg.mxu0
      %v2659 = vsel %vm2210, %v2533, 0.0
      %v2660 = vsel %vm2210, %v2536, 0.0
      %v2661 = vadd.f32 %v2659, %v2660
      %v2662 = vsel %vm2210, %v2541, 0.0
      %v2663 = vadd.f32 %v2661, %v2662
      %v2664 = vsel %vm2210, %v2544, 0.0
      %v2665 = vadd.f32 %v2663, %v2664
      %v2666 = vsel %vm2210, %v2549, 0.0
      %v2667 = vadd.f32 %v2665, %v2666
      %v2668 = vsel %vm2210, %v2552, 0.0
      %v2669 = vadd.f32 %v2667, %v2668
      %v2670 = vsel %vm2210, %v2557, 0.0
      %v2671 = vadd.f32 %v2669, %v2670
      %v2672 = vsel %vm2210, %v2560, 0.0
      %v2673 = vadd.f32 %v2671, %v2672
      %v2674 = vsel %vm2210, %v2565, 0.0
      %v2675 = vadd.f32 %v2673, %v2674
      %v2676 = vsel %vm2210, %v2568, 0.0
      %v2677 = vadd.f32 %v2675, %v2676
      %v2678 = vsel %vm2210, %v2573, 0.0
      %v2679 = vadd.f32 %v2677, %v2678
      %v2680 = vsel %vm2210, %v2576, 0.0
      %v2681 = vadd.f32 %v2679, %v2680
      %v2682 = vsel %vm2210, %v2581, 0.0
      %v2683 = vadd.f32 %v2681, %v2682
      %v2684 = vsel %vm2210, %v2584, 0.0
      %v2685 = vadd.f32 %v2683, %v2684
      %v2686 = vsel %vm2210, %v2589, 0.0
      %v2687 = vadd.f32 %v2685, %v2686
      %v2688 = vsel %vm2210, %v2592, 0.0
      %v2689 = vadd.f32 %v2687, %v2688
      %v2690 = vsel %vm2210, %v2597, 0.0
      %v2691 = vadd.f32 %v2689, %v2690
      %v2692 = vsel %vm2210, %v2600, 0.0
      %v2693 = vadd.f32 %v2691, %v2692
      %v2694 = vsel %vm2210, %v2605, 0.0
      %v2695 = vadd.f32 %v2693, %v2694
      %v2696 = vsel %vm2210, %v2608, 0.0
      %v2697 = vadd.f32 %v2695, %v2696
      %v2698 = vsel %vm2210, %v2613, 0.0
      %v2699 = vadd.f32 %v2697, %v2698
      %v2700 = vsel %vm2210, %v2616, 0.0
      %v2701 = vadd.f32 %v2699, %v2700
      %v2702 = vsel %vm2210, %v2621, 0.0
      %v2703 = vadd.f32 %v2701, %v2702
      %v2704 = vsel %vm2210, %v2624, 0.0
      %v2705 = vadd.f32 %v2703, %v2704
      %v2706 = vsel %vm2210, %v2629, 0.0
      %v2707 = vadd.f32 %v2705, %v2706
      %v2708 = vsel %vm2210, %v2632, 0.0
      %v2709 = vadd.f32 %v2707, %v2708
      %v2710 = vsel %vm2210, %v2637, 0.0
      %v2711 = vadd.f32 %v2709, %v2710
      %v2712 = vsel %vm2210, %v2640, 0.0
      %v2713 = vadd.f32 %v2711, %v2712
      %v2714 = vsel %vm2210, %v2645, 0.0
      %v2715 = vadd.f32 %v2713, %v2714
      %v2716 = vsel %vm2210, %v2648, 0.0
      %v2717 = vadd.f32 %v2715, %v2716
      %v2718 = vsel %vm2210, %v2653, 0.0
      %v2719 = vadd.f32 %v2717, %v2718
      %v2720 = vsel %vm2210, %v2656, 0.0
      %v2721 = vadd.f32 %v2719, %v2720
      %v2722 = vrot.slane %v2721, 4
      %v2723 = vadd.f32 %v2721, %v2722
      %v2724 = vrot.slane %v2723, 2
      %v2725 = vadd.f32 %v2723, %v2724
      %v2726 = vrot.slane %v2725, 1
      %v2727 = vadd.f32 %v2725, %v2726
      %v2728 = vmul.f32 %v2533, %v2533
      %v2729 = vmul.f32 %v2536, %v2536
      %v2730 = vmul.f32 %v2541, %v2541
      %v2731 = vmul.f32 %v2544, %v2544
      %v2732 = vmul.f32 %v2549, %v2549
      %v2733 = vmul.f32 %v2552, %v2552
      %v2734 = vmul.f32 %v2557, %v2557
      %v2735 = vmul.f32 %v2560, %v2560
      %v2736 = vmul.f32 %v2565, %v2565
      %v2737 = vmul.f32 %v2568, %v2568
      %v2738 = vmul.f32 %v2573, %v2573
      %v2739 = vmul.f32 %v2576, %v2576
      %v2740 = vmul.f32 %v2581, %v2581
      %v2741 = vmul.f32 %v2584, %v2584
      %v2742 = vmul.f32 %v2589, %v2589
      %v2743 = vmul.f32 %v2592, %v2592
      %v2744 = vmul.f32 %v2597, %v2597
      %v2745 = vmul.f32 %v2600, %v2600
      %v2746 = vmul.f32 %v2605, %v2605
      %v2747 = vmul.f32 %v2608, %v2608
      %v2748 = vmul.f32 %v2613, %v2613
      %v2749 = vmul.f32 %v2616, %v2616
      %v2750 = vmul.f32 %v2621, %v2621
      %v2751 = vmul.f32 %v2624, %v2624
      %v2752 = vmul.f32 %v2629, %v2629
      %v2753 = vmul.f32 %v2632, %v2632
      %v2754 = vmul.f32 %v2637, %v2637
      %v2755 = vmul.f32 %v2640, %v2640
      %v2756 = vmul.f32 %v2645, %v2645
      %v2757 = vmul.f32 %v2648, %v2648
      %v2758 = vmul.f32 %v2653, %v2653
      %v2759 = vmul.f32 %v2656, %v2656
      %v2760 = vsel %vm2210, %v2728, 0.0
      %v2761 = vsel %vm2210, %v2729, 0.0
      %v2762 = vadd.f32 %v2760, %v2761
      %v2763 = vsel %vm2210, %v2730, 0.0
      %v2764 = vadd.f32 %v2762, %v2763
      %v2765 = vsel %vm2210, %v2731, 0.0
      %v2766 = vadd.f32 %v2764, %v2765
      %v2767 = vsel %vm2210, %v2732, 0.0
      %v2768 = vadd.f32 %v2766, %v2767
      %v2769 = vsel %vm2210, %v2733, 0.0
      %v2770 = vadd.f32 %v2768, %v2769
      %v2771 = vsel %vm2210, %v2734, 0.0
      %v2772 = vadd.f32 %v2770, %v2771
      %v2773 = vsel %vm2210, %v2735, 0.0
      %v2774 = vadd.f32 %v2772, %v2773
      %v2775 = vsel %vm2210, %v2736, 0.0
      %v2776 = vadd.f32 %v2774, %v2775
      %v2777 = vsel %vm2210, %v2737, 0.0
      %v2778 = vadd.f32 %v2776, %v2777
      %v2779 = vsel %vm2210, %v2738, 0.0
      %v2780 = vadd.f32 %v2778, %v2779
      %v2781 = vsel %vm2210, %v2739, 0.0
      %v2782 = vadd.f32 %v2780, %v2781
      %v2783 = vsel %vm2210, %v2740, 0.0
      %v2784 = vadd.f32 %v2782, %v2783
      %v2785 = vsel %vm2210, %v2741, 0.0
      %v2786 = vadd.f32 %v2784, %v2785
      %v2787 = vsel %vm2210, %v2742, 0.0
      %v2788 = vadd.f32 %v2786, %v2787
      %v2789 = vsel %vm2210, %v2743, 0.0
      %v2790 = vadd.f32 %v2788, %v2789
      %v2791 = vsel %vm2210, %v2744, 0.0
      %v2792 = vadd.f32 %v2790, %v2791
      %v2793 = vsel %vm2210, %v2745, 0.0
      %v2794 = vadd.f32 %v2792, %v2793
      %v2795 = vsel %vm2210, %v2746, 0.0
      %v2796 = vadd.f32 %v2794, %v2795
      %v2797 = vsel %vm2210, %v2747, 0.0
      %v2798 = vadd.f32 %v2796, %v2797
      %v2799 = vsel %vm2210, %v2748, 0.0
      %v2800 = vadd.f32 %v2798, %v2799
      %v2801 = vsel %vm2210, %v2749, 0.0
      %v2802 = vadd.f32 %v2800, %v2801
      %v2803 = vsel %vm2210, %v2750, 0.0
      %v2804 = vadd.f32 %v2802, %v2803
      %v2805 = vsel %vm2210, %v2751, 0.0
      %v2806 = vadd.f32 %v2804, %v2805
      %v2807 = vsel %vm2210, %v2752, 0.0
      %v2808 = vadd.f32 %v2806, %v2807
      %v2809 = vsel %vm2210, %v2753, 0.0
      %v2810 = vadd.f32 %v2808, %v2809
      %v2811 = vsel %vm2210, %v2754, 0.0
      %v2812 = vadd.f32 %v2810, %v2811
      %v2813 = vsel %vm2210, %v2755, 0.0
      %v2814 = vadd.f32 %v2812, %v2813
      %v2815 = vsel %vm2210, %v2756, 0.0
      %v2816 = vadd.f32 %v2814, %v2815
      %v2817 = vsel %vm2210, %v2757, 0.0
      %v2818 = vadd.f32 %v2816, %v2817
      %v2819 = vsel %vm2210, %v2758, 0.0
      %v2820 = vadd.f32 %v2818, %v2819
      %v2821 = vsel %vm2210, %v2759, 0.0
      %v2822 = vadd.f32 %v2820, %v2821
      %v2823 = vrot.slane %v2822, 4
      %v2824 = vadd.f32 %v2822, %v2823
      %v2825 = vrot.slane %v2824, 2
      %v2826 = vadd.f32 %v2824, %v2825
      %v2827 = vrot.slane %v2826, 1
      %v2828 = vadd.f32 %v2826, %v2827
      %vm2829 = vcmask 1040384
      %v2830 = vsel %vm2829, %v2727, %v2828
      %vm2831 = vcmask 58368
      %2832 = vst.msk [vmem:[%s364] sm:$0x3] %vm2831, %v2830
      %v2833 = vpack.c.bf16 %v2536, %v2533
      %v2834 = vpack.c.bf16 %v2544, %v2541
      %v2835 = vpack.c.bf16 %v2552, %v2549
      %v2836 = vpack.c.bf16 %v2560, %v2557
      %v2837 = vpack.c.bf16 %v2568, %v2565
      %v2838 = vpack.c.bf16 %v2576, %v2573
      %v2839 = vpack.c.bf16 %v2584, %v2581
      %v2840 = vpack.c.bf16 %v2592, %v2589
      %v2841 = vpack.c.bf16 %v2600, %v2597
      %v2842 = vpack.c.bf16 %v2608, %v2605
      %v2843 = vpack.c.bf16 %v2616, %v2613
      %v2844 = vpack.c.bf16 %v2624, %v2621
      %v2845 = vpack.c.bf16 %v2632, %v2629
      %v2846 = vpack.c.bf16 %v2640, %v2637
      %v2847 = vpack.c.bf16 %v2648, %v2645
      %v2848 = vpack.c.bf16 %v2656, %v2653
      %v2865 = vunpack.c.l.b16 %v2833
      %v2866 = vunpack.c.h.b16 %v2833
      %v2867 = vunpack.c.l.b16 %v2834
      %v2868 = vunpack.c.h.b16 %v2834
      %v2869 = vunpack.c.l.b16 %v2835
      %v2870 = vunpack.c.h.b16 %v2835
      %v2871 = vunpack.c.l.b16 %v2836
      %v2872 = vunpack.c.h.b16 %v2836
      %v2873 = vunpack.c.l.b16 %v2837
      %v2874 = vunpack.c.h.b16 %v2837
      %v2875 = vunpack.c.l.b16 %v2838
      %v2876 = vunpack.c.h.b16 %v2838
      %v2877 = vunpack.c.l.b16 %v2839
      %v2878 = vunpack.c.h.b16 %v2839
      %v2879 = vunpack.c.l.b16 %v2840
      %v2880 = vunpack.c.h.b16 %v2840
      %v2881 = vunpack.c.l.b16 %v2841
      %v2882 = vunpack.c.h.b16 %v2841
      %v2883 = vunpack.c.l.b16 %v2842
      %v2884 = vunpack.c.h.b16 %v2842
      %v2885 = vunpack.c.l.b16 %v2843
      %v2886 = vunpack.c.h.b16 %v2843
      %v2887 = vunpack.c.l.b16 %v2844
      %v2888 = vunpack.c.h.b16 %v2844
      %v2889 = vunpack.c.l.b16 %v2845
      %v2890 = vunpack.c.h.b16 %v2845
      %v2891 = vunpack.c.l.b16 %v2846
      %v2892 = vunpack.c.h.b16 %v2846
      %v2893 = vunpack.c.l.b16 %v2847
      %v2894 = vunpack.c.h.b16 %v2847
      %v2895 = vunpack.c.l.b16 %v2848
      %v2896 = vunpack.c.h.b16 %v2848
      %v2897 = vpack.c.b16 %v2865, %v2865
      %v2898 = vpack.c.b16 %v2866, %v2866
      %v2899 = vpack.c.b16 %v2867, %v2867
      %v2900 = vpack.c.b16 %v2868, %v2868
      %v2901 = vpack.c.b16 %v2869, %v2869
      %v2902 = vpack.c.b16 %v2870, %v2870
      %v2903 = vpack.c.b16 %v2871, %v2871
      %v2904 = vpack.c.b16 %v2872, %v2872
      %v2905 = vpack.c.b16 %v2873, %v2873
      %v2906 = vpack.c.b16 %v2874, %v2874
      %v2907 = vpack.c.b16 %v2875, %v2875
      %v2908 = vpack.c.b16 %v2876, %v2876
      %v2909 = vpack.c.b16 %v2877, %v2877
      %v2910 = vpack.c.b16 %v2878, %v2878
      %v2911 = vpack.c.b16 %v2879, %v2879
      %v2912 = vpack.c.b16 %v2880, %v2880
      %v2913 = vpack.c.b16 %v2881, %v2881
      %v2914 = vpack.c.b16 %v2882, %v2882
      %v2915 = vpack.c.b16 %v2883, %v2883
      %v2916 = vpack.c.b16 %v2884, %v2884
      %v2917 = vpack.c.b16 %v2885, %v2885
      %v2918 = vpack.c.b16 %v2886, %v2886
      %v2919 = vpack.c.b16 %v2887, %v2887
      %v2920 = vpack.c.b16 %v2888, %v2888
      %v2921 = vpack.c.b16 %v2889, %v2889
      %v2922 = vpack.c.b16 %v2890, %v2890
      %v2923 = vpack.c.b16 %v2891, %v2891
      %v2924 = vpack.c.b16 %v2892, %v2892
      %v2925 = vpack.c.b16 %v2893, %v2893
      %v2926 = vpack.c.b16 %v2894, %v2894
      %v2927 = vpack.c.b16 %v2895, %v2895
      %v2928 = vpack.c.b16 %v2896, %v2896
      %vm2961 = vcmask 60416
      %2962 = vst.msk [vmem:[%s356] sm:$0xf] %vm2961, %v2897
      %2963 = vst.msk [vmem:[%s356 + $0x4] sm:$0xf] %vm2961, %v2898
      %2964 = vst.msk [vmem:[%s356 + $0x8] sm:$0xf] %vm2961, %v2899
      %2965 = vst.msk [vmem:[%s356 + $0xc] sm:$0xf] %vm2961, %v2900
      %2966 = vst.msk [vmem:[%s356 + $0x10] sm:$0xf] %vm2961, %v2901
      %2967 = vst.msk [vmem:[%s356 + $0x14] sm:$0xf] %vm2961, %v2902
      %2968 = vst.msk [vmem:[%s356 + $0x18] sm:$0xf] %vm2961, %v2903
      %2969 = vst.msk [vmem:[%s356 + $0x1c] sm:$0xf] %vm2961, %v2904
      %2970 = vst.msk [vmem:[%s356 + $0x20] sm:$0xf] %vm2961, %v2905
      %2971 = vst.msk [vmem:[%s356 + $0x24] sm:$0xf] %vm2961, %v2906
      %2972 = vst.msk [vmem:[%s356 + $0x28] sm:$0xf] %vm2961, %v2907
      %2973 = vst.msk [vmem:[%s356 + $0x2c] sm:$0xf] %vm2961, %v2908
      %2974 = vst.msk [vmem:[%s356 + $0x30] sm:$0xf] %vm2961, %v2909
      %2975 = vst.msk [vmem:[%s356 + $0x34] sm:$0xf] %vm2961, %v2910
      %2976 = vst.msk [vmem:[%s356 + $0x38] sm:$0xf] %vm2961, %v2911
      %2977 = vst.msk [vmem:[%s356 + $0x3c] sm:$0xf] %vm2961, %v2912
      %2978 = vst.msk [vmem:[%s356 + $0x40] sm:$0xf] %vm2961, %v2913
      %2979 = vst.msk [vmem:[%s356 + $0x44] sm:$0xf] %vm2961, %v2914
      %2980 = vst.msk [vmem:[%s356 + $0x48] sm:$0xf] %vm2961, %v2915
      %2981 = vst.msk [vmem:[%s356 + $0x4c] sm:$0xf] %vm2961, %v2916
      %2982 = vst.msk [vmem:[%s356 + $0x50] sm:$0xf] %vm2961, %v2917
      %2983 = vst.msk [vmem:[%s356 + $0x54] sm:$0xf] %vm2961, %v2918
      %2984 = vst.msk [vmem:[%s356 + $0x58] sm:$0xf] %vm2961, %v2919
      %2985 = vst.msk [vmem:[%s356 + $0x5c] sm:$0xf] %vm2961, %v2920
      %2986 = vst.msk [vmem:[%s356 + $0x60] sm:$0xf] %vm2961, %v2921
      %2987 = vst.msk [vmem:[%s356 + $0x64] sm:$0xf] %vm2961, %v2922
      %2988 = vst.msk [vmem:[%s356 + $0x68] sm:$0xf] %vm2961, %v2923
      %2989 = vst.msk [vmem:[%s356 + $0x6c] sm:$0xf] %vm2961, %v2924
      %2990 = vst.msk [vmem:[%s356 + $0x70] sm:$0xf] %vm2961, %v2925
      %2991 = vst.msk [vmem:[%s356 + $0x74] sm:$0xf] %vm2961, %v2926
      %2992 = vst.msk [vmem:[%s356 + $0x78] sm:$0xf] %vm2961, %v2927
      %2993 = vst.msk [vmem:[%s356 + $0x7c] sm:$0xf] %vm2961, %v2928
      %s2994 = smul.u32 32, %s23
      %p2995 = scmp.lt.s32.totalorder %s22, 1
      %s2996 = scalar_select %p2995, %s22, 1
      %p2997 = scmp.lt.s32.totalorder %s2994, 31
      %s2998 = scalar_select %p2997, %s2994, 31
      %s2999 = smul.addr %s2996, 32
      %s3000 = sadd.s32 %s2998, %s2999
      %s3001 = smul.addr %s3000, 4
      %s3002 = scalar_lea.vmem %s4, %s3001
      %p3003 = scmp.lt.s32.totalorder %s22, 1
      %s3004 = scalar_select %p3003, %s22, 1
      %p3005 = scmp.lt.s32.totalorder %s23, 0
      %s3006 = scalar_select %p3005, %s23, 0
      %s3007 = sadd.s32 %s3006, %s3004
      %s3008 = smul.addr %s3007, 2
      %s3009 = scalar_lea.vmem %s5, %s3008
      // Predicated region
      $region37: #{conv2d_forward.2} parent=35 // pred_check
        %p3010 = pneg %p152
      $region38: #{conv2d_forward.2} parent=35 // pred_check_branch
        %3012 = sbr.rel (%p3010) target = $region40
      $region39: #{conv2d_forward.2} parent=35 // pred_region
        %s3013 = smul.u32 32, %s23
      $region40: #{conv2d_forward.2} parent=35 // pred_fallthru
        _
      // Predicated region
      $region41: #{conv2d_forward.2} parent=35 // pred_check
        %p3014 = pneg %p180
      $region42: #{conv2d_forward.2} parent=35 // pred_check_branch
        %3016 = sbr.rel (%p3014) target = $region44
      $region43: #{conv2d_forward.2} parent=35 // pred_region
        _
      $region44: #{conv2d_forward.2} parent=35 // pred_fallthru
        _
    $region36: #{conv2d_forward.2} parent=5 // pred_fallthru
      _
    %p3017 = scmp.le.s32.totalorder 2, %s13
    // Predicated region
    $region45: #{conv2d_forward.2} parent=5 // pred_check
      %p3018 = pneg %p3017
    $region46: #{conv2d_forward.2} parent=5 // pred_check_branch
      %3020 = sbr.rel (%p3018) target = $region48
    $region47: #{conv2d_forward.2} parent=5 // pred_region
      %s3021 = ssub.s32 %s13, 2
      // Predicated region
      $region49: #{conv2d_forward.2} parent=47 // pred_check
        %p3022 = pneg %p158
      $region50: #{conv2d_forward.2} parent=47 // pred_check_branch
        %3024 = sbr.rel (%p3022) target = $region52
      $region51: #{conv2d_forward.2} parent=47 // pred_region
        %s3025 = smul.u32 32, %s25
        %p3026 = scmp.lt.s32.totalorder %s24, 1
        %s3027 = scalar_select %p3026, %s24, 1
        %p3028 = scmp.lt.s32.totalorder %s3025, 31
        %s3029 = scalar_select %p3028, %s3025, 31
        %s3030 = smul.addr %s3027, 32
        %s3031 = sadd.s32 %s3029, %s3030
        %s3032 = smul.addr %s3031, 4
        %s3033 = scalar_lea.vmem %s4, %s3032
      $region52: #{conv2d_forward.2} parent=47 // pred_fallthru
        _
      // Predicated region
      $region53: #{conv2d_forward.2} parent=47 // pred_check
        %p3034 = pneg %p186
      $region54: #{conv2d_forward.2} parent=47 // pred_check_branch
        %3036 = sbr.rel (%p3034) target = $region56
      $region55: #{conv2d_forward.2} parent=47 // pred_region
        %p3037 = scmp.lt.s32.totalorder %s24, 1
        %s3038 = scalar_select %p3037, %s24, 1
        %p3039 = scmp.lt.s32.totalorder %s25, 0
        %s3040 = scalar_select %p3039, %s25, 0
        %s3041 = sadd.s32 %s3040, %s3038
        %s3042 = smul.addr %s3041, 2
        %s3043 = scalar_lea.vmem %s5, %s3042
      $region56: #{conv2d_forward.2} parent=47 // pred_fallthru
        _
    $region48: #{conv2d_forward.2} parent=5 // pred_fallthru
      _
  $region6: #{conv2d_forward.2} parent=0 // loop_footer
    %s17 = sadd.s32 1, %s13
  $region7: #{conv2d_forward.2} parent=0 // loop_footer_branch
    %12 = sbr.rel target = $region3
  $region8: #{conv2d_forward.2} parent=0 // loop_exit
    _

</llo_original>
